<compile_context>
chip_gen: v7x
topology: tpu7x:2x2x1
jax: 0.10.0
libtpu: 0.0.40
codegen_flags: <defaults>
</compile_context>

<pallas_src>
import math
import jax
import jax.numpy as jnp
from jax.experimental import pallas as pl
from jax.experimental.pallas import tpu as pltpu

# ----------------------------- model constants -----------------------------
B      = 2            # batch
L      = 32           # resnet spatial dim (seg_len not in {1250, 2500} -> spacial_dim = 32)
C_RES  = 2048         # resnet output channels
PROJ   = 256          # proj_out == proj_hidden
HEADS  = 4
HDIM   = PROJ // HEADS
TXT    = 768          # LM pooler_output width
SIG_C  = 12           # ECG leads
SIG_T  = 256          # raw signal length (stand-in)
SEQ    = 8            # text sequence length
VOCAB  = 100
TEMP   = 0.07
TK     = 512          # downconv K-tile (grid = C_RES // TK = 4 steps)


# ------------------------------ kernel helpers -------------------------------
def _erf(x):
    # Abramowitz & Stegun 7.1.26 polynomial erf (|err| < 1.5e-7); exp/abs only so it
    # lowers cleanly in Mosaic.  Used for exact-GELU (nn.GELU default).
    a1, a2, a3, a4, a5 = 0.254829592, -0.284496736, 1.421413741, -1.453152027, 1.061405429
    p = 0.3275911
    s = jnp.where(x >= 0.0, 1.0, -1.0)
    ax = jnp.abs(x)
    t = 1.0 / (1.0 + p * ax)
    y = 1.0 - (((((a5 * t + a4) * t) + a3) * t + a2) * t + a1) * t * jnp.exp(-ax * ax)
    return s * y


def _merl_loss_val(x, y):
    # merl_loss: L2-normalize, sim = x y^T / T, symmetric CE with labels=arange(N), summed.
    # Column-LSE is the row-LSE of sim^T (second tiny dot) -> only last-axis reductions.
    xn = x / jnp.maximum(jnp.sqrt(jnp.sum(x * x, axis=-1, keepdims=True)), 1e-12)
    yn = y / jnp.maximum(jnp.sqrt(jnp.sum(y * y, axis=-1, keepdims=True)), 1e-12)
    inv_t = 1.0 / TEMP
    sim = jax.lax.dot_general(xn, yn, (((1,), (1,)), ((), ())),
                              preferred_element_type=jnp.float32) * inv_t     # (N, N)
    simT = jax.lax.dot_general(yn, xn, (((1,), (1,)), ((), ())),
                               preferred_element_type=jnp.float32) * inv_t    # == sim.T
    n = sim.shape[0]

    def row_lse_sum(s):
        m = jnp.max(s, axis=-1, keepdims=True)
        return jnp.sum(jnp.log(jnp.sum(jnp.exp(s - m), axis=-1, keepdims=True)) + m)

    rid = jax.lax.broadcasted_iota(jnp.int32, sim.shape, 0)
    cid = jax.lax.broadcasted_iota(jnp.int32, sim.shape, 1)
    diag_sum = jnp.sum(jnp.where(rid == cid, sim, 0.0))
    loss_t = (row_lse_sum(sim) - diag_sum) / n
    loss_i = (row_lse_sum(simT) - diag_sum) / n
    return loss_t + loss_i


# ------------------------------- fused kernel --------------------------------
def fused_kernel(feats_ref,                  # (B*L, TK)  bf16   K-tile of resnet feats (B folded)
                 dc_wT_ref,                  # (TK, 256)  bf16   K-tile of downconv weight^T
                 dc_b_ref,                   # (1, 256)   f32
                 pos0_ref,                   # (1, 256)   f32    pos-emb, mean token
                 posx_ref,                   # (L, 256)   f32    pos-emb, spatial tokens
                 wqkvT_ref,                  # (256, 768) bf16   [Wq^T | Wk^T | Wv^T]
                 bqkv_ref,                   # (1, 768)   f32    [bq | bk | bv]
                 head_ref,                   # (256, 256) f32    block-diag head indicator
                 wcT_ref, bc_ref,            # (256, 256) bf16, (1, 256) f32
                 w12T_ref,                   # (256, 512) bf16   [W1^T | W2^T] (bias-free)
                 txt_ref,                    # (B, 768)   bf16   LM pooler output
                 pt_w1T_ref, pt_b1_ref,      # (768, 256) bf16, (1, 256) f32
                 pt_w2T_ref, pt_b2_ref,      # (256, 256) bf16, (1, 256) f32
                 loss_ref,                   # (1, 1) SMEM output
                 acc_ref):                   # (B*L, 256) f32 scratch (downconv accumulator)
    k = pl.program_id(0)

    @pl.when(k == 0)
    def _init():
        acc_ref[...] = jnp.zeros_like(acc_ref)

    # ---- downconv: Conv1d(2048 -> 256, k=1) streamed over K (bf16 MXU, f32 acc) ----
    acc_ref[...] += jnp.dot(feats_ref[...], dc_wT_ref[...],
                            preferred_element_type=jnp.float32)

    @pl.when(k == pl.num_programs(0) - 1)
    def _epilogue():
        ecg_feat = acc_ref[...] + dc_b_ref[...]                       # (B*L, 256) f32
        feat3 = ecg_feat.reshape(B, L, PROJ)                          # (B, L, 256)

        # per-batch mean over L (== AdaptiveAvgPool1d(1) AND the attention-pool mean token)
        means = jnp.mean(feat3, axis=1)                               # (B, 256)

        # ---- attention pool ----
        scale = 1.0 / math.sqrt(HDIM)
        mean_tok = means + pos0_ref[...]                              # (B, 256)
        qkv0 = jnp.dot(mean_tok.astype(jnp.bfloat16), wqkvT_ref[...],
                       preferred_element_type=jnp.float32) + bqkv_ref[...]   # (B, 768)
        q0 = qkv0[:, 0:PROJ] * scale                                  # (B, 256)
        k0 = qkv0[:, PROJ:2 * PROJ]                                   # (B, 256)
        v0 = qkv0[:, 2 * PROJ:3 * PROJ]                               # (B, 256)

        xs3 = feat3 + posx_ref[...][None, :, :]                       # (B, L, 256)
        kvx = jnp.dot(xs3.reshape(B * L, PROJ).astype(jnp.bfloat16), wqkvT_ref[...],
                      preferred_element_type=jnp.float32) + bqkv_ref[...]    # (B*L, 768)
        kx = kvx[:, PROJ:2 * PROJ].reshape(B, L, PROJ)                # (B, L, 256)
        vx = kvx[:, 2 * PROJ:3 * PROJ].reshape(B, L, PROJ)            # (B, L, 256)

        # per-head scores, broadcast over each head's 64 lanes via block-diag indicator matmul
        kq = kx * q0[:, None, :]                                      # (B, L, 256)
        s_x = jnp.dot(kq.reshape(B * L, PROJ), head_ref[...],
                      preferred_element_type=jnp.float32).reshape(B, L, PROJ)
        s_0 = jnp.dot(k0 * q0, head_ref[...],
                      preferred_element_type=jnp.float32)             # (B, 256)

        m = jnp.maximum(jnp.max(s_x, axis=1), s_0)                    # (B, 256)
        p_x = jnp.exp(s_x - m[:, None, :])                            # (B, L, 256)
        p_0 = jnp.exp(s_0 - m)                                        # (B, 256)
        denom = jnp.sum(p_x, axis=1) + p_0                            # (B, 256)
        num = jnp.sum(p_x * vx, axis=1) + p_0 * v0                    # (B, 256)
        attn = num / denom                                            # (B, 256)
        proj_ecg = jnp.dot(attn.astype(jnp.bfloat16), wcT_ref[...],
                           preferred_element_type=jnp.float32) + bc_ref[...]  # (B, 256)

        # ---- avgpool + linear1/linear2 (dropout is identity in eval mode) ----
        e12 = jnp.dot(means.astype(jnp.bfloat16), w12T_ref[...],
                      preferred_element_type=jnp.float32)             # (B, 512)
        ecg_emb1 = e12[:, 0:PROJ]
        ecg_emb2 = e12[:, PROJ:2 * PROJ]

        # ---- proj_t: Linear(768, 256) -> GELU(exact) -> Linear(256, 256) ----
        h = jnp.dot(txt_ref[...], pt_w1T_ref[...],
                    preferred_element_type=jnp.float32) + pt_b1_ref[...]      # (B, 256)
        h = 0.5 * h * (1.0 + _erf(h * (1.0 / math.sqrt(2.0))))
        proj_text = jnp.dot(h.astype(jnp.bfloat16), pt_w2T_ref[...],
                            preferred_element_type=jnp.float32) + pt_b2_ref[...]

        # ---- symmetric contrastive losses (normalize() in forward is idempotent here) ----
        cma_loss = _merl_loss_val(proj_ecg, proj_text)
        uma_loss = _merl_loss_val(ecg_emb1, ecg_emb2)
        loss_ref[0, 0] = cma_loss + uma_loss


# --------------------------------- wrapper -----------------------------------
def fused_heads_and_loss(params, feats_flat, text_emb):
    # bf16 weights/MXU inputs (f32 accumulation); biases and elementwise math stay f32.
    feats_bf = feats_flat.astype(jnp.bfloat16)                             # (B*L, 2048)
    dc_wT = params["dc_w"].T.astype(jnp.bfloat16)                          # (2048, 256)
    dc_b = params["dc_b"][None, :]

    pos0 = params["pos"][0:1, :]                                           # (1, 256)
    posx = params["pos"][1:, :]                                            # (L, 256) — no host tile

    wqkvT = jnp.concatenate(
        [params["wq"].T, params["wk"].T, params["wv"].T], axis=1).astype(jnp.bfloat16)  # (256, 768)
    bqkv = params["bqkv"].reshape(1, 3 * PROJ)                             # (1, 768)

    # block-diagonal head indicator: lane d belongs to head d // HDIM
    head_mat = (jnp.arange(PROJ)[:, None] // HDIM ==
                jnp.arange(PROJ)[None, :] // HDIM).astype(jnp.float32)     # (256, 256)

    wcT = params["wc"].T.astype(jnp.bfloat16)
    bc = params["bc"][None, :]
    w12T = jnp.concatenate([params["w1"].T, params["w2"].T], axis=1).astype(jnp.bfloat16)  # (256, 512)

    txt_bf = text_emb.astype(jnp.bfloat16)                                 # (B, 768)
    pt_w1T = params["pt_w1"].T.astype(jnp.bfloat16)                        # (768, 256)
    pt_b1 = params["pt_b1"][None, :]
    pt_w2T = params["pt_w2"].T.astype(jnp.bfloat16)
    pt_b2 = params["pt_b2"][None, :]

    args = (feats_bf, dc_wT, dc_b, pos0, posx, wqkvT, bqkv, head_mat,
            wcT, bc, w12T, txt_bf, pt_w1T, pt_b1, pt_w2T, pt_b2)

    def _const_spec(a):
        nd = a.ndim
        return pl.BlockSpec(a.shape, lambda k, _nd=nd: (0,) * _nd)

    in_specs = [
        pl.BlockSpec((B * L, TK), lambda k: (0, k)),   # feats  : K-tiled
        pl.BlockSpec((TK, PROJ), lambda k: (k, 0)),    # dc_wT  : K-tiled
    ] + [_const_spec(a) for a in args[2:]]             # resident weights, fetched once

    loss = pl.pallas_call(
        fused_kernel,
        grid=(C_RES // TK,),
        in_specs=in_specs,
        out_specs=pl.BlockSpec((1, 1), lambda k: (0, 0), memory_space=pltpu.SMEM),
        out_shape=jax.ShapeDtypeStruct((1, 1), jnp.float32),
        scratch_shapes=[pltpu.VMEM((B * L, PROJ), jnp.float32)],
        compiler_params=pltpu.CompilerParams(
            dimension_semantics=("arbitrary",),
            vmem_limit_bytes=16 * 1024 * 1024),
        cost_estimate=pl.CostEstimate(flops=105_000_000,
                                      transcendentals=18_000,
                                      bytes_accessed=2_900_000),
    )(*args)
    return loss[0, 0]


# --------------------------- parameter initialization -----------------------
def init_params(key):
    ks = jax.random.split(key, 16)
    s = 0.02
    p = {
        # ResNet stand-in (external module in the original code)
        "res_w": jax.random.normal(ks[0], (C_RES, SIG_C), jnp.float32) * s,
        "res_b": jax.random.normal(ks[1], (C_RES,), jnp.float32) * s,
        # downconv: Conv1d(2048, 256, k=1)
        "dc_w": jax.random.normal(ks[2], (PROJ, C_RES), jnp.float32) * s,
        "dc_b": jax.random.normal(ks[3], (PROJ,), jnp.float32) * s,
        # AttentionPool (spacial_dim=32, embed_dim=256, heads=4, out=256)
        "pos": jax.random.normal(ks[4], (L + 1, PROJ), jnp.float32) / math.sqrt(PROJ),
        "wq": jax.random.normal(ks[5], (PROJ, PROJ), jnp.float32) * s,
        "wk": jax.random.normal(ks[6], (PROJ, PROJ), jnp.float32) * s,
        "wv": jax.random.normal(ks[7], (PROJ, PROJ), jnp.float32) * s,
        "bqkv": jax.random.normal(ks[8], (3, PROJ), jnp.float32) * s,  # rows = [bq; bk; bv]
        "wc": jax.random.normal(ks[9], (PROJ, PROJ), jnp.float32) * s,
        "bc": jax.random.normal(ks[10], (PROJ,), jnp.float32) * s,
        # linear1 / linear2 (bias=False)
        "w1": jax.random.normal(ks[11], (PROJ, PROJ), jnp.float32) * s,
        "w2": jax.random.normal(ks[12], (PROJ, PROJ), jnp.float32) * s,
        # proj_t = Linear(768,256) -> GELU -> Linear(256,256)
        "pt_w1": jax.random.normal(ks[13], (PROJ, TXT), jnp.float32) * s,
        "pt_b1": jax.random.normal(ks[14], (PROJ,), jnp.float32) * s,
        "pt_w2": jax.random.normal(ks[15], (PROJ, PROJ), jnp.float32) * s,
        "pt_b2": jnp.zeros((PROJ,), jnp.float32),
        # LM stand-in (external module in the original code)
        "lm_emb": jax.random.normal(jax.random.PRNGKey(123), (VOCAB, TXT), jnp.float32) * s,
    }
    return p


# --------------------------------- forward ----------------------------------
def merl_pretrain_forward(params, signal, input_ids, attention_mask):
    # ---- ResNet backbone ----
    # TODO(synk): get_resnet(resnet_type) is an external backbone; deterministic
    # stand-in: average-pool to L positions + pointwise linear 12 -> 2048 + ReLU.
    sig = signal.reshape(B, SIG_C, L, SIG_T // L).mean(-1)                 # [B, 12, L]
    out_res = jax.nn.relu(
        jnp.einsum("oc,bcl->bol", params["res_w"], sig)
        + params["res_b"][None, :, None])                                 # [B, 2048, L] (NCL)
    feats_flat = jnp.transpose(out_res, (0, 2, 1)).reshape(B * L, C_RES)  # [B*L, 2048]

    # ---- text encoder ----
    # TODO(synk): self.lm is an external language model; stand-in pooler_output:
    # masked mean of a deterministic embedding table followed by tanh.
    tok = params["lm_emb"][input_ids]                                      # [B, S, 768]
    m = attention_mask[..., None].astype(jnp.float32)
    text_emb = jnp.tanh((tok * m).sum(1) / jnp.maximum(m.sum(1), 1.0))     # [B, 768]

    # ---- single fused Pallas kernel: downconv + attn-pool + avgpool/linears
    #      + proj_t + both merl_loss terms ----
    loss = fused_heads_and_loss(params, feats_flat, text_emb)
    return loss, out_res        # CombinedOutput(loss=..., out=resnet output)


# ----------------------------------- main ------------------------------------
if __name__ == "__main__":
    key = jax.random.PRNGKey(0)
    k_sig, k_ids = jax.random.split(key)
    params = init_params(jax.random.PRNGKey(42))

    signal = jax.random.normal(k_sig, (B, SIG_C, SIG_T), jnp.float32)      # 12-lead ECG
    input_ids = jax.random.randint(k_ids, (B, SEQ), 0, VOCAB, jnp.int32)
    attention_mask = jnp.ones((B, SEQ), jnp.int32)

    fwd = jax.jit(merl_pretrain_forward)
    loss, out = fwd(params, signal, input_ids, attention_mask)
    jax.block_until_ready((loss, out))

    assert out.shape == (B, C_RES, L)
    assert loss.shape == ()
    assert bool(jnp.isfinite(loss))
    print("KERNEL_OK")
</pallas_src>

<mosaic_0001>
module attributes {stable_mosaic.version = 11 : i64} {
  func.func @fused_kernel(%arg0: i32, %arg1: memref<64x512xbf16, #tpu.memory_space<vmem>>, %arg2: memref<512x256xbf16, #tpu.memory_space<vmem>>, %arg3: memref<1x256xf32, #tpu.memory_space<vmem>>, %arg4: memref<1x256xf32, #tpu.memory_space<vmem>>, %arg5: memref<32x256xf32, #tpu.memory_space<vmem>>, %arg6: memref<256x768xbf16, #tpu.memory_space<vmem>>, %arg7: memref<1x768xf32, #tpu.memory_space<vmem>>, %arg8: memref<256x256xf32, #tpu.memory_space<vmem>>, %arg9: memref<256x256xbf16, #tpu.memory_space<vmem>>, %arg10: memref<1x256xf32, #tpu.memory_space<vmem>>, %arg11: memref<256x512xbf16, #tpu.memory_space<vmem>>, %arg12: memref<2x768xbf16, #tpu.memory_space<vmem>>, %arg13: memref<768x256xbf16, #tpu.memory_space<vmem>>, %arg14: memref<1x256xf32, #tpu.memory_space<vmem>>, %arg15: memref<256x256xbf16, #tpu.memory_space<vmem>>, %arg16: memref<1x256xf32, #tpu.memory_space<vmem>>, %arg17: memref<1x1xf32, #tpu.memory_space<smem>>, %arg18: memref<64x256xf32, #tpu.memory_space<vmem>>) attributes {dimension_semantics = [#tpu.dimension_semantics<arbitrary>], iteration_bounds = array<i64: 4>, scalar_prefetch = 0 : i64, scratch_operands = 1 : i64, tpu.core_type = #tpu.core_type<tc>, window_params = [{transform_indices = @transform_0, window_bounds = array<i64: 64, 512>}, {transform_indices = @transform_1, window_bounds = array<i64: 512, 256>}, {pipeline_mode = #tpu.pipeline_mode<synchronous>, transform_indices = @transform_2, window_bounds = array<i64: 1, 256>}, {pipeline_mode = #tpu.pipeline_mode<synchronous>, transform_indices = @transform_3, window_bounds = array<i64: 1, 256>}, {pipeline_mode = #tpu.pipeline_mode<synchronous>, transform_indices = @transform_4, window_bounds = array<i64: 32, 256>}, {pipeline_mode = #tpu.pipeline_mode<synchronous>, transform_indices = @transform_5, window_bounds = array<i64: 256, 768>}, {pipeline_mode = #tpu.pipeline_mode<synchronous>, transform_indices = @transform_6, window_bounds = array<i64: 1, 768>}, {pipeline_mode = #tpu.pipeline_mode<synchronous>, transform_indices = @transform_7, window_bounds = array<i64: 256, 256>}, {pipeline_mode = #tpu.pipeline_mode<synchronous>, transform_indices = @transform_8, window_bounds = array<i64: 256, 256>}, {pipeline_mode = #tpu.pipeline_mode<synchronous>, transform_indices = @transform_9, window_bounds = array<i64: 1, 256>}, {pipeline_mode = #tpu.pipeline_mode<synchronous>, transform_indices = @transform_10, window_bounds = array<i64: 256, 512>}, {pipeline_mode = #tpu.pipeline_mode<synchronous>, transform_indices = @transform_11, window_bounds = array<i64: 2, 768>}, {pipeline_mode = #tpu.pipeline_mode<synchronous>, transform_indices = @transform_12, window_bounds = array<i64: 768, 256>}, {pipeline_mode = #tpu.pipeline_mode<synchronous>, transform_indices = @transform_13, window_bounds = array<i64: 1, 256>}, {pipeline_mode = #tpu.pipeline_mode<synchronous>, transform_indices = @transform_14, window_bounds = array<i64: 256, 256>}, {pipeline_mode = #tpu.pipeline_mode<synchronous>, transform_indices = @transform_15, window_bounds = array<i64: 1, 256>}, {transform_indices = @transform_16, window_bounds = array<i64: 1, 1>}]} {
    %c0_i32 = arith.constant 0 : i32
    %0 = arith.cmpi eq, %arg0, %c0_i32 : i32
    %1 = arith.extui %0 : i1 to i32
    %c0_i32_0 = arith.constant 0 : i32
    %2 = arith.cmpi ne, %1, %c0_i32_0 : i32
    scf.if %2 {
      %cst_9 = arith.constant 0.000000e+00 : f32
      %12 = vector.broadcast %cst_9 : f32 to vector<64x256xf32>
      %c0_10 = arith.constant 0 : index
      %c0_11 = arith.constant 0 : index
      %13 = vector.load %arg18[%c0_10, %c0_11] : memref<64x256xf32, #tpu.memory_space<vmem>>, vector<64x256xf32>
      tpu.vector_store %arg18[%c0_10, %c0_11], %12 {strides = array<i32>} : memref<64x256xf32, #tpu.memory_space<vmem>>, vector<64x256xf32>,
    } else {
    }
    %c0 = arith.constant 0 : index
    %c0_1 = arith.constant 0 : index
    %3 = vector.load %arg18[%c0, %c0_1] : memref<64x256xf32, #tpu.memory_space<vmem>>, vector<64x256xf32>
    %c0_2 = arith.constant 0 : index
    %c0_3 = arith.constant 0 : index
    %4 = vector.load %arg1[%c0_2, %c0_3] : memref<64x512xbf16, #tpu.memory_space<vmem>>, vector<64x512xbf16>
    %c0_4 = arith.constant 0 : index
    %c0_5 = arith.constant 0 : index
    %5 = vector.load %arg2[%c0_4, %c0_5] : memref<512x256xbf16, #tpu.memory_space<vmem>>, vector<512x256xbf16>
    %cst = arith.constant dense<0.000000e+00> : vector<64x256xf32>
    %6 = tpu.matmul %4, %5, %cst {dimension_numbers = #tpu.dot_dimension_numbers<[1], [0], [0], [1], [0, 0, 1, 1], [], []>} : vector<64x512xbf16>, vector<512x256xbf16>, vector<64x256xf32> -> vector<64x256xf32>
    %7 = arith.addf %3, %6 : vector<64x256xf32>
    %c0_6 = arith.constant 0 : index
    %c0_7 = arith.constant 0 : index
    %8 = vector.load %arg18[%c0_6, %c0_7] : memref<64x256xf32, #tpu.memory_space<vmem>>, vector<64x256xf32>
    tpu.vector_store %arg18[%c0_6, %c0_7], %7 {strides = array<i32>} : memref<64x256xf32, #tpu.memory_space<vmem>>, vector<64x256xf32>,
    %c3_i32 = arith.constant 3 : i32
    %9 = arith.cmpi eq, %arg0, %c3_i32 : i32
    %10 = arith.extui %9 : i1 to i32
    %c0_i32_8 = arith.constant 0 : i32
    %11 = arith.cmpi ne, %10, %c0_i32_8 : i32
    scf.if %11 {
      %c0_9 = arith.constant 0 : index
      %c0_10 = arith.constant 0 : index
      %12 = vector.load %arg18[%c0_9, %c0_10] : memref<64x256xf32, #tpu.memory_space<vmem>>, vector<64x256xf32>
      %c0_11 = arith.constant 0 : index
      %c0_12 = arith.constant 0 : index
      %13 = vector.load %arg3[%c0_11, %c0_12] : memref<1x256xf32, #tpu.memory_space<vmem>>, vector<1x256xf32>
      %14 = vector.broadcast %13 : vector<1x256xf32> to vector<64x256xf32>
      %15 = arith.addf %12, %14 : vector<64x256xf32>
      %16 = vector.shape_cast %15 : vector<64x256xf32> to vector<2x32x256xf32>
      %cst_13 = arith.constant dense<0.000000e+00> : vector<2x256xf32>
      %17 = vector.multi_reduction <add>, %16, %cst_13 [1] : vector<2x32x256xf32> to vector<2x256xf32>
      %cst_14 = arith.constant 3.200000e+01 : f32
      %18 = vector.broadcast %cst_14 : f32 to vector<2x256xf32>
      %19 = arith.divf %17, %18 : vector<2x256xf32>
      %c0_15 = arith.constant 0 : index
      %c0_16 = arith.constant 0 : index
      %20 = vector.load %arg4[%c0_15, %c0_16] : memref<1x256xf32, #tpu.memory_space<vmem>>, vector<1x256xf32>
      %21 = vector.broadcast %20 : vector<1x256xf32> to vector<2x256xf32>
      %22 = arith.addf %19, %21 : vector<2x256xf32>
      %23 = arith.truncf %22 : vector<2x256xf32> to vector<2x256xbf16>
      %c0_17 = arith.constant 0 : index
      %c0_18 = arith.constant 0 : index
      %24 = vector.load %arg6[%c0_17, %c0_18] : memref<256x768xbf16, #tpu.memory_space<vmem>>, vector<256x768xbf16>
      %cst_19 = arith.constant dense<0.000000e+00> : vector<2x768xf32>
      %25 = tpu.matmul %23, %24, %cst_19 {dimension_numbers = #tpu.dot_dimension_numbers<[1], [0], [0], [1], [0, 0, 1, 1], [], []>} : vector<2x256xbf16>, vector<256x768xbf16>, vector<2x768xf32> -> vector<2x768xf32>
      %c0_20 = arith.constant 0 : index
      %c0_21 = arith.constant 0 : index
      %26 = vector.load %arg7[%c0_20, %c0_21] : memref<1x768xf32, #tpu.memory_space<vmem>>, vector<1x768xf32>
      %27 = vector.broadcast %26 : vector<1x768xf32> to vector<2x768xf32>
      %28 = arith.addf %25, %27 : vector<2x768xf32>
      %29 = vector.extract_strided_slice %28 {offsets = [0, 0], sizes = [2, 256], strides = [1, 1]} : vector<2x768xf32> to vector<2x256xf32>
      %cst_22 = arith.constant 1.250000e-01 : f32
      %30 = vector.broadcast %cst_22 : f32 to vector<2x256xf32>
      %31 = arith.mulf %29, %30 : vector<2x256xf32>
      %32 = vector.extract_strided_slice %28 {offsets = [0, 256], sizes = [2, 256], strides = [1, 1]} : vector<2x768xf32> to vector<2x256xf32>
      %33 = vector.extract_strided_slice %28 {offsets = [0, 512], sizes = [2, 256], strides = [1, 1]} : vector<2x768xf32> to vector<2x256xf32>
      %c0_23 = arith.constant 0 : index
      %c0_24 = arith.constant 0 : index
      %34 = vector.load %arg5[%c0_23, %c0_24] : memref<32x256xf32, #tpu.memory_space<vmem>>, vector<32x256xf32>
      %35 = vector.shape_cast %34 : vector<32x256xf32> to vector<1x32x256xf32>
      %36 = vector.broadcast %35 : vector<1x32x256xf32> to vector<2x32x256xf32>
      %37 = arith.addf %16, %36 : vector<2x32x256xf32>
      %38 = vector.shape_cast %37 : vector<2x32x256xf32> to vector<64x256xf32>
      %39 = arith.truncf %38 : vector<64x256xf32> to vector<64x256xbf16>
      %c0_25 = arith.constant 0 : index
      %c0_26 = arith.constant 0 : index
      %40 = vector.load %arg6[%c0_25, %c0_26] : memref<256x768xbf16, #tpu.memory_space<vmem>>, vector<256x768xbf16>
      %cst_27 = arith.constant dense<0.000000e+00> : vector<64x768xf32>
      %41 = tpu.matmul %39, %40, %cst_27 {dimension_numbers = #tpu.dot_dimension_numbers<[1], [0], [0], [1], [0, 0, 1, 1], [], []>} : vector<64x256xbf16>, vector<256x768xbf16>, vector<64x768xf32> -> vector<64x768xf32>
      %c0_28 = arith.constant 0 : index
      %c0_29 = arith.constant 0 : index
      %42 = vector.load %arg7[%c0_28, %c0_29] : memref<1x768xf32, #tpu.memory_space<vmem>>, vector<1x768xf32>
      %43 = vector.broadcast %42 : vector<1x768xf32> to vector<64x768xf32>
      %44 = arith.addf %41, %43 : vector<64x768xf32>
      %45 = vector.extract_strided_slice %44 {offsets = [0, 256], sizes = [64, 256], strides = [1, 1]} : vector<64x768xf32> to vector<64x256xf32>
      %46 = vector.shape_cast %45 : vector<64x256xf32> to vector<2x32x256xf32>
      %47 = vector.extract_strided_slice %44 {offsets = [0, 512], sizes = [64, 256], strides = [1, 1]} : vector<64x768xf32> to vector<64x256xf32>
      %48 = vector.shape_cast %47 : vector<64x256xf32> to vector<2x32x256xf32>
      %49 = vector.shape_cast %31 : vector<2x256xf32> to vector<2x1x256xf32>
      %50 = vector.broadcast %49 : vector<2x1x256xf32> to vector<2x32x256xf32>
      %51 = arith.mulf %46, %50 : vector<2x32x256xf32>
      %52 = vector.shape_cast %51 : vector<2x32x256xf32> to vector<64x256xf32>
      %c0_30 = arith.constant 0 : index
      %c0_31 = arith.constant 0 : index
      %53 = vector.load %arg8[%c0_30, %c0_31] : memref<256x256xf32, #tpu.memory_space<vmem>>, vector<256x256xf32>
      %cst_32 = arith.constant dense<0.000000e+00> : vector<64x256xf32>
      %54 = tpu.matmul %52, %53, %cst_32 {dimension_numbers = #tpu.dot_dimension_numbers<[1], [0], [0], [1], [0, 0, 1, 1], [], []>} : vector<64x256xf32>, vector<256x256xf32>, vector<64x256xf32> -> vector<64x256xf32>
      %55 = vector.shape_cast %54 : vector<64x256xf32> to vector<2x32x256xf32>
      %56 = arith.mulf %32, %31 : vector<2x256xf32>
      %c0_33 = arith.constant 0 : index
      %c0_34 = arith.constant 0 : index
      %57 = vector.load %arg8[%c0_33, %c0_34] : memref<256x256xf32, #tpu.memory_space<vmem>>, vector<256x256xf32>
      %cst_35 = arith.constant dense<0.000000e+00> : vector<2x256xf32>
      %58 = tpu.matmul %56, %57, %cst_35 {dimension_numbers = #tpu.dot_dimension_numbers<[1], [0], [0], [1], [0, 0, 1, 1], [], []>} : vector<2x256xf32>, vector<256x256xf32>, vector<2x256xf32> -> vector<2x256xf32>
      %cst_36 = arith.constant dense<0xFF800000> : vector<2x256xf32>
      %59 = vector.multi_reduction <maximumf>, %55, %cst_36 [1] : vector<2x32x256xf32> to vector<2x256xf32>
      %60 = arith.maximumf %59, %58 : vector<2x256xf32>
      %61 = vector.shape_cast %60 : vector<2x256xf32> to vector<2x1x256xf32>
      %62 = vector.broadcast %61 : vector<2x1x256xf32> to vector<2x32x256xf32>
      %63 = arith.subf %55, %62 : vector<2x32x256xf32>
      %64 = math.exp %63 : vector<2x32x256xf32>
      %65 = arith.subf %58, %60 : vector<2x256xf32>
      %66 = math.exp %65 : vector<2x256xf32>
      %cst_37 = arith.constant dense<0.000000e+00> : vector<2x256xf32>
      %67 = vector.multi_reduction <add>, %64, %cst_37 [1] : vector<2x32x256xf32> to vector<2x256xf32>
      %68 = arith.addf %67, %66 : vector<2x256xf32>
      %69 = arith.mulf %64, %48 : vector<2x32x256xf32>
      %cst_38 = arith.constant dense<0.000000e+00> : vector<2x256xf32>
      %70 = vector.multi_reduction <add>, %69, %cst_38 [1] : vector<2x32x256xf32> to vector<2x256xf32>
      %71 = arith.mulf %66, %33 : vector<2x256xf32>
      %72 = arith.addf %70, %71 : vector<2x256xf32>
      %73 = arith.divf %72, %68 : vector<2x256xf32>
      %74 = arith.truncf %73 : vector<2x256xf32> to vector<2x256xbf16>
      %c0_39 = arith.constant 0 : index
      %c0_40 = arith.constant 0 : index
      %75 = vector.load %arg9[%c0_39, %c0_40] : memref<256x256xbf16, #tpu.memory_space<vmem>>, vector<256x256xbf16>
      %cst_41 = arith.constant dense<0.000000e+00> : vector<2x256xf32>
      %76 = tpu.matmul %74, %75, %cst_41 {dimension_numbers = #tpu.dot_dimension_numbers<[1], [0], [0], [1], [0, 0, 1, 1], [], []>} : vector<2x256xbf16>, vector<256x256xbf16>, vector<2x256xf32> -> vector<2x256xf32>
      %c0_42 = arith.constant 0 : index
      %c0_43 = arith.constant 0 : index
      %77 = vector.load %arg10[%c0_42, %c0_43] : memref<1x256xf32, #tpu.memory_space<vmem>>, vector<1x256xf32>
      %78 = vector.broadcast %77 : vector<1x256xf32> to vector<2x256xf32>
      %79 = arith.addf %76, %78 : vector<2x256xf32>
      %80 = arith.truncf %19 : vector<2x256xf32> to vector<2x256xbf16>
      %c0_44 = arith.constant 0 : index
      %c0_45 = arith.constant 0 : index
      %81 = vector.load %arg11[%c0_44, %c0_45] : memref<256x512xbf16, #tpu.memory_space<vmem>>, vector<256x512xbf16>
      %cst_46 = arith.constant dense<0.000000e+00> : vector<2x512xf32>
      %82 = tpu.matmul %80, %81, %cst_46 {dimension_numbers = #tpu.dot_dimension_numbers<[1], [0], [0], [1], [0, 0, 1, 1], [], []>} : vector<2x256xbf16>, vector<256x512xbf16>, vector<2x512xf32> -> vector<2x512xf32>
      %83 = vector.extract_strided_slice %82 {offsets = [0, 0], sizes = [2, 256], strides = [1, 1]} : vector<2x512xf32> to vector<2x256xf32>
      %84 = vector.extract_strided_slice %82 {offsets = [0, 256], sizes = [2, 256], strides = [1, 1]} : vector<2x512xf32> to vector<2x256xf32>
      %c0_47 = arith.constant 0 : index
      %c0_48 = arith.constant 0 : index
      %85 = vector.load %arg12[%c0_47, %c0_48] : memref<2x768xbf16, #tpu.memory_space<vmem>>, vector<2x768xbf16>
      %c0_49 = arith.constant 0 : index
      %c0_50 = arith.constant 0 : index
      %86 = vector.load %arg13[%c0_49, %c0_50] : memref<768x256xbf16, #tpu.memory_space<vmem>>, vector<768x256xbf16>
      %cst_51 = arith.constant dense<0.000000e+00> : vector<2x256xf32>
      %87 = tpu.matmul %85, %86, %cst_51 {dimension_numbers = #tpu.dot_dimension_numbers<[1], [0], [0], [1], [0, 0, 1, 1], [], []>} : vector<2x768xbf16>, vector<768x256xbf16>, vector<2x256xf32> -> vector<2x256xf32>
      %c0_52 = arith.constant 0 : index
      %c0_53 = arith.constant 0 : index
      %88 = vector.load %arg14[%c0_52, %c0_53] : memref<1x256xf32, #tpu.memory_space<vmem>>, vector<1x256xf32>
      %89 = vector.broadcast %88 : vector<1x256xf32> to vector<2x256xf32>
      %90 = arith.addf %87, %89 : vector<2x256xf32>
      %cst_54 = arith.constant 5.000000e-01 : f32
      %91 = vector.broadcast %cst_54 : f32 to vector<2x256xf32>
      %92 = arith.mulf %91, %90 : vector<2x256xf32>
      %cst_55 = arith.constant 0.707106769 : f32
      %93 = vector.broadcast %cst_55 : f32 to vector<2x256xf32>
      %94 = arith.mulf %90, %93 : vector<2x256xf32>
      %cst_56 = arith.constant 0.000000e+00 : f32
      %95 = vector.broadcast %cst_56 : f32 to vector<2x256xf32>
      %96 = arith.cmpf oge, %94, %95 : vector<2x256xf32>
      %cst_57 = arith.constant 1.000000e+00 : f32
      %cst_58 = arith.constant -1.000000e+00 : f32
      %97 = vector.broadcast %cst_57 : f32 to vector<2x256xf32>
      %98 = vector.broadcast %cst_58 : f32 to vector<2x256xf32>
      %99 = arith.select %96, %97, %98 : vector<2x256xi1>, vector<2x256xf32>
      %100 = math.absf %94 : vector<2x256xf32>
      %cst_59 = arith.constant 0.327591091 : f32
      %101 = vector.broadcast %cst_59 : f32 to vector<2x256xf32>
      %102 = arith.mulf %101, %100 : vector<2x256xf32>
      %cst_60 = arith.constant 1.000000e+00 : f32
      %103 = vector.broadcast %cst_60 : f32 to vector<2x256xf32>
      %104 = arith.addf %103, %102 : vector<2x256xf32>
      %cst_61 = arith.constant 1.000000e+00 : f32
      %105 = vector.broadcast %cst_61 : f32 to vector<2x256xf32>
      %106 = arith.divf %105, %104 : vector<2x256xf32>
      %cst_62 = arith.constant 1.06140542 : f32
      %107 = vector.broadcast %cst_62 : f32 to vector<2x256xf32>
      %108 = arith.mulf %107, %106 : vector<2x256xf32>
      %cst_63 = arith.constant -1.45315206 : f32
      %109 = vector.broadcast %cst_63 : f32 to vector<2x256xf32>
      %110 = arith.addf %108, %109 : vector<2x256xf32>
      %111 = arith.mulf %110, %106 : vector<2x256xf32>
      %cst_64 = arith.constant 1.42141378 : f32
      %112 = vector.broadcast %cst_64 : f32 to vector<2x256xf32>
      %113 = arith.addf %111, %112 : vector<2x256xf32>
      %114 = arith.mulf %113, %106 : vector<2x256xf32>
      %cst_65 = arith.constant -0.284496725 : f32
      %115 = vector.broadcast %cst_65 : f32 to vector<2x256xf32>
      %116 = arith.addf %114, %115 : vector<2x256xf32>
      %117 = arith.mulf %116, %106 : vector<2x256xf32>
      %cst_66 = arith.constant 0.254829586 : f32
      %118 = vector.broadcast %cst_66 : f32 to vector<2x256xf32>
      %119 = arith.addf %117, %118 : vector<2x256xf32>
      %120 = arith.mulf %119, %106 : vector<2x256xf32>
      %cst_67 = arith.constant 0.000000e+00 : f32
      %121 = vector.broadcast %cst_67 : f32 to vector<2x256xf32>
      %122 = arith.subf %121, %100 : vector<2x256xf32>
      %123 = arith.mulf %122, %100 : vector<2x256xf32>
      %124 = math.exp %123 : vector<2x256xf32>
      %125 = arith.mulf %120, %124 : vector<2x256xf32>
      %cst_68 = arith.constant 1.000000e+00 : f32
      %126 = vector.broadcast %cst_68 : f32 to vector<2x256xf32>
      %127 = arith.subf %126, %125 : vector<2x256xf32>
      %128 = arith.mulf %99, %127 : vector<2x256xf32>
      %cst_69 = arith.constant 1.000000e+00 : f32
      %129 = vector.broadcast %cst_69 : f32 to vector<2x256xf32>
      %130 = arith.addf %129, %128 : vector<2x256xf32>
      %131 = arith.mulf %92, %130 : vector<2x256xf32>
      %132 = arith.truncf %131 : vector<2x256xf32> to vector<2x256xbf16>
      %c0_70 = arith.constant 0 : index
      %c0_71 = arith.constant 0 : index
      %133 = vector.load %arg15[%c0_70, %c0_71] : memref<256x256xbf16, #tpu.memory_space<vmem>>, vector<256x256xbf16>
      %cst_72 = arith.constant dense<0.000000e+00> : vector<2x256xf32>
      %134 = tpu.matmul %132, %133, %cst_72 {dimension_numbers = #tpu.dot_dimension_numbers<[1], [0], [0], [1], [0, 0, 1, 1], [], []>} : vector<2x256xbf16>, vector<256x256xbf16>, vector<2x256xf32> -> vector<2x256xf32>
      %c0_73 = arith.constant 0 : index
      %c0_74 = arith.constant 0 : index
      %135 = vector.load %arg16[%c0_73, %c0_74] : memref<1x256xf32, #tpu.memory_space<vmem>>, vector<1x256xf32>
      %136 = vector.broadcast %135 : vector<1x256xf32> to vector<2x256xf32>
      %137 = arith.addf %134, %136 : vector<2x256xf32>
      %138 = arith.mulf %79, %79 : vector<2x256xf32>
      %cst_75 = arith.constant dense<0.000000e+00> : vector<2xf32>
      %139 = vector.multi_reduction <add>, %138, %cst_75 [1] : vector<2x256xf32> to vector<2xf32>
      %140 = vector.shape_cast %139 : vector<2xf32> to vector<2x1xf32>
      %141 = math.sqrt %140 : vector<2x1xf32>
      %cst_76 = arith.constant 9.99999996E-13 : f32
      %142 = vector.broadcast %cst_76 : f32 to vector<2x1xf32>
      %143 = arith.maximumf %141, %142 : vector<2x1xf32>
      %144 = vector.broadcast %143 : vector<2x1xf32> to vector<2x256xf32>
      %145 = arith.divf %79, %144 : vector<2x256xf32>
      %146 = arith.mulf %137, %137 : vector<2x256xf32>
      %cst_77 = arith.constant dense<0.000000e+00> : vector<2xf32>
      %147 = vector.multi_reduction <add>, %146, %cst_77 [1] : vector<2x256xf32> to vector<2xf32>
      %148 = vector.shape_cast %147 : vector<2xf32> to vector<2x1xf32>
      %149 = math.sqrt %148 : vector<2x1xf32>
      %cst_78 = arith.constant 9.99999996E-13 : f32
      %150 = vector.broadcast %cst_78 : f32 to vector<2x1xf32>
      %151 = arith.maximumf %149, %150 : vector<2x1xf32>
      %152 = vector.broadcast %151 : vector<2x1xf32> to vector<2x256xf32>
      %153 = arith.divf %137, %152 : vector<2x256xf32>
      %cst_79 = arith.constant dense<0.000000e+00> : vector<2x2xf32>
      %154 = tpu.matmul %145, %153, %cst_79 {dimension_numbers = #tpu.dot_dimension_numbers<[1], [1], [0], [0], [0, 0, 1, 0], [], []>} : vector<2x256xf32>, vector<2x256xf32>, vector<2x2xf32> -> vector<2x2xf32>
      %cst_80 = arith.constant 14.2857141 : f32
      %155 = vector.broadcast %cst_80 : f32 to vector<2x2xf32>
      %156 = arith.mulf %154, %155 : vector<2x2xf32>
      %cst_81 = arith.constant dense<0.000000e+00> : vector<2x2xf32>
      %157 = tpu.matmul %153, %145, %cst_81 {dimension_numbers = #tpu.dot_dimension_numbers<[1], [1], [0], [0], [0, 0, 1, 0], [], []>} : vector<2x256xf32>, vector<2x256xf32>, vector<2x2xf32> -> vector<2x2xf32>
      %cst_82 = arith.constant 14.2857141 : f32
      %158 = vector.broadcast %cst_82 : f32 to vector<2x2xf32>
      %159 = arith.mulf %157, %158 : vector<2x2xf32>
      %160 = tpu.iota {dimensions = array<i32: 0>} : vector<2x2xi32>
      %161 = tpu.iota {dimensions = array<i32: 1>} : vector<2x2xi32>
      %162 = arith.cmpi eq, %160, %161 : vector<2x2xi32>
      %cst_83 = arith.constant 0.000000e+00 : f32
      %163 = vector.broadcast %cst_83 : f32 to vector<2x2xf32>
      %164 = arith.select %162, %156, %163 : vector<2x2xi1>, vector<2x2xf32>
      %165 = vector.shape_cast %164 : vector<2x2xf32> to vector<1x2x2xf32>
      %cst_84 = arith.constant dense<0.000000e+00> : vector<1xf32>
      %166 = vector.multi_reduction <add>, %165, %cst_84 [1, 2] : vector<1x2x2xf32> to vector<1xf32>
      %167 = vector.shape_cast %166 : vector<1xf32> to vector<1x1x1xf32>
      %168 = vector.extract %167[0, 0, 0] : f32 from vector<1x1x1xf32>
      %cst_85 = arith.constant dense<0xFF800000> : vector<2xf32>
      %169 = vector.multi_reduction <maximumf>, %156, %cst_85 [1] : vector<2x2xf32> to vector<2xf32>
      %170 = vector.shape_cast %169 : vector<2xf32> to vector<2x1xf32>
      %171 = vector.broadcast %170 : vector<2x1xf32> to vector<2x2xf32>
      %172 = arith.subf %156, %171 : vector<2x2xf32>
      %173 = math.exp %172 : vector<2x2xf32>
      %cst_86 = arith.constant dense<0.000000e+00> : vector<2xf32>
      %174 = vector.multi_reduction <add>, %173, %cst_86 [1] : vector<2x2xf32> to vector<2xf32>
      %175 = vector.shape_cast %174 : vector<2xf32> to vector<2x1xf32>
      %176 = math.log %175 : vector<2x1xf32>
      %177 = arith.addf %176, %170 : vector<2x1xf32>
      %178 = vector.shape_cast %177 : vector<2x1xf32> to vector<1x2x1xf32>
      %cst_87 = arith.constant dense<0.000000e+00> : vector<1xf32>
      %179 = vector.multi_reduction <add>, %178, %cst_87 [1, 2] : vector<1x2x1xf32> to vector<1xf32>
      %180 = vector.shape_cast %179 : vector<1xf32> to vector<1x1x1xf32>
      %181 = vector.extract %180[0, 0, 0] : f32 from vector<1x1x1xf32>
      %182 = arith.subf %181, %168 : f32
      %cst_88 = arith.constant 2.000000e+00 : f32
      %183 = arith.divf %182, %cst_88 : f32
      %cst_89 = arith.constant dense<0xFF800000> : vector<2xf32>
      %184 = vector.multi_reduction <maximumf>, %159, %cst_89 [1] : vector<2x2xf32> to vector<2xf32>
      %185 = vector.shape_cast %184 : vector<2xf32> to vector<2x1xf32>
      %186 = vector.broadcast %185 : vector<2x1xf32> to vector<2x2xf32>
      %187 = arith.subf %159, %186 : vector<2x2xf32>
      %188 = math.exp %187 : vector<2x2xf32>
      %cst_90 = arith.constant dense<0.000000e+00> : vector<2xf32>
      %189 = vector.multi_reduction <add>, %188, %cst_90 [1] : vector<2x2xf32> to vector<2xf32>
      %190 = vector.shape_cast %189 : vector<2xf32> to vector<2x1xf32>
      %191 = math.log %190 : vector<2x1xf32>
      %192 = arith.addf %191, %185 : vector<2x1xf32>
      %193 = vector.shape_cast %192 : vector<2x1xf32> to vector<1x2x1xf32>
      %cst_91 = arith.constant dense<0.000000e+00> : vector<1xf32>
      %194 = vector.multi_reduction <add>, %193, %cst_91 [1, 2] : vector<1x2x1xf32> to vector<1xf32>
      %195 = vector.shape_cast %194 : vector<1xf32> to vector<1x1x1xf32>
      %196 = vector.extract %195[0, 0, 0] : f32 from vector<1x1x1xf32>
      %197 = arith.subf %196, %168 : f32
      %cst_92 = arith.constant 2.000000e+00 : f32
      %198 = arith.divf %197, %cst_92 : f32
      %199 = arith.addf %183, %198 : f32
      %200 = arith.mulf %83, %83 : vector<2x256xf32>
      %cst_93 = arith.constant dense<0.000000e+00> : vector<2xf32>
      %201 = vector.multi_reduction <add>, %200, %cst_93 [1] : vector<2x256xf32> to vector<2xf32>
      %202 = vector.shape_cast %201 : vector<2xf32> to vector<2x1xf32>
      %203 = math.sqrt %202 : vector<2x1xf32>
      %cst_94 = arith.constant 9.99999996E-13 : f32
      %204 = vector.broadcast %cst_94 : f32 to vector<2x1xf32>
      %205 = arith.maximumf %203, %204 : vector<2x1xf32>
      %206 = vector.broadcast %205 : vector<2x1xf32> to vector<2x256xf32>
      %207 = arith.divf %83, %206 : vector<2x256xf32>
      %208 = arith.mulf %84, %84 : vector<2x256xf32>
      %cst_95 = arith.constant dense<0.000000e+00> : vector<2xf32>
      %209 = vector.multi_reduction <add>, %208, %cst_95 [1] : vector<2x256xf32> to vector<2xf32>
      %210 = vector.shape_cast %209 : vector<2xf32> to vector<2x1xf32>
      %211 = math.sqrt %210 : vector<2x1xf32>
      %cst_96 = arith.constant 9.99999996E-13 : f32
      %212 = vector.broadcast %cst_96 : f32 to vector<2x1xf32>
      %213 = arith.maximumf %211, %212 : vector<2x1xf32>
      %214 = vector.broadcast %213 : vector<2x1xf32> to vector<2x256xf32>
      %215 = arith.divf %84, %214 : vector<2x256xf32>
      %cst_97 = arith.constant dense<0.000000e+00> : vector<2x2xf32>
      %216 = tpu.matmul %207, %215, %cst_97 {dimension_numbers = #tpu.dot_dimension_numbers<[1], [1], [0], [0], [0, 0, 1, 0], [], []>} : vector<2x256xf32>, vector<2x256xf32>, vector<2x2xf32> -> vector<2x2xf32>
      %cst_98 = arith.constant 14.2857141 : f32
      %217 = vector.broadcast %cst_98 : f32 to vector<2x2xf32>
      %218 = arith.mulf %216, %217 : vector<2x2xf32>
      %cst_99 = arith.constant dense<0.000000e+00> : vector<2x2xf32>
      %219 = tpu.matmul %215, %207, %cst_99 {dimension_numbers = #tpu.dot_dimension_numbers<[1], [1], [0], [0], [0, 0, 1, 0], [], []>} : vector<2x256xf32>, vector<2x256xf32>, vector<2x2xf32> -> vector<2x2xf32>
      %cst_100 = arith.constant 14.2857141 : f32
      %220 = vector.broadcast %cst_100 : f32 to vector<2x2xf32>
      %221 = arith.mulf %219, %220 : vector<2x2xf32>
      %222 = tpu.iota {dimensions = array<i32: 0>} : vector<2x2xi32>
      %223 = tpu.iota {dimensions = array<i32: 1>} : vector<2x2xi32>
      %224 = arith.cmpi eq, %222, %223 : vector<2x2xi32>
      %cst_101 = arith.constant 0.000000e+00 : f32
      %225 = vector.broadcast %cst_101 : f32 to vector<2x2xf32>
      %226 = arith.select %224, %218, %225 : vector<2x2xi1>, vector<2x2xf32>
      %227 = vector.shape_cast %226 : vector<2x2xf32> to vector<1x2x2xf32>
      %cst_102 = arith.constant dense<0.000000e+00> : vector<1xf32>
      %228 = vector.multi_reduction <add>, %227, %cst_102 [1, 2] : vector<1x2x2xf32> to vector<1xf32>
      %229 = vector.shape_cast %228 : vector<1xf32> to vector<1x1x1xf32>
      %230 = vector.extract %229[0, 0, 0] : f32 from vector<1x1x1xf32>
      %cst_103 = arith.constant dense<0xFF800000> : vector<2xf32>
      %231 = vector.multi_reduction <maximumf>, %218, %cst_103 [1] : vector<2x2xf32> to vector<2xf32>
      %232 = vector.shape_cast %231 : vector<2xf32> to vector<2x1xf32>
      %233 = vector.broadcast %232 : vector<2x1xf32> to vector<2x2xf32>
      %234 = arith.subf %218, %233 : vector<2x2xf32>
      %235 = math.exp %234 : vector<2x2xf32>
      %cst_104 = arith.constant dense<0.000000e+00> : vector<2xf32>
      %236 = vector.multi_reduction <add>, %235, %cst_104 [1] : vector<2x2xf32> to vector<2xf32>
      %237 = vector.shape_cast %236 : vector<2xf32> to vector<2x1xf32>
      %238 = math.log %237 : vector<2x1xf32>
      %239 = arith.addf %238, %232 : vector<2x1xf32>
      %240 = vector.shape_cast %239 : vector<2x1xf32> to vector<1x2x1xf32>
      %cst_105 = arith.constant dense<0.000000e+00> : vector<1xf32>
      %241 = vector.multi_reduction <add>, %240, %cst_105 [1, 2] : vector<1x2x1xf32> to vector<1xf32>
      %242 = vector.shape_cast %241 : vector<1xf32> to vector<1x1x1xf32>
      %243 = vector.extract %242[0, 0, 0] : f32 from vector<1x1x1xf32>
      %244 = arith.subf %243, %230 : f32
      %cst_106 = arith.constant 2.000000e+00 : f32
      %245 = arith.divf %244, %cst_106 : f32
      %cst_107 = arith.constant dense<0xFF800000> : vector<2xf32>
      %246 = vector.multi_reduction <maximumf>, %221, %cst_107 [1] : vector<2x2xf32> to vector<2xf32>
      %247 = vector.shape_cast %246 : vector<2xf32> to vector<2x1xf32>
      %248 = vector.broadcast %247 : vector<2x1xf32> to vector<2x2xf32>
      %249 = arith.subf %221, %248 : vector<2x2xf32>
      %250 = math.exp %249 : vector<2x2xf32>
      %cst_108 = arith.constant dense<0.000000e+00> : vector<2xf32>
      %251 = vector.multi_reduction <add>, %250, %cst_108 [1] : vector<2x2xf32> to vector<2xf32>
      %252 = vector.shape_cast %251 : vector<2xf32> to vector<2x1xf32>
      %253 = math.log %252 : vector<2x1xf32>
      %254 = arith.addf %253, %247 : vector<2x1xf32>
      %255 = vector.shape_cast %254 : vector<2x1xf32> to vector<1x2x1xf32>
      %cst_109 = arith.constant dense<0.000000e+00> : vector<1xf32>
      %256 = vector.multi_reduction <add>, %255, %cst_109 [1, 2] : vector<1x2x1xf32> to vector<1xf32>
      %257 = vector.shape_cast %256 : vector<1xf32> to vector<1x1x1xf32>
      %258 = vector.extract %257[0, 0, 0] : f32 from vector<1x1x1xf32>
      %259 = arith.subf %258, %230 : f32
      %cst_110 = arith.constant 2.000000e+00 : f32
      %260 = arith.divf %259, %cst_110 : f32
      %261 = arith.addf %245, %260 : f32
      %262 = arith.addf %199, %261 : f32
      %c0_111 = arith.constant 0 : index
      %c0_112 = arith.constant 0 : index
      %263 = memref.load %arg17[%c0_111, %c0_112] : memref<1x1xf32, #tpu.memory_space<smem>>
      memref.store %262, %arg17[%c0_111, %c0_112] : memref<1x1xf32, #tpu.memory_space<smem>>
    } else {
    }
    return
  }
  func.func @transform_0(%arg0: i32) -> (i32, i32) {
    %c0_i32 = arith.constant 0 : i32
    %c0_i32_0 = arith.constant 0 : i32
    return %c0_i32, %arg0 : i32, i32
  }
  func.func @transform_1(%arg0: i32) -> (i32, i32) {
    %c0_i32 = arith.constant 0 : i32
    %c0_i32_0 = arith.constant 0 : i32
    return %arg0, %c0_i32 : i32, i32
  }
  func.func @transform_2(%arg0: i32) -> (i32, i32) {
    %c0_i32 = arith.constant 0 : i32
    %c0_i32_0 = arith.constant 0 : i32
    %c0_i32_1 = arith.constant 0 : i32
    return %c0_i32, %c0_i32_0 : i32, i32
  }
  func.func @transform_3(%arg0: i32) -> (i32, i32) {
    %c0_i32 = arith.constant 0 : i32
    %c0_i32_0 = arith.constant 0 : i32
    %c0_i32_1 = arith.constant 0 : i32
    return %c0_i32, %c0_i32_0 : i32, i32
  }
  func.func @transform_4(%arg0: i32) -> (i32, i32) {
    %c0_i32 = arith.constant 0 : i32
    %c0_i32_0 = arith.constant 0 : i32
    %c0_i32_1 = arith.constant 0 : i32
    return %c0_i32, %c0_i32_0 : i32, i32
  }
  func.func @transform_5(%arg0: i32) -> (i32, i32) {
    %c0_i32 = arith.constant 0 : i32
    %c0_i32_0 = arith.constant 0 : i32
    %c0_i32_1 = arith.constant 0 : i32
    return %c0_i32, %c0_i32_0 : i32, i32
  }
  func.func @transform_6(%arg0: i32) -> (i32, i32) {
    %c0_i32 = arith.constant 0 : i32
    %c0_i32_0 = arith.constant 0 : i32
    %c0_i32_1 = arith.constant 0 : i32
    return %c0_i32, %c0_i32_0 : i32, i32
  }
  func.func @transform_7(%arg0: i32) -> (i32, i32) {
    %c0_i32 = arith.constant 0 : i32
    %c0_i32_0 = arith.constant 0 : i32
    %c0_i32_1 = arith.constant 0 : i32
    return %c0_i32, %c0_i32_0 : i32, i32
  }
  func.func @transform_8(%arg0: i32) -> (i32, i32) {
    %c0_i32 = arith.constant 0 : i32
    %c0_i32_0 = arith.constant 0 : i32
    %c0_i32_1 = arith.constant 0 : i32
    return %c0_i32, %c0_i32_0 : i32, i32
  }
  func.func @transform_9(%arg0: i32) -> (i32, i32) {
    %c0_i32 = arith.constant 0 : i32
    %c0_i32_0 = arith.constant 0 : i32
    %c0_i32_1 = arith.constant 0 : i32
    return %c0_i32, %c0_i32_0 : i32, i32
  }
  func.func @transform_10(%arg0: i32) -> (i32, i32) {
    %c0_i32 = arith.constant 0 : i32
    %c0_i32_0 = arith.constant 0 : i32
    %c0_i32_1 = arith.constant 0 : i32
    return %c0_i32, %c0_i32_0 : i32, i32
  }
  func.func @transform_11(%arg0: i32) -> (i32, i32) {
    %c0_i32 = arith.constant 0 : i32
    %c0_i32_0 = arith.constant 0 : i32
    %c0_i32_1 = arith.constant 0 : i32
    return %c0_i32, %c0_i32_0 : i32, i32
  }
  func.func @transform_12(%arg0: i32) -> (i32, i32) {
    %c0_i32 = arith.constant 0 : i32
    %c0_i32_0 = arith.constant 0 : i32
    %c0_i32_1 = arith.constant 0 : i32
    return %c0_i32, %c0_i32_0 : i32, i32
  }
  func.func @transform_13(%arg0: i32) -> (i32, i32) {
    %c0_i32 = arith.constant 0 : i32
    %c0_i32_0 = arith.constant 0 : i32
    %c0_i32_1 = arith.constant 0 : i32
    return %c0_i32, %c0_i32_0 : i32, i32
  }
  func.func @transform_14(%arg0: i32) -> (i32, i32) {
    %c0_i32 = arith.constant 0 : i32
    %c0_i32_0 = arith.constant 0 : i32
    %c0_i32_1 = arith.constant 0 : i32
    return %c0_i32, %c0_i32_0 : i32, i32
  }
  func.func @transform_15(%arg0: i32) -> (i32, i32) {
    %c0_i32 = arith.constant 0 : i32
    %c0_i32_0 = arith.constant 0 : i32
    %c0_i32_1 = arith.constant 0 : i32
    return %c0_i32, %c0_i32_0 : i32, i32
  }
  func.func @transform_16(%arg0: i32) -> (i32, i32) {
    %c0_i32 = arith.constant 0 : i32
    %c0_i32_0 = arith.constant 0 : i32
    %c0_i32_1 = arith.constant 0 : i32
    return %c0_i32, %c0_i32_0 : i32, i32
  }
}

</mosaic_0001>

<llo_original>
// kernel: merl_pretrain_forward.1
$region0: #{merl_pretrain_forward.1}
  #allocation0 [shape = 'u32[]', space=smem, size = 0x4, offset = 0x4, fixed_abs, tag = 'smem constant byte address 0x4 - core index']
  #allocation1 [shape = 'u32[144,128]{1,0:T(1,128)}', space=vmem, size = 0x12000, scoped, tag = 'internal scratch']
  #allocation2 [shape = 'f32[64,256]{1,0:T(8,128)}', space=vmem, size = 0x10000, scoped, tag = 'scratch operand']
  %s0 = inlined_call_operand.vmem [shape: bf16[64,2048], index: 0, kind: input, shape index: {}]
  %s1 = inlined_call_operand.vmem [shape: bf16[2048,256], index: 1, kind: input, shape index: {}]
  %s2 = inlined_call_operand.vmem [shape: f32[1,256], index: 2, kind: input, shape index: {}]
  %s3 = inlined_call_operand.vmem [shape: f32[1,256], index: 3, kind: input, shape index: {}]
  %s4 = inlined_call_operand.vmem [shape: f32[32,256], index: 4, kind: input, shape index: {}]
  %s5 = inlined_call_operand.vmem [shape: bf16[256,768], index: 5, kind: input, shape index: {}]
  %s6 = inlined_call_operand.vmem [shape: f32[1,768], index: 6, kind: input, shape index: {}]
  %s7 = inlined_call_operand.vmem [shape: f32[256,256], index: 7, kind: input, shape index: {}]
  %s8 = inlined_call_operand.vmem [shape: bf16[256,256], index: 8, kind: input, shape index: {}]
  %s9 = inlined_call_operand.vmem [shape: f32[1,256], index: 9, kind: input, shape index: {}]
  %s10 = inlined_call_operand.vmem [shape: bf16[256,512], index: 10, kind: input, shape index: {}]
  %s11 = inlined_call_operand.vmem [shape: bf16[2,768], index: 11, kind: input, shape index: {}]
  %s12 = inlined_call_operand.vmem [shape: bf16[768,256], index: 12, kind: input, shape index: {}]
  %s13 = inlined_call_operand.vmem [shape: f32[1,256], index: 13, kind: input, shape index: {}]
  %s14 = inlined_call_operand.vmem [shape: bf16[256,256], index: 14, kind: input, shape index: {}]
  %s15 = inlined_call_operand.vmem [shape: f32[1,256], index: 15, kind: input, shape index: {}]
  %s16 = inlined_call_operand.hbm [shape: f32[1,1], index: 16, kind: output, shape index: {}]
  %s17 = sld [smem:[#allocation0]]
  $region128: #{merl_pretrain_forward.1} parent=0
    _
  %s19 = ssub.s32 1, %s17
  %s20 = scalar_select 0, %s19, %s17
  $region1: #{merl_pretrain_forward.1} parent=0
    #allocation3 [shape = 'u8[131072]{0}', space=vmem, size = 0x20000, scoped, tag = 'input window, operand 0']
    #allocation4 [shape = 'u8[512]{0}', space=smem, size = 0x200, scoped, tag = 'output window, operand 0, single buffered']
    #allocation5 [shape = 's32[2]{0}', space=sflag, size = 0x8, scoped, tag = 'scoped memory for merl_pretrain_forward.1']
    %21 = vsyncpa [#allocation5], 0
    loop: start=0, step=1, limit=6
    $region2: #{merl_pretrain_forward.1} parent=1 // loop_pre_header
      _
    $region3: #{merl_pretrain_forward.1} parent=1 // loop_header
      %s23 = sphi 0, %s27
      %p24 = scmp.ge.s32.totalorder %s23, 6
      %s33 = sphi 0, %s35
      %s36 = sphi 0, %s33
      %s37 = sphi 0, %s36
      %s53 = sphi 0, %s37
      %s59 = sphi 0, %s61
      %s62 = sphi 0, %s59
      %s63 = sphi 0, %s62
      %s79 = sphi 0, %s63
      %s83 = sphi 0, %s83
      %s85 = sphi 0, %s83
      %s86 = sphi 0, %s85
      %s100 = sphi 0, %s86
      %s104 = sphi 0, %s104
      %s106 = sphi 0, %s104
      %s107 = sphi 0, %s106
      %s121 = sphi 0, %s107
      %s125 = sphi 0, %s125
      %s127 = sphi 0, %s125
      %s128 = sphi 0, %s127
      %s142 = sphi 0, %s128
      %s146 = sphi 0, %s146
      %s148 = sphi 0, %s146
      %s149 = sphi 0, %s148
      %s163 = sphi 0, %s149
      %s167 = sphi 0, %s167
      %s169 = sphi 0, %s167
      %s170 = sphi 0, %s169
      %s184 = sphi 0, %s170
      %s188 = sphi 0, %s188
      %s190 = sphi 0, %s188
      %s191 = sphi 0, %s190
      %s205 = sphi 0, %s191
      %s209 = sphi 0, %s209
      %s211 = sphi 0, %s209
      %s212 = sphi 0, %s211
      %s226 = sphi 0, %s212
      %s230 = sphi 0, %s230
      %s232 = sphi 0, %s230
      %s233 = sphi 0, %s232
      %s247 = sphi 0, %s233
      %s251 = sphi 0, %s251
      %s253 = sphi 0, %s251
      %s254 = sphi 0, %s253
      %s268 = sphi 0, %s254
      %s272 = sphi 0, %s272
      %s274 = sphi 0, %s272
      %s275 = sphi 0, %s274
      %s289 = sphi 0, %s275
      %s293 = sphi 0, %s293
      %s295 = sphi 0, %s293
      %s296 = sphi 0, %s295
      %s310 = sphi 0, %s296
      %s314 = sphi 0, %s314
      %s316 = sphi 0, %s314
      %s317 = sphi 0, %s316
      %s331 = sphi 0, %s317
      %s335 = sphi 0, %s335
      %s337 = sphi 0, %s335
      %s338 = sphi 0, %s337
      %s352 = sphi 0, %s338
      %s356 = sphi 0, %s356
      %s358 = sphi 0, %s356
      %s359 = sphi 0, %s358
      %s373 = sphi 0, %s359
      %s377 = sphi 0, %s377
      %s379 = sphi 0, %s377
      %s380 = sphi 0, %s379
      %s394 = sphi 0, %s380
    $region4: #{merl_pretrain_forward.1} parent=1 // loop_header_branch
      %26 = sbr.rel (%p24) target = $region8
    $region5: #{merl_pretrain_forward.1} parent=1 // loop_body
      %s28 = ssub.s32 %s23, 1
      %s29 = ssub.s32 %s23, 2
      %s30 = sadd.s32 %s23, 1
      %s31 = ssub.s32 %s23, %s30
      %p32 = scmp.eq.s32.totalorder %s31, 0
      %s34 = sadd.s32 %s33, 1
      %s35 = scalar_select %p32, %s33, %s34
      %p38 = pneg %p32
      %p39 = scmp.eq.s32.totalorder %s23, 3
      %p40 = por %p38, %p39
      %p41 = scmp.ne.s32.totalorder %s33, %s36
      %p42 = scmp.eq.s32.totalorder %s23, 0
      %p43 = por %p41, %p42
      %p44 = scmp.ne.s32.totalorder %s33, %s36
      %p45 = scmp.eq.s32.totalorder %s28, 3
      %p46 = por %p44, %p45
      %p47 = scmp.ne.s32.totalorder %s36, %s37
      %p48 = scmp.eq.s32.totalorder %s28, 0
      %p49 = por %p47, %p48
      %p50 = scmp.ne.s32.totalorder %s36, %s37
      %p51 = scmp.eq.s32.totalorder %s29, 3
      %p52 = por %p50, %p51
      %p54 = scmp.ne.s32.totalorder %s37, %s53
      %p55 = scmp.eq.s32.totalorder %s29, 0
      %p56 = por %p54, %p55
      %s57 = ssub.s32 %s23, %s30
      %p58 = scmp.eq.s32.totalorder %s57, 0
      %s60 = sadd.s32 %s59, 1
      %s61 = scalar_select %p58, %s59, %s60
      %p64 = pneg %p58
      %p65 = scmp.eq.s32.totalorder %s23, 3
      %p66 = por %p64, %p65
      %p67 = scmp.ne.s32.totalorder %s59, %s62
      %p68 = scmp.eq.s32.totalorder %s23, 0
      %p69 = por %p67, %p68
      %p70 = scmp.ne.s32.totalorder %s59, %s62
      %p71 = scmp.eq.s32.totalorder %s28, 3
      %p72 = por %p70, %p71
      %p73 = scmp.ne.s32.totalorder %s62, %s63
      %p74 = scmp.eq.s32.totalorder %s28, 0
      %p75 = por %p73, %p74
      %p76 = scmp.ne.s32.totalorder %s62, %s63
      %p77 = scmp.eq.s32.totalorder %s29, 3
      %p78 = por %p76, %p77
      %p80 = scmp.ne.s32.totalorder %s63, %s79
      %p81 = scmp.eq.s32.totalorder %s29, 0
      %p82 = por %p80, %p81
      %s84 = sadd.s32 %s83, 1
      %p87 = scmp.eq.s32.totalorder %s23, 3
      %p88 = scmp.ne.s32.totalorder %s83, %s85
      %p89 = scmp.eq.s32.totalorder %s23, 0
      %p90 = por %p88, %p89
      %p91 = scmp.ne.s32.totalorder %s83, %s85
      %p92 = scmp.eq.s32.totalorder %s28, 3
      %p93 = por %p91, %p92
      %p94 = scmp.ne.s32.totalorder %s85, %s86
      %p95 = scmp.eq.s32.totalorder %s28, 0
      %p96 = por %p94, %p95
      %p97 = scmp.ne.s32.totalorder %s85, %s86
      %p98 = scmp.eq.s32.totalorder %s29, 3
      %p99 = por %p97, %p98
      %p101 = scmp.ne.s32.totalorder %s86, %s100
      %p102 = scmp.eq.s32.totalorder %s29, 0
      %p103 = por %p101, %p102
      %s105 = sadd.s32 %s104, 1
      %p108 = scmp.eq.s32.totalorder %s23, 3
      %p109 = scmp.ne.s32.totalorder %s104, %s106
      %p110 = scmp.eq.s32.totalorder %s23, 0
      %p111 = por %p109, %p110
      %p112 = scmp.ne.s32.totalorder %s104, %s106
      %p113 = scmp.eq.s32.totalorder %s28, 3
      %p114 = por %p112, %p113
      %p115 = scmp.ne.s32.totalorder %s106, %s107
      %p116 = scmp.eq.s32.totalorder %s28, 0
      %p117 = por %p115, %p116
      %p118 = scmp.ne.s32.totalorder %s106, %s107
      %p119 = scmp.eq.s32.totalorder %s29, 3
      %p120 = por %p118, %p119
      %p122 = scmp.ne.s32.totalorder %s107, %s121
      %p123 = scmp.eq.s32.totalorder %s29, 0
      %p124 = por %p122, %p123
      %s126 = sadd.s32 %s125, 1
      %p129 = scmp.eq.s32.totalorder %s23, 3
      %p130 = scmp.ne.s32.totalorder %s125, %s127
      %p131 = scmp.eq.s32.totalorder %s23, 0
      %p132 = por %p130, %p131
      %p133 = scmp.ne.s32.totalorder %s125, %s127
      %p134 = scmp.eq.s32.totalorder %s28, 3
      %p135 = por %p133, %p134
      %p136 = scmp.ne.s32.totalorder %s127, %s128
      %p137 = scmp.eq.s32.totalorder %s28, 0
      %p138 = por %p136, %p137
      %p139 = scmp.ne.s32.totalorder %s127, %s128
      %p140 = scmp.eq.s32.totalorder %s29, 3
      %p141 = por %p139, %p140
      %p143 = scmp.ne.s32.totalorder %s128, %s142
      %p144 = scmp.eq.s32.totalorder %s29, 0
      %p145 = por %p143, %p144
      %s147 = sadd.s32 %s146, 1
      %p150 = scmp.eq.s32.totalorder %s23, 3
      %p151 = scmp.ne.s32.totalorder %s146, %s148
      %p152 = scmp.eq.s32.totalorder %s23, 0
      %p153 = por %p151, %p152
      %p154 = scmp.ne.s32.totalorder %s146, %s148
      %p155 = scmp.eq.s32.totalorder %s28, 3
      %p156 = por %p154, %p155
      %p157 = scmp.ne.s32.totalorder %s148, %s149
      %p158 = scmp.eq.s32.totalorder %s28, 0
      %p159 = por %p157, %p158
      %p160 = scmp.ne.s32.totalorder %s148, %s149
      %p161 = scmp.eq.s32.totalorder %s29, 3
      %p162 = por %p160, %p161
      %p164 = scmp.ne.s32.totalorder %s149, %s163
      %p165 = scmp.eq.s32.totalorder %s29, 0
      %p166 = por %p164, %p165
      %s168 = sadd.s32 %s167, 1
      %p171 = scmp.eq.s32.totalorder %s23, 3
      %p172 = scmp.ne.s32.totalorder %s167, %s169
      %p173 = scmp.eq.s32.totalorder %s23, 0
      %p174 = por %p172, %p173
      %p175 = scmp.ne.s32.totalorder %s167, %s169
      %p176 = scmp.eq.s32.totalorder %s28, 3
      %p177 = por %p175, %p176
      %p178 = scmp.ne.s32.totalorder %s169, %s170
      %p179 = scmp.eq.s32.totalorder %s28, 0
      %p180 = por %p178, %p179
      %p181 = scmp.ne.s32.totalorder %s169, %s170
      %p182 = scmp.eq.s32.totalorder %s29, 3
      %p183 = por %p181, %p182
      %p185 = scmp.ne.s32.totalorder %s170, %s184
      %p186 = scmp.eq.s32.totalorder %s29, 0
      %p187 = por %p185, %p186
      %s189 = sadd.s32 %s188, 1
      %p192 = scmp.eq.s32.totalorder %s23, 3
      %p193 = scmp.ne.s32.totalorder %s188, %s190
      %p194 = scmp.eq.s32.totalorder %s23, 0
      %p195 = por %p193, %p194
      %p196 = scmp.ne.s32.totalorder %s188, %s190
      %p197 = scmp.eq.s32.totalorder %s28, 3
      %p198 = por %p196, %p197
      %p199 = scmp.ne.s32.totalorder %s190, %s191
      %p200 = scmp.eq.s32.totalorder %s28, 0
      %p201 = por %p199, %p200
      %p202 = scmp.ne.s32.totalorder %s190, %s191
      %p203 = scmp.eq.s32.totalorder %s29, 3
      %p204 = por %p202, %p203
      %p206 = scmp.ne.s32.totalorder %s191, %s205
      %p207 = scmp.eq.s32.totalorder %s29, 0
      %p208 = por %p206, %p207
      %s210 = sadd.s32 %s209, 1
      %p213 = scmp.eq.s32.totalorder %s23, 3
      %p214 = scmp.ne.s32.totalorder %s209, %s211
      %p215 = scmp.eq.s32.totalorder %s23, 0
      %p216 = por %p214, %p215
      %p217 = scmp.ne.s32.totalorder %s209, %s211
      %p218 = scmp.eq.s32.totalorder %s28, 3
      %p219 = por %p217, %p218
      %p220 = scmp.ne.s32.totalorder %s211, %s212
      %p221 = scmp.eq.s32.totalorder %s28, 0
      %p222 = por %p220, %p221
      %p223 = scmp.ne.s32.totalorder %s211, %s212
      %p224 = scmp.eq.s32.totalorder %s29, 3
      %p225 = por %p223, %p224
      %p227 = scmp.ne.s32.totalorder %s212, %s226
      %p228 = scmp.eq.s32.totalorder %s29, 0
      %p229 = por %p227, %p228
      %s231 = sadd.s32 %s230, 1
      %p234 = scmp.eq.s32.totalorder %s23, 3
      %p235 = scmp.ne.s32.totalorder %s230, %s232
      %p236 = scmp.eq.s32.totalorder %s23, 0
      %p237 = por %p235, %p236
      %p238 = scmp.ne.s32.totalorder %s230, %s232
      %p239 = scmp.eq.s32.totalorder %s28, 3
      %p240 = por %p238, %p239
      %p241 = scmp.ne.s32.totalorder %s232, %s233
      %p242 = scmp.eq.s32.totalorder %s28, 0
      %p243 = por %p241, %p242
      %p244 = scmp.ne.s32.totalorder %s232, %s233
      %p245 = scmp.eq.s32.totalorder %s29, 3
      %p246 = por %p244, %p245
      %p248 = scmp.ne.s32.totalorder %s233, %s247
      %p249 = scmp.eq.s32.totalorder %s29, 0
      %p250 = por %p248, %p249
      %s252 = sadd.s32 %s251, 1
      %p255 = scmp.eq.s32.totalorder %s23, 3
      %p256 = scmp.ne.s32.totalorder %s251, %s253
      %p257 = scmp.eq.s32.totalorder %s23, 0
      %p258 = por %p256, %p257
      %p259 = scmp.ne.s32.totalorder %s251, %s253
      %p260 = scmp.eq.s32.totalorder %s28, 3
      %p261 = por %p259, %p260
      %p262 = scmp.ne.s32.totalorder %s253, %s254
      %p263 = scmp.eq.s32.totalorder %s28, 0
      %p264 = por %p262, %p263
      %p265 = scmp.ne.s32.totalorder %s253, %s254
      %p266 = scmp.eq.s32.totalorder %s29, 3
      %p267 = por %p265, %p266
      %p269 = scmp.ne.s32.totalorder %s254, %s268
      %p270 = scmp.eq.s32.totalorder %s29, 0
      %p271 = por %p269, %p270
      %s273 = sadd.s32 %s272, 1
      %p276 = scmp.eq.s32.totalorder %s23, 3
      %p277 = scmp.ne.s32.totalorder %s272, %s274
      %p278 = scmp.eq.s32.totalorder %s23, 0
      %p279 = por %p277, %p278
      %p280 = scmp.ne.s32.totalorder %s272, %s274
      %p281 = scmp.eq.s32.totalorder %s28, 3
      %p282 = por %p280, %p281
      %p283 = scmp.ne.s32.totalorder %s274, %s275
      %p284 = scmp.eq.s32.totalorder %s28, 0
      %p285 = por %p283, %p284
      %p286 = scmp.ne.s32.totalorder %s274, %s275
      %p287 = scmp.eq.s32.totalorder %s29, 3
      %p288 = por %p286, %p287
      %p290 = scmp.ne.s32.totalorder %s275, %s289
      %p291 = scmp.eq.s32.totalorder %s29, 0
      %p292 = por %p290, %p291
      %s294 = sadd.s32 %s293, 1
      %p297 = scmp.eq.s32.totalorder %s23, 3
      %p298 = scmp.ne.s32.totalorder %s293, %s295
      %p299 = scmp.eq.s32.totalorder %s23, 0
      %p300 = por %p298, %p299
      %p301 = scmp.ne.s32.totalorder %s293, %s295
      %p302 = scmp.eq.s32.totalorder %s28, 3
      %p303 = por %p301, %p302
      %p304 = scmp.ne.s32.totalorder %s295, %s296
      %p305 = scmp.eq.s32.totalorder %s28, 0
      %p306 = por %p304, %p305
      %p307 = scmp.ne.s32.totalorder %s295, %s296
      %p308 = scmp.eq.s32.totalorder %s29, 3
      %p309 = por %p307, %p308
      %p311 = scmp.ne.s32.totalorder %s296, %s310
      %p312 = scmp.eq.s32.totalorder %s29, 0
      %p313 = por %p311, %p312
      %s315 = sadd.s32 %s314, 1
      %p318 = scmp.eq.s32.totalorder %s23, 3
      %p319 = scmp.ne.s32.totalorder %s314, %s316
      %p320 = scmp.eq.s32.totalorder %s23, 0
      %p321 = por %p319, %p320
      %p322 = scmp.ne.s32.totalorder %s314, %s316
      %p323 = scmp.eq.s32.totalorder %s28, 3
      %p324 = por %p322, %p323
      %p325 = scmp.ne.s32.totalorder %s316, %s317
      %p326 = scmp.eq.s32.totalorder %s28, 0
      %p327 = por %p325, %p326
      %p328 = scmp.ne.s32.totalorder %s316, %s317
      %p329 = scmp.eq.s32.totalorder %s29, 3
      %p330 = por %p328, %p329
      %p332 = scmp.ne.s32.totalorder %s317, %s331
      %p333 = scmp.eq.s32.totalorder %s29, 0
      %p334 = por %p332, %p333
      %s336 = sadd.s32 %s335, 1
      %p339 = scmp.eq.s32.totalorder %s23, 3
      %p340 = scmp.ne.s32.totalorder %s335, %s337
      %p341 = scmp.eq.s32.totalorder %s23, 0
      %p342 = por %p340, %p341
      %p343 = scmp.ne.s32.totalorder %s335, %s337
      %p344 = scmp.eq.s32.totalorder %s28, 3
      %p345 = por %p343, %p344
      %p346 = scmp.ne.s32.totalorder %s337, %s338
      %p347 = scmp.eq.s32.totalorder %s28, 0
      %p348 = por %p346, %p347
      %p349 = scmp.ne.s32.totalorder %s337, %s338
      %p350 = scmp.eq.s32.totalorder %s29, 3
      %p351 = por %p349, %p350
      %p353 = scmp.ne.s32.totalorder %s338, %s352
      %p354 = scmp.eq.s32.totalorder %s29, 0
      %p355 = por %p353, %p354
      %s357 = sadd.s32 %s356, 1
      %p360 = scmp.eq.s32.totalorder %s23, 3
      %p361 = scmp.ne.s32.totalorder %s356, %s358
      %p362 = scmp.eq.s32.totalorder %s23, 0
      %p363 = por %p361, %p362
      %p364 = scmp.ne.s32.totalorder %s356, %s358
      %p365 = scmp.eq.s32.totalorder %s28, 3
      %p366 = por %p364, %p365
      %p367 = scmp.ne.s32.totalorder %s358, %s359
      %p368 = scmp.eq.s32.totalorder %s28, 0
      %p369 = por %p367, %p368
      %p370 = scmp.ne.s32.totalorder %s358, %s359
      %p371 = scmp.eq.s32.totalorder %s29, 3
      %p372 = por %p370, %p371
      %p374 = scmp.ne.s32.totalorder %s359, %s373
      %p375 = scmp.eq.s32.totalorder %s29, 0
      %p376 = por %p374, %p375
      %s378 = sadd.s32 %s377, 1
      %p381 = scmp.eq.s32.totalorder %s23, 3
      %p382 = scmp.ne.s32.totalorder %s377, %s379
      %p383 = scmp.eq.s32.totalorder %s23, 0
      %p384 = por %p382, %p383
      %p385 = scmp.ne.s32.totalorder %s377, %s379
      %p386 = scmp.eq.s32.totalorder %s28, 3
      %p387 = por %p385, %p386
      %p388 = scmp.ne.s32.totalorder %s379, %s380
      %p389 = scmp.eq.s32.totalorder %s28, 0
      %p390 = por %p388, %p389
      %p391 = scmp.ne.s32.totalorder %s379, %s380
      %p392 = scmp.eq.s32.totalorder %s29, 3
      %p393 = por %p391, %p392
      %p395 = scmp.ne.s32.totalorder %s380, %s394
      %p396 = scmp.eq.s32.totalorder %s29, 0
      %p397 = por %p395, %p396
      %p398 = scmp.le.s32.totalorder 1, %s23
      %p399 = scmp.lt.s32.totalorder %s23, 5
      %p400 = pnand %p398, %p399
      %p401 = pneg %p400
      // Predicated region
      $region9: #{merl_pretrain_forward.1} parent=5 // pred_check
        _
      $region10: #{merl_pretrain_forward.1} parent=5 // pred_check_branch
        %403 = sbr.rel (%p400) target = $region12
      $region11: #{merl_pretrain_forward.1} parent=5 // pred_region
        %s404 = ssub.s32 %s23, 1
        // Predicated region
        $region13: #{merl_pretrain_forward.1} parent=11 // pred_check
          %p405 = pneg %p96
        $region14: #{merl_pretrain_forward.1} parent=11 // pred_check_branch
          %407 = sbr.rel (%p405) target = $region16
        $region15: #{merl_pretrain_forward.1} parent=11 // pred_region
          _
        $region16: #{merl_pretrain_forward.1} parent=11 // pred_fallthru
          _
        // Predicated region
        $region17: #{merl_pretrain_forward.1} parent=11 // pred_check
          %p408 = pneg %p117
        $region18: #{merl_pretrain_forward.1} parent=11 // pred_check_branch
          %410 = sbr.rel (%p408) target = $region20
        $region19: #{merl_pretrain_forward.1} parent=11 // pred_region
          _
        $region20: #{merl_pretrain_forward.1} parent=11 // pred_fallthru
          _
        // Predicated region
        $region21: #{merl_pretrain_forward.1} parent=11 // pred_check
          %p411 = pneg %p138
        $region22: #{merl_pretrain_forward.1} parent=11 // pred_check_branch
          %413 = sbr.rel (%p411) target = $region24
        $region23: #{merl_pretrain_forward.1} parent=11 // pred_region
          _
        $region24: #{merl_pretrain_forward.1} parent=11 // pred_fallthru
          _
        // Predicated region
        $region25: #{merl_pretrain_forward.1} parent=11 // pred_check
          %p414 = pneg %p159
        $region26: #{merl_pretrain_forward.1} parent=11 // pred_check_branch
          %416 = sbr.rel (%p414) target = $region28
        $region27: #{merl_pretrain_forward.1} parent=11 // pred_region
          _
        $region28: #{merl_pretrain_forward.1} parent=11 // pred_fallthru
          _
        // Predicated region
        $region29: #{merl_pretrain_forward.1} parent=11 // pred_check
          %p417 = pneg %p180
        $region30: #{merl_pretrain_forward.1} parent=11 // pred_check_branch
          %419 = sbr.rel (%p417) target = $region32
        $region31: #{merl_pretrain_forward.1} parent=11 // pred_region
          _
        $region32: #{merl_pretrain_forward.1} parent=11 // pred_fallthru
          _
        // Predicated region
        $region33: #{merl_pretrain_forward.1} parent=11 // pred_check
          %p420 = pneg %p201
        $region34: #{merl_pretrain_forward.1} parent=11 // pred_check_branch
          %422 = sbr.rel (%p420) target = $region36
        $region35: #{merl_pretrain_forward.1} parent=11 // pred_region
          _
        $region36: #{merl_pretrain_forward.1} parent=11 // pred_fallthru
          _
        // Predicated region
        $region37: #{merl_pretrain_forward.1} parent=11 // pred_check
          %p423 = pneg %p222
        $region38: #{merl_pretrain_forward.1} parent=11 // pred_check_branch
          %425 = sbr.rel (%p423) target = $region40
        $region39: #{merl_pretrain_forward.1} parent=11 // pred_region
          _
        $region40: #{merl_pretrain_forward.1} parent=11 // pred_fallthru
          _
        // Predicated region
        $region41: #{merl_pretrain_forward.1} parent=11 // pred_check
          %p426 = pneg %p243
        $region42: #{merl_pretrain_forward.1} parent=11 // pred_check_branch
          %428 = sbr.rel (%p426) target = $region44
        $region43: #{merl_pretrain_forward.1} parent=11 // pred_region
          _
        $region44: #{merl_pretrain_forward.1} parent=11 // pred_fallthru
          _
        // Predicated region
        $region45: #{merl_pretrain_forward.1} parent=11 // pred_check
          %p429 = pneg %p264
        $region46: #{merl_pretrain_forward.1} parent=11 // pred_check_branch
          %431 = sbr.rel (%p429) target = $region48
        $region47: #{merl_pretrain_forward.1} parent=11 // pred_region
          _
        $region48: #{merl_pretrain_forward.1} parent=11 // pred_fallthru
          _
        // Predicated region
        $region49: #{merl_pretrain_forward.1} parent=11 // pred_check
          %p432 = pneg %p285
        $region50: #{merl_pretrain_forward.1} parent=11 // pred_check_branch
          %434 = sbr.rel (%p432) target = $region52
        $region51: #{merl_pretrain_forward.1} parent=11 // pred_region
          _
        $region52: #{merl_pretrain_forward.1} parent=11 // pred_fallthru
          _
        // Predicated region
        $region53: #{merl_pretrain_forward.1} parent=11 // pred_check
          %p435 = pneg %p306
        $region54: #{merl_pretrain_forward.1} parent=11 // pred_check_branch
          %437 = sbr.rel (%p435) target = $region56
        $region55: #{merl_pretrain_forward.1} parent=11 // pred_region
          _
        $region56: #{merl_pretrain_forward.1} parent=11 // pred_fallthru
          _
        // Predicated region
        $region57: #{merl_pretrain_forward.1} parent=11 // pred_check
          %p438 = pneg %p327
        $region58: #{merl_pretrain_forward.1} parent=11 // pred_check_branch
          %440 = sbr.rel (%p438) target = $region60
        $region59: #{merl_pretrain_forward.1} parent=11 // pred_region
          _
        $region60: #{merl_pretrain_forward.1} parent=11 // pred_fallthru
          _
        // Predicated region
        $region61: #{merl_pretrain_forward.1} parent=11 // pred_check
          %p441 = pneg %p348
        $region62: #{merl_pretrain_forward.1} parent=11 // pred_check_branch
          %443 = sbr.rel (%p441) target = $region64
        $region63: #{merl_pretrain_forward.1} parent=11 // pred_region
          _
        $region64: #{merl_pretrain_forward.1} parent=11 // pred_fallthru
          _
        // Predicated region
        $region65: #{merl_pretrain_forward.1} parent=11 // pred_check
          %p444 = pneg %p369
        $region66: #{merl_pretrain_forward.1} parent=11 // pred_check_branch
          %446 = sbr.rel (%p444) target = $region68
        $region67: #{merl_pretrain_forward.1} parent=11 // pred_region
          _
        $region68: #{merl_pretrain_forward.1} parent=11 // pred_fallthru
          _
      $region12: #{merl_pretrain_forward.1} parent=5 // pred_fallthru
        _
      %p447 = scmp.lt.s32.totalorder %s23, 4
      // Predicated region
      $region69: #{merl_pretrain_forward.1} parent=5 // pred_check
        %p448 = pneg %p447
      $region70: #{merl_pretrain_forward.1} parent=5 // pred_check_branch
        %450 = sbr.rel (%p448) target = $region72
      $region71: #{merl_pretrain_forward.1} parent=5 // pred_region
        // Predicated region
        $region73: #{merl_pretrain_forward.1} parent=71 // pred_check
          %p451 = pneg %p43
        $region74: #{merl_pretrain_forward.1} parent=71 // pred_check_branch
          %453 = sbr.rel (%p451) target = $region76
        $region75: #{merl_pretrain_forward.1} parent=71 // pred_region
          %s454 = sand.u32 %s33, 1
          %s455 = sand.u32 %s33, 1
          %s456 = smul.addr %s455, 128
          %s457 = scalar_lea.vmem [#allocation3], %s456
          %s458 = smul.u32 4, %s23
          %s459 = smul.addr %s458, 4
          %s460 = scalar_lea.vmem %s0, %s459
          // Predicated region
          $region77: #{merl_pretrain_forward.1} parent=75 // pred_check
            _
          $region78: #{merl_pretrain_forward.1} parent=75 // pred_check_branch
            %462 = sbr.rel (0) target = $region80
          $region79: #{merl_pretrain_forward.1} parent=75 // pred_region
            // Predicated region
            $region81: #{merl_pretrain_forward.1} parent=79 // pred_check
              _
            $region82: #{merl_pretrain_forward.1} parent=79 // pred_check_branch
              %464 = sbr.rel (0) target = $region84
            $region83: #{merl_pretrain_forward.1} parent=79 // pred_region
              loop: start=0, step=1, limit=1
              $region85: #{merl_pretrain_forward.1} parent=83 // loop_pre_header
                _
              $region86: #{merl_pretrain_forward.1} parent=83 // loop_header
                %s466 = sphi 0, %s470
                %p467 = scmp.ge.s32.totalorder %s466, 1
                %s471 = sphi %s460, %s460
                %s472 = sphi %s457, %s457
              $region87: #{merl_pretrain_forward.1} parent=83 // loop_header_branch
                %469 = sbr.rel (%p467) target = $region91
              $region88: #{merl_pretrain_forward.1} parent=83 // loop_body
                %v473 = vld [vmem:[%s471] sm:$0xff]
                %474 = vst [vmem:[%s472] sm:$0xff] %v473
                %v475 = vld [vmem:[%s471 + $0x8] sm:$0xff]
                %476 = vst [vmem:[%s472 + $0x8] sm:$0xff] %v475
                %v477 = vld [vmem:[%s471 + $0x40] sm:$0xff]
                %478 = vst [vmem:[%s472 + $0x10] sm:$0xff] %v477
                %v479 = vld [vmem:[%s471 + $0x48] sm:$0xff]
                %480 = vst [vmem:[%s472 + $0x18] sm:$0xff] %v479
                %v481 = vld [vmem:[%s471 + $0x80] sm:$0xff]
                %482 = vst [vmem:[%s472 + $0x20] sm:$0xff] %v481
                %v483 = vld [vmem:[%s471 + $0x88] sm:$0xff]
                %484 = vst [vmem:[%s472 + $0x28] sm:$0xff] %v483
                %v485 = vld [vmem:[%s471 + $0xc0] sm:$0xff]
                %486 = vst [vmem:[%s472 + $0x30] sm:$0xff] %v485
                %v487 = vld [vmem:[%s471 + $0xc8] sm:$0xff]
                %488 = vst [vmem:[%s472 + $0x38] sm:$0xff] %v487
                %v489 = vld [vmem:[%s471 + $0x100] sm:$0xff]
                %490 = vst [vmem:[%s472 + $0x40] sm:$0xff] %v489
                %v491 = vld [vmem:[%s471 + $0x108] sm:$0xff]
                %492 = vst [vmem:[%s472 + $0x48] sm:$0xff] %v491
                %v493 = vld [vmem:[%s471 + $0x140] sm:$0xff]
                %494 = vst [vmem:[%s472 + $0x50] sm:$0xff] %v493
                %v495 = vld [vmem:[%s471 + $0x148] sm:$0xff]
                %496 = vst [vmem:[%s472 + $0x58] sm:$0xff] %v495
                %v497 = vld [vmem:[%s471 + $0x180] sm:$0xff]
                %498 = vst [vmem:[%s472 + $0x60] sm:$0xff] %v497
                %v499 = vld [vmem:[%s471 + $0x188] sm:$0xff]
                %500 = vst [vmem:[%s472 + $0x68] sm:$0xff] %v499
                %v501 = vld [vmem:[%s471 + $0x1c0] sm:$0xff]
                %502 = vst [vmem:[%s472 + $0x70] sm:$0xff] %v501
                %v503 = vld [vmem:[%s471 + $0x1c8] sm:$0xff]
                %504 = vst [vmem:[%s472 + $0x78] sm:$0xff] %v503
              $region89: #{merl_pretrain_forward.1} parent=83 // loop_footer
                %s470 = sadd.s32 1, %s466
              $region90: #{merl_pretrain_forward.1} parent=83 // loop_footer_branch
                %465 = sbr.rel target = $region86
              $region91: #{merl_pretrain_forward.1} parent=83 // loop_exit
                _
            $region84: #{merl_pretrain_forward.1} parent=79 // pred_fallthru
              _
            // Predicated region
            $region92: #{merl_pretrain_forward.1} parent=79 // pred_check
              _
            $region93: #{merl_pretrain_forward.1} parent=79 // pred_check_branch
              %506 = sbr.rel target = $region95
            $region94: #{merl_pretrain_forward.1} parent=79 // pred_region
              _
            $region95: #{merl_pretrain_forward.1} parent=79 // pred_fallthru
              _
          $region80: #{merl_pretrain_forward.1} parent=75 // pred_fallthru
            _
          %507 = vnop
        $region76: #{merl_pretrain_forward.1} parent=71 // pred_fallthru
          _
        // Predicated region
        $region96: #{merl_pretrain_forward.1} parent=71 // pred_check
          %p508 = pneg %p69
        $region97: #{merl_pretrain_forward.1} parent=71 // pred_check_branch
          %510 = sbr.rel (%p508) target = $region99
        $region98: #{merl_pretrain_forward.1} parent=71 // pred_region
          %s511 = smul.u32 64, %s23
          %p512 = scmp.lt.s32.totalorder %s511, 255
          %s513 = scalar_select %p512, %s511, 255
          %s514 = smul.addr %s513, 2
          %s515 = smul.addr %s514, 4
          %s516 = scalar_lea.vmem %s1, %s515
          %s517 = smul.u32 64, %s23
        $region99: #{merl_pretrain_forward.1} parent=71 // pred_fallthru
          _
      $region72: #{merl_pretrain_forward.1} parent=5 // pred_fallthru
        _
      %p518 = scmp.le.s32.totalorder 1, %s23
      %p519 = scmp.lt.s32.totalorder %s23, 5
      %p520 = pnand %p518, %p519
      %p521 = pneg %p520
      // Predicated region
      $region100: #{merl_pretrain_forward.1} parent=5 // pred_check
        _
      $region101: #{merl_pretrain_forward.1} parent=5 // pred_check_branch
        %523 = sbr.rel (%p520) target = $region103
      $region102: #{merl_pretrain_forward.1} parent=5 // pred_region
        %s524 = ssub.s32 %s23, 1
        %s525 = sand.u32 %s36, 1
        %s526 = sand.u32 %s36, 1
        %s527 = smul.addr %s526, 128
        %s528 = scalar_lea.vmem [#allocation3], %s527
        // Predicated region
        $region104: #{merl_pretrain_forward.1} parent=102 // pred_check
          %p529 = pneg %p49
        $region105: #{merl_pretrain_forward.1} parent=102 // pred_check_branch
          %531 = sbr.rel (%p529) target = $region107
        $region106: #{merl_pretrain_forward.1} parent=102 // pred_region
          _
        $region107: #{merl_pretrain_forward.1} parent=102 // pred_fallthru
          _
        %s532 = sand.u32 %s36, 1
        %s533 = sand.u32 %s36, 1
        %s534 = smul.addr %s533, 128
        %s535 = scalar_lea.vmem [#allocation3], %s534
        %p536 = pneg %p49
        %p537 = pneg %p46
        %s538 = smul.u32 64, %s28
        %p539 = scmp.lt.s32.totalorder %s538, 255
        %s540 = scalar_select %p539, %s538, 255
        %s541 = smul.addr %s540, 2
        %s542 = smul.addr %s541, 4
        %s543 = scalar_lea.vmem %s1, %s542
        %p544 = pneg %p75
        %p545 = pneg %p72
        %p546 = pneg %p96
        %p547 = pneg %p93
        %p548 = pneg %p117
        %p549 = pneg %p114
        %p550 = pneg %p138
        %p551 = pneg %p135
        %p552 = pneg %p159
        %p553 = pneg %p156
        %p554 = pneg %p180
        %p555 = pneg %p177
        %p556 = pneg %p201
        %p557 = pneg %p198
        %p558 = pneg %p222
        %p559 = pneg %p219
        %p560 = pneg %p243
        %p561 = pneg %p240
        %p562 = pneg %p264
        %p563 = pneg %p261
        %p564 = pneg %p285
        %p565 = pneg %p282
        %p566 = pneg %p306
        %p567 = pneg %p303
        %p568 = pneg %p327
        %p569 = pneg %p324
        %p570 = pneg %p348
        %p571 = pneg %p345
        %p572 = pneg %p369
        %p573 = pneg %p366
        %p574 = pneg %p390
        %p575 = pneg %p387
        %s576 = smul.u32 4, %s28
        %s577 = smul.u32 64, %s28
        %p578 = scmp.lt.s32.totalorder %s577, 255
        %s579 = scalar_select %p578, %s577, 255
        %s580 = smul.addr %s579, 2
        %s581 = smul.addr %s580, 4
        %s582 = scalar_lea.vmem %s1, %s581
        %s583 = smul.u32 64, %s28
        %p584 = scmp.eq.s32.totalorder %s28, 0
        // Predicated region
        $region108: #{merl_pretrain_forward.1} parent=102 // pred_check
          %p585 = pneg %p584
        $region109: #{merl_pretrain_forward.1} parent=102 // pred_check_branch
          %587 = sbr.rel (%p585) target = $region111
        $region110: #{merl_pretrain_forward.1} parent=102 // pred_region
          %588 = vst [vmem:[#allocation2] sm:$0xff] 0.0
          %589 = vst [vmem:[#allocation2 + $0x8] sm:$0xff] 0.0
          %590 = vst [vmem:[#allocation2 + $0x10] sm:$0xff] 0.0
          %591 = vst [vmem:[#allocation2 + $0x18] sm:$0xff] 0.0
          %592 = vst [vmem:[#allocation2 + $0x20] sm:$0xff] 0.0
          %593 = vst [vmem:[#allocation2 + $0x28] sm:$0xff] 0.0
          %594 = vst [vmem:[#allocation2 + $0x30] sm:$0xff] 0.0
          %595 = vst [vmem:[#allocation2 + $0x38] sm:$0xff] 0.0
          %596 = vst [vmem:[#allocation2 + $0x40] sm:$0xff] 0.0
          %597 = vst [vmem:[#allocation2 + $0x48] sm:$0xff] 0.0
          %598 = vst [vmem:[#allocation2 + $0x50] sm:$0xff] 0.0
          %599 = vst [vmem:[#allocation2 + $0x58] sm:$0xff] 0.0
          %600 = vst [vmem:[#allocation2 + $0x60] sm:$0xff] 0.0
          %601 = vst [vmem:[#allocation2 + $0x68] sm:$0xff] 0.0
          %602 = vst [vmem:[#allocation2 + $0x70] sm:$0xff] 0.0
          %603 = vst [vmem:[#allocation2 + $0x78] sm:$0xff] 0.0
        $region111: #{merl_pretrain_forward.1} parent=102 // pred_fallthru
          _
        %v604 = vld [vmem:[#allocation2] sm:$0xff]
        %v605 = vld [vmem:[#allocation2 + $0x8] sm:$0xff]
        %v606 = vld [vmem:[#allocation2 + $0x10] sm:$0xff]
        %v607 = vld [vmem:[#allocation2 + $0x18] sm:$0xff]
        %v608 = vld [vmem:[#allocation2 + $0x20] sm:$0xff]
        %v609 = vld [vmem:[#allocation2 + $0x28] sm:$0xff]
        %v610 = vld [vmem:[#allocation2 + $0x30] sm:$0xff]
        %v611 = vld [vmem:[#allocation2 + $0x38] sm:$0xff]
        %v612 = vld [vmem:[#allocation2 + $0x40] sm:$0xff]
        %v613 = vld [vmem:[#allocation2 + $0x48] sm:$0xff]
        %v614 = vld [vmem:[#allocation2 + $0x50] sm:$0xff]
        %v615 = vld [vmem:[#allocation2 + $0x58] sm:$0xff]
        %v616 = vld [vmem:[#allocation2 + $0x60] sm:$0xff]
        %v617 = vld [vmem:[#allocation2 + $0x68] sm:$0xff]
        %v618 = vld [vmem:[#allocation2 + $0x70] sm:$0xff]
        %v619 = vld [vmem:[#allocation2 + $0x78] sm:$0xff]
        %v620 = vld [vmem:[%s528] sm:$0xff]
        %v621 = vld [vmem:[%s528 + $0x8] sm:$0xff]
        %v622 = vld [vmem:[%s528 + $0x10] sm:$0xff]
        %v623 = vld [vmem:[%s528 + $0x18] sm:$0xff]
        %v624 = vld [vmem:[%s528 + $0x20] sm:$0xff]
        %v625 = vld [vmem:[%s528 + $0x28] sm:$0xff]
        %v626 = vld [vmem:[%s528 + $0x30] sm:$0xff]
        %v627 = vld [vmem:[%s528 + $0x38] sm:$0xff]
        %v628 = vld [vmem:[%s528 + $0x40] sm:$0xff]
        %v629 = vld [vmem:[%s528 + $0x48] sm:$0xff]
        %v630 = vld [vmem:[%s528 + $0x50] sm:$0xff]
        %v631 = vld [vmem:[%s528 + $0x58] sm:$0xff]
        %v632 = vld [vmem:[%s528 + $0x60] sm:$0xff]
        %v633 = vld [vmem:[%s528 + $0x68] sm:$0xff]
        %v634 = vld [vmem:[%s528 + $0x70] sm:$0xff]
        %v635 = vld [vmem:[%s528 + $0x78] sm:$0xff]
        %v636 = vld [vmem:[%s582] sm:$0xff]
        %v637 = vld [vmem:[%s582 + $0x8] sm:$0xff]
        %v638 = vld [vmem:[%s582 + $0x10] sm:$0xff]
        %v639 = vld [vmem:[%s582 + $0x18] sm:$0xff]
        %v640 = vld [vmem:[%s582 + $0x20] sm:$0xff]
        %v641 = vld [vmem:[%s582 + $0x28] sm:$0xff]
        %v642 = vld [vmem:[%s582 + $0x30] sm:$0xff]
        %v643 = vld [vmem:[%s582 + $0x38] sm:$0xff]
        %v644 = vld [vmem:[%s582 + $0x40] sm:$0xff]
        %v645 = vld [vmem:[%s582 + $0x48] sm:$0xff]
        %v646 = vld [vmem:[%s582 + $0x50] sm:$0xff]
        %v647 = vld [vmem:[%s582 + $0x58] sm:$0xff]
        %v648 = vld [vmem:[%s582 + $0x60] sm:$0xff]
        %v649 = vld [vmem:[%s582 + $0x68] sm:$0xff]
        %v650 = vld [vmem:[%s582 + $0x70] sm:$0xff]
        %v651 = vld [vmem:[%s582 + $0x78] sm:$0xff]
        %v652 = vld [vmem:[%s582 + $0x80] sm:$0xff]
        %v653 = vld [vmem:[%s582 + $0x88] sm:$0xff]
        %v654 = vld [vmem:[%s582 + $0x90] sm:$0xff]
        %v655 = vld [vmem:[%s582 + $0x98] sm:$0xff]
        %v656 = vld [vmem:[%s582 + $0xa0] sm:$0xff]
        %v657 = vld [vmem:[%s582 + $0xa8] sm:$0xff]
        %v658 = vld [vmem:[%s582 + $0xb0] sm:$0xff]
        %v659 = vld [vmem:[%s582 + $0xb8] sm:$0xff]
        %v660 = vld [vmem:[%s582 + $0xc0] sm:$0xff]
        %v661 = vld [vmem:[%s582 + $0xc8] sm:$0xff]
        %v662 = vld [vmem:[%s582 + $0xd0] sm:$0xff]
        %v663 = vld [vmem:[%s582 + $0xd8] sm:$0xff]
        %v664 = vld [vmem:[%s582 + $0xe0] sm:$0xff]
        %v665 = vld [vmem:[%s582 + $0xe8] sm:$0xff]
        %v666 = vld [vmem:[%s582 + $0xf0] sm:$0xff]
        %v667 = vld [vmem:[%s582 + $0xf8] sm:$0xff]
        %v668 = vld [vmem:[%s582 + $0x100] sm:$0xff]
        %v669 = vld [vmem:[%s582 + $0x108] sm:$0xff]
        %v670 = vld [vmem:[%s582 + $0x110] sm:$0xff]
        %v671 = vld [vmem:[%s582 + $0x118] sm:$0xff]
        %v672 = vld [vmem:[%s582 + $0x120] sm:$0xff]
        %v673 = vld [vmem:[%s582 + $0x128] sm:$0xff]
        %v674 = vld [vmem:[%s582 + $0x130] sm:$0xff]
        %v675 = vld [vmem:[%s582 + $0x138] sm:$0xff]
        %v676 = vld [vmem:[%s582 + $0x140] sm:$0xff]
        %v677 = vld [vmem:[%s582 + $0x148] sm:$0xff]
        %v678 = vld [vmem:[%s582 + $0x150] sm:$0xff]
        %v679 = vld [vmem:[%s582 + $0x158] sm:$0xff]
        %v680 = vld [vmem:[%s582 + $0x160] sm:$0xff]
        %v681 = vld [vmem:[%s582 + $0x168] sm:$0xff]
        %v682 = vld [vmem:[%s582 + $0x170] sm:$0xff]
        %v683 = vld [vmem:[%s582 + $0x178] sm:$0xff]
        %v684 = vld [vmem:[%s582 + $0x180] sm:$0xff]
        %v685 = vld [vmem:[%s582 + $0x188] sm:$0xff]
        %v686 = vld [vmem:[%s582 + $0x190] sm:$0xff]
        %v687 = vld [vmem:[%s582 + $0x198] sm:$0xff]
        %v688 = vld [vmem:[%s582 + $0x1a0] sm:$0xff]
        %v689 = vld [vmem:[%s582 + $0x1a8] sm:$0xff]
        %v690 = vld [vmem:[%s582 + $0x1b0] sm:$0xff]
        %v691 = vld [vmem:[%s582 + $0x1b8] sm:$0xff]
        %v692 = vld [vmem:[%s582 + $0x1c0] sm:$0xff]
        %v693 = vld [vmem:[%s582 + $0x1c8] sm:$0xff]
        %v694 = vld [vmem:[%s582 + $0x1d0] sm:$0xff]
        %v695 = vld [vmem:[%s582 + $0x1d8] sm:$0xff]
        %v696 = vld [vmem:[%s582 + $0x1e0] sm:$0xff]
        %v697 = vld [vmem:[%s582 + $0x1e8] sm:$0xff]
        %v698 = vld [vmem:[%s582 + $0x1f0] sm:$0xff]
        %v699 = vld [vmem:[%s582 + $0x1f8] sm:$0xff]
        %v716 = vunpack.c.l.b16 %v620
        %v717 = vunpack.c.h.b16 %v620
        %v718 = vunpack.c.l.b16 %v621
        %v719 = vunpack.c.h.b16 %v621
        %v720 = vunpack.c.l.b16 %v622
        %v721 = vunpack.c.h.b16 %v622
        %v722 = vunpack.c.l.b16 %v623
        %v723 = vunpack.c.h.b16 %v623
        %v724 = vunpack.c.l.b16 %v624
        %v725 = vunpack.c.h.b16 %v624
        %v726 = vunpack.c.l.b16 %v625
        %v727 = vunpack.c.h.b16 %v625
        %v728 = vunpack.c.l.b16 %v626
        %v729 = vunpack.c.h.b16 %v626
        %v730 = vunpack.c.l.b16 %v627
        %v731 = vunpack.c.h.b16 %v627
        %v732 = vunpack.c.l.b16 %v628
        %v733 = vunpack.c.h.b16 %v628
        %v734 = vunpack.c.l.b16 %v629
        %v735 = vunpack.c.h.b16 %v629
        %v736 = vunpack.c.l.b16 %v630
        %v737 = vunpack.c.h.b16 %v630
        %v738 = vunpack.c.l.b16 %v631
        %v739 = vunpack.c.h.b16 %v631
        %v740 = vunpack.c.l.b16 %v632
        %v741 = vunpack.c.h.b16 %v632
        %v742 = vunpack.c.l.b16 %v633
        %v743 = vunpack.c.h.b16 %v633
        %v744 = vunpack.c.l.b16 %v634
        %v745 = vunpack.c.h.b16 %v634
        %v746 = vunpack.c.l.b16 %v635
        %v747 = vunpack.c.h.b16 %v635
        %v748 = vpack.c.b16 %v720, %v716
        %v749 = vpack.c.b16 %v721, %v717
        %v750 = vpack.c.b16 %v722, %v718
        %v751 = vpack.c.b16 %v723, %v719
        %v752 = vpack.c.b16 %v728, %v724
        %v753 = vpack.c.b16 %v729, %v725
        %v754 = vpack.c.b16 %v730, %v726
        %v755 = vpack.c.b16 %v731, %v727
        %v756 = vpack.c.b16 %v736, %v732
        %v757 = vpack.c.b16 %v737, %v733
        %v758 = vpack.c.b16 %v738, %v734
        %v759 = vpack.c.b16 %v739, %v735
        %v760 = vpack.c.b16 %v744, %v740
        %v761 = vpack.c.b16 %v745, %v741
        %v762 = vpack.c.b16 %v746, %v742
        %v763 = vpack.c.b16 %v747, %v743
        %v844 = vunpack.c.l.b16 %v636
        %v845 = vunpack.c.h.b16 %v636
        %v846 = vunpack.c.l.b16 %v637
        %v847 = vunpack.c.h.b16 %v637
        %v848 = vunpack.c.l.b16 %v638
        %v849 = vunpack.c.h.b16 %v638
        %v850 = vunpack.c.l.b16 %v639
        %v851 = vunpack.c.h.b16 %v639
        %v852 = vunpack.c.l.b16 %v640
        %v853 = vunpack.c.h.b16 %v640
        %v854 = vunpack.c.l.b16 %v641
        %v855 = vunpack.c.h.b16 %v641
        %v856 = vunpack.c.l.b16 %v642
        %v857 = vunpack.c.h.b16 %v642
        %v858 = vunpack.c.l.b16 %v643
        %v859 = vunpack.c.h.b16 %v643
        %v860 = vunpack.c.l.b16 %v644
        %v861 = vunpack.c.h.b16 %v644
        %v862 = vunpack.c.l.b16 %v645
        %v863 = vunpack.c.h.b16 %v645
        %v864 = vunpack.c.l.b16 %v646
        %v865 = vunpack.c.h.b16 %v646
        %v866 = vunpack.c.l.b16 %v647
        %v867 = vunpack.c.h.b16 %v647
        %v868 = vunpack.c.l.b16 %v648
        %v869 = vunpack.c.h.b16 %v648
        %v870 = vunpack.c.l.b16 %v649
        %v871 = vunpack.c.h.b16 %v649
        %v872 = vunpack.c.l.b16 %v650
        %v873 = vunpack.c.h.b16 %v650
        %v874 = vunpack.c.l.b16 %v651
        %v875 = vunpack.c.h.b16 %v651
        %v876 = vunpack.c.l.b16 %v652
        %v877 = vunpack.c.h.b16 %v652
        %v878 = vunpack.c.l.b16 %v653
        %v879 = vunpack.c.h.b16 %v653
        %v880 = vunpack.c.l.b16 %v654
        %v881 = vunpack.c.h.b16 %v654
        %v882 = vunpack.c.l.b16 %v655
        %v883 = vunpack.c.h.b16 %v655
        %v884 = vunpack.c.l.b16 %v656
        %v885 = vunpack.c.h.b16 %v656
        %v886 = vunpack.c.l.b16 %v657
        %v887 = vunpack.c.h.b16 %v657
        %v888 = vunpack.c.l.b16 %v658
        %v889 = vunpack.c.h.b16 %v658
        %v890 = vunpack.c.l.b16 %v659
        %v891 = vunpack.c.h.b16 %v659
        %v892 = vunpack.c.l.b16 %v660
        %v893 = vunpack.c.h.b16 %v660
        %v894 = vunpack.c.l.b16 %v661
        %v895 = vunpack.c.h.b16 %v661
        %v896 = vunpack.c.l.b16 %v662
        %v897 = vunpack.c.h.b16 %v662
        %v898 = vunpack.c.l.b16 %v663
        %v899 = vunpack.c.h.b16 %v663
        %v900 = vunpack.c.l.b16 %v664
        %v901 = vunpack.c.h.b16 %v664
        %v902 = vunpack.c.l.b16 %v665
        %v903 = vunpack.c.h.b16 %v665
        %v904 = vunpack.c.l.b16 %v666
        %v905 = vunpack.c.h.b16 %v666
        %v906 = vunpack.c.l.b16 %v667
        %v907 = vunpack.c.h.b16 %v667
        %v908 = vunpack.c.l.b16 %v668
        %v909 = vunpack.c.h.b16 %v668
        %v910 = vunpack.c.l.b16 %v669
        %v911 = vunpack.c.h.b16 %v669
        %v912 = vunpack.c.l.b16 %v670
        %v913 = vunpack.c.h.b16 %v670
        %v914 = vunpack.c.l.b16 %v671
        %v915 = vunpack.c.h.b16 %v671
        %v916 = vunpack.c.l.b16 %v672
        %v917 = vunpack.c.h.b16 %v672
        %v918 = vunpack.c.l.b16 %v673
        %v919 = vunpack.c.h.b16 %v673
        %v920 = vunpack.c.l.b16 %v674
        %v921 = vunpack.c.h.b16 %v674
        %v922 = vunpack.c.l.b16 %v675
        %v923 = vunpack.c.h.b16 %v675
        %v924 = vunpack.c.l.b16 %v676
        %v925 = vunpack.c.h.b16 %v676
        %v926 = vunpack.c.l.b16 %v677
        %v927 = vunpack.c.h.b16 %v677
        %v928 = vunpack.c.l.b16 %v678
        %v929 = vunpack.c.h.b16 %v678
        %v930 = vunpack.c.l.b16 %v679
        %v931 = vunpack.c.h.b16 %v679
        %v932 = vunpack.c.l.b16 %v680
        %v933 = vunpack.c.h.b16 %v680
        %v934 = vunpack.c.l.b16 %v681
        %v935 = vunpack.c.h.b16 %v681
        %v936 = vunpack.c.l.b16 %v682
        %v937 = vunpack.c.h.b16 %v682
        %v938 = vunpack.c.l.b16 %v683
        %v939 = vunpack.c.h.b16 %v683
        %v940 = vunpack.c.l.b16 %v684
        %v941 = vunpack.c.h.b16 %v684
        %v942 = vunpack.c.l.b16 %v685
        %v943 = vunpack.c.h.b16 %v685
        %v944 = vunpack.c.l.b16 %v686
        %v945 = vunpack.c.h.b16 %v686
        %v946 = vunpack.c.l.b16 %v687
        %v947 = vunpack.c.h.b16 %v687
        %v948 = vunpack.c.l.b16 %v688
        %v949 = vunpack.c.h.b16 %v688
        %v950 = vunpack.c.l.b16 %v689
        %v951 = vunpack.c.h.b16 %v689
        %v952 = vunpack.c.l.b16 %v690
        %v953 = vunpack.c.h.b16 %v690
        %v954 = vunpack.c.l.b16 %v691
        %v955 = vunpack.c.h.b16 %v691
        %v956 = vunpack.c.l.b16 %v692
        %v957 = vunpack.c.h.b16 %v692
        %v958 = vunpack.c.l.b16 %v693
        %v959 = vunpack.c.h.b16 %v693
        %v960 = vunpack.c.l.b16 %v694
        %v961 = vunpack.c.h.b16 %v694
        %v962 = vunpack.c.l.b16 %v695
        %v963 = vunpack.c.h.b16 %v695
        %v964 = vunpack.c.l.b16 %v696
        %v965 = vunpack.c.h.b16 %v696
        %v966 = vunpack.c.l.b16 %v697
        %v967 = vunpack.c.h.b16 %v697
        %v968 = vunpack.c.l.b16 %v698
        %v969 = vunpack.c.h.b16 %v698
        %v970 = vunpack.c.l.b16 %v699
        %v971 = vunpack.c.h.b16 %v699
        %v972 = vpack.c.b16 %v846, %v844
        %v973 = vpack.c.b16 %v847, %v845
        %v974 = vpack.c.b16 %v850, %v848
        %v975 = vpack.c.b16 %v851, %v849
        %v976 = vpack.c.b16 %v854, %v852
        %v977 = vpack.c.b16 %v855, %v853
        %v978 = vpack.c.b16 %v858, %v856
        %v979 = vpack.c.b16 %v859, %v857
        %v980 = vpack.c.b16 %v862, %v860
        %v981 = vpack.c.b16 %v863, %v861
        %v982 = vpack.c.b16 %v866, %v864
        %v983 = vpack.c.b16 %v867, %v865
        %v984 = vpack.c.b16 %v870, %v868
        %v985 = vpack.c.b16 %v871, %v869
        %v986 = vpack.c.b16 %v874, %v872
        %v987 = vpack.c.b16 %v875, %v873
        %v988 = vpack.c.b16 %v878, %v876
        %v989 = vpack.c.b16 %v879, %v877
        %v990 = vpack.c.b16 %v882, %v880
        %v991 = vpack.c.b16 %v883, %v881
        %v992 = vpack.c.b16 %v886, %v884
        %v993 = vpack.c.b16 %v887, %v885
        %v994 = vpack.c.b16 %v890, %v888
        %v995 = vpack.c.b16 %v891, %v889
        %v996 = vpack.c.b16 %v894, %v892
        %v997 = vpack.c.b16 %v895, %v893
        %v998 = vpack.c.b16 %v898, %v896
        %v999 = vpack.c.b16 %v899, %v897
        %v1000 = vpack.c.b16 %v902, %v900
        %v1001 = vpack.c.b16 %v903, %v901
        %v1002 = vpack.c.b16 %v906, %v904
        %v1003 = vpack.c.b16 %v907, %v905
        %v1004 = vpack.c.b16 %v910, %v908
        %v1005 = vpack.c.b16 %v911, %v909
        %v1006 = vpack.c.b16 %v914, %v912
        %v1007 = vpack.c.b16 %v915, %v913
        %v1008 = vpack.c.b16 %v918, %v916
        %v1009 = vpack.c.b16 %v919, %v917
        %v1010 = vpack.c.b16 %v922, %v920
        %v1011 = vpack.c.b16 %v923, %v921
        %v1012 = vpack.c.b16 %v926, %v924
        %v1013 = vpack.c.b16 %v927, %v925
        %v1014 = vpack.c.b16 %v930, %v928
        %v1015 = vpack.c.b16 %v931, %v929
        %v1016 = vpack.c.b16 %v934, %v932
        %v1017 = vpack.c.b16 %v935, %v933
        %v1018 = vpack.c.b16 %v938, %v936
        %v1019 = vpack.c.b16 %v939, %v937
        %v1020 = vpack.c.b16 %v942, %v940
        %v1021 = vpack.c.b16 %v943, %v941
        %v1022 = vpack.c.b16 %v946, %v944
        %v1023 = vpack.c.b16 %v947, %v945
        %v1024 = vpack.c.b16 %v950, %v948
        %v1025 = vpack.c.b16 %v951, %v949
        %v1026 = vpack.c.b16 %v954, %v952
        %v1027 = vpack.c.b16 %v955, %v953
        %v1028 = vpack.c.b16 %v958, %v956
        %v1029 = vpack.c.b16 %v959, %v957
        %v1030 = vpack.c.b16 %v962, %v960
        %v1031 = vpack.c.b16 %v963, %v961
        %v1032 = vpack.c.b16 %v966, %v964
        %v1033 = vpack.c.b16 %v967, %v965
        %v1034 = vpack.c.b16 %v970, %v968
        %v1035 = vpack.c.b16 %v971, %v969
        %1100 = vmatprep.subr.bf16.mxu0 %v973
        %1101 = vmatpush1.bf16.msra.mxu0 %v972
        %1102 = vmatprep.subr.bf16.mxu0 %v975
        %1103 = vmatpush1.bf16.msra.mxu0 %v974
        %1104 = vmatprep.subr.bf16.mxu0 %v977
        %1105 = vmatpush1.bf16.msra.mxu0 %v976
        %1106 = vmatprep.subr.bf16.mxu0 %v979
        %1107 = vmatpush1.bf16.msra.mxu0 %v978
        %1108 = vmatprep.subr.bf16.mxu0 %v981
        %1109 = vmatpush1.bf16.msra.mxu0 %v980
        %1110 = vmatprep.subr.bf16.mxu0 %v983
        %1111 = vmatpush1.bf16.msra.mxu0 %v982
        %1112 = vmatprep.subr.bf16.mxu0 %v985
        %1113 = vmatpush1.bf16.msra.mxu0 %v984
        %1114 = vmatprep.subr.bf16.mxu0 %v987
        %1115 = vmatpush1.bf16.msra.mxu0 %v986
        %1116 = vmatprep.subr.bf16.mxu0 %v989
        %1117 = vmatpush1.bf16.msra.mxu0 %v988
        %1118 = vmatprep.subr.bf16.mxu0 %v991
        %1119 = vmatpush1.bf16.msra.mxu0 %v990
        %1120 = vmatprep.subr.bf16.mxu0 %v993
        %1121 = vmatpush1.bf16.msra.mxu0 %v992
        %1122 = vmatprep.subr.bf16.mxu0 %v995
        %1123 = vmatpush1.bf16.msra.mxu0 %v994
        %1124 = vmatprep.subr.bf16.mxu0 %v997
        %1125 = vmatpush1.bf16.msra.mxu0 %v996
        %1126 = vmatprep.subr.bf16.mxu0 %v999
        %1127 = vmatpush1.bf16.msra.mxu0 %v998
        %1128 = vmatprep.subr.bf16.mxu0 %v1001
        %1129 = vmatpush1.bf16.msra.mxu0 %v1000
        %1130 = vmatprep.subr.bf16.mxu0 %v1003
        %1131 = vmatpush1.bf16.msra.mxu0 %v1002
        %1132 = vmatprep.mubr.bf16.mxu0 %v749
        %1133 = vmatmul.mubr.bf16.gmra.mrb[0].mxu0 %v748
        %v1134 = vpop.f32.mrb[0].mxu0
        %v1135 = vadd.f32 0.0, %v1134
        %v1136 = vpop.f32.mrb[0].mxu0
        %v1137 = vadd.f32 0.0, %v1136
        %v1138 = vpop.f32.mrb[0].mxu0
        %v1139 = vadd.f32 0.0, %v1138
        %v1140 = vpop.f32.mrb[0].mxu0
        %v1141 = vadd.f32 0.0, %v1140
        %1142 = vmatprep.mubr.bf16.mxu0 %v753
        %1143 = vmatmul.mubr.bf16.gmra.mrb[0].mxu0 %v752
        %v1144 = vpop.f32.mrb[0].mxu0
        %v1145 = vadd.f32 0.0, %v1144
        %v1146 = vpop.f32.mrb[0].mxu0
        %v1147 = vadd.f32 0.0, %v1146
        %v1148 = vpop.f32.mrb[0].mxu0
        %v1149 = vadd.f32 0.0, %v1148
        %v1150 = vpop.f32.mrb[0].mxu0
        %v1151 = vadd.f32 0.0, %v1150
        %1152 = vmatprep.mubr.bf16.mxu0 %v757
        %1153 = vmatmul.mubr.bf16.gmra.mrb[0].mxu0 %v756
        %v1154 = vpop.f32.mrb[0].mxu0
        %v1155 = vadd.f32 0.0, %v1154
        %v1156 = vpop.f32.mrb[0].mxu0
        %v1157 = vadd.f32 0.0, %v1156
        %v1158 = vpop.f32.mrb[0].mxu0
        %v1159 = vadd.f32 0.0, %v1158
        %v1160 = vpop.f32.mrb[0].mxu0
        %v1161 = vadd.f32 0.0, %v1160
        %1162 = vmatprep.mubr.bf16.mxu0 %v761
        %1163 = vmatmul.mubr.bf16.gmra.mrb[0].mxu0 %v760
        %v1164 = vpop.f32.mrb[0].mxu0
        %v1165 = vadd.f32 0.0, %v1164
        %v1166 = vpop.f32.mrb[0].mxu0
        %v1167 = vadd.f32 0.0, %v1166
        %v1168 = vpop.f32.mrb[0].mxu0
        %v1169 = vadd.f32 0.0, %v1168
        %v1170 = vpop.f32.mrb[0].mxu0
        %v1171 = vadd.f32 0.0, %v1170
        %1172 = vdwg.mxu0
        %1173 = vmatprep.subr.bf16.mxu0 %v1005
        %1174 = vmatpush1.bf16.msra.mxu0 %v1004
        %1175 = vmatprep.subr.bf16.mxu0 %v1007
        %1176 = vmatpush1.bf16.msra.mxu0 %v1006
        %1177 = vmatprep.subr.bf16.mxu0 %v1009
        %1178 = vmatpush1.bf16.msra.mxu0 %v1008
        %1179 = vmatprep.subr.bf16.mxu0 %v1011
        %1180 = vmatpush1.bf16.msra.mxu0 %v1010
        %1181 = vmatprep.subr.bf16.mxu0 %v1013
        %1182 = vmatpush1.bf16.msra.mxu0 %v1012
        %1183 = vmatprep.subr.bf16.mxu0 %v1015
        %1184 = vmatpush1.bf16.msra.mxu0 %v1014
        %1185 = vmatprep.subr.bf16.mxu0 %v1017
        %1186 = vmatpush1.bf16.msra.mxu0 %v1016
        %1187 = vmatprep.subr.bf16.mxu0 %v1019
        %1188 = vmatpush1.bf16.msra.mxu0 %v1018
        %1189 = vmatprep.subr.bf16.mxu0 %v1021
        %1190 = vmatpush1.bf16.msra.mxu0 %v1020
        %1191 = vmatprep.subr.bf16.mxu0 %v1023
        %1192 = vmatpush1.bf16.msra.mxu0 %v1022
        %1193 = vmatprep.subr.bf16.mxu0 %v1025
        %1194 = vmatpush1.bf16.msra.mxu0 %v1024
        %1195 = vmatprep.subr.bf16.mxu0 %v1027
        %1196 = vmatpush1.bf16.msra.mxu0 %v1026
        %1197 = vmatprep.subr.bf16.mxu0 %v1029
        %1198 = vmatpush1.bf16.msra.mxu0 %v1028
        %1199 = vmatprep.subr.bf16.mxu0 %v1031
        %1200 = vmatpush1.bf16.msra.mxu0 %v1030
        %1201 = vmatprep.subr.bf16.mxu0 %v1033
        %1202 = vmatpush1.bf16.msra.mxu0 %v1032
        %1203 = vmatprep.subr.bf16.mxu0 %v1035
        %1204 = vmatpush1.bf16.msra.mxu0 %v1034
        %1205 = vmatprep.mubr.bf16.mxu0 %v751
        %1206 = vmatmul.mubr.bf16.gmra.mrb[0].mxu0 %v750
        %v1207 = vpop.f32.mrb[0].mxu0
        %v1208 = vadd.f32 %v1135, %v1207
        %v1209 = vpop.f32.mrb[0].mxu0
        %v1210 = vadd.f32 %v1137, %v1209
        %v1211 = vpop.f32.mrb[0].mxu0
        %v1212 = vadd.f32 %v1139, %v1211
        %v1213 = vpop.f32.mrb[0].mxu0
        %v1214 = vadd.f32 %v1141, %v1213
        %1215 = vmatprep.mubr.bf16.mxu0 %v755
        %1216 = vmatmul.mubr.bf16.gmra.mrb[0].mxu0 %v754
        %v1217 = vpop.f32.mrb[0].mxu0
        %v1218 = vadd.f32 %v1145, %v1217
        %v1219 = vpop.f32.mrb[0].mxu0
        %v1220 = vadd.f32 %v1147, %v1219
        %v1221 = vpop.f32.mrb[0].mxu0
        %v1222 = vadd.f32 %v1149, %v1221
        %v1223 = vpop.f32.mrb[0].mxu0
        %v1224 = vadd.f32 %v1151, %v1223
        %1225 = vmatprep.mubr.bf16.mxu0 %v759
        %1226 = vmatmul.mubr.bf16.gmra.mrb[0].mxu0 %v758
        %v1227 = vpop.f32.mrb[0].mxu0
        %v1228 = vadd.f32 %v1155, %v1227
        %v1229 = vpop.f32.mrb[0].mxu0
        %v1230 = vadd.f32 %v1157, %v1229
        %v1231 = vpop.f32.mrb[0].mxu0
        %v1232 = vadd.f32 %v1159, %v1231
        %v1233 = vpop.f32.mrb[0].mxu0
        %v1234 = vadd.f32 %v1161, %v1233
        %1235 = vmatprep.mubr.bf16.mxu0 %v763
        %1236 = vmatmul.mubr.bf16.gmra.mrb[0].mxu0 %v762
        %v1237 = vpop.f32.mrb[0].mxu0
        %v1238 = vadd.f32 %v1165, %v1237
        %v1239 = vpop.f32.mrb[0].mxu0
        %v1240 = vadd.f32 %v1167, %v1239
        %v1241 = vpop.f32.mrb[0].mxu0
        %v1242 = vadd.f32 %v1169, %v1241
        %v1243 = vpop.f32.mrb[0].mxu0
        %v1244 = vadd.f32 %v1171, %v1243
        %1245 = vdwg.mxu0
        %v1246 = vadd.f32 %v604, %v1208
        %v1247 = vadd.f32 %v605, %v1210
        %v1248 = vadd.f32 %v606, %v1212
        %v1249 = vadd.f32 %v607, %v1214
        %v1250 = vadd.f32 %v608, %v1218
        %v1251 = vadd.f32 %v609, %v1220
        %v1252 = vadd.f32 %v610, %v1222
        %v1253 = vadd.f32 %v611, %v1224
        %v1254 = vadd.f32 %v612, %v1228
        %v1255 = vadd.f32 %v613, %v1230
        %v1256 = vadd.f32 %v614, %v1232
        %v1257 = vadd.f32 %v615, %v1234
        %v1258 = vadd.f32 %v616, %v1238
        %v1259 = vadd.f32 %v617, %v1240
        %v1260 = vadd.f32 %v618, %v1242
        %v1261 = vadd.f32 %v619, %v1244
        %1262 = vst [vmem:[#allocation2] sm:$0xff] %v1246
        %1263 = vst [vmem:[#allocation2 + $0x8] sm:$0xff] %v1247
        %1264 = vst [vmem:[#allocation2 + $0x10] sm:$0xff] %v1248
        %1265 = vst [vmem:[#allocation2 + $0x18] sm:$0xff] %v1249
        %1266 = vst [vmem:[#allocation2 + $0x20] sm:$0xff] %v1250
        %1267 = vst [vmem:[#allocation2 + $0x28] sm:$0xff] %v1251
        %1268 = vst [vmem:[#allocation2 + $0x30] sm:$0xff] %v1252
        %1269 = vst [vmem:[#allocation2 + $0x38] sm:$0xff] %v1253
        %1270 = vst [vmem:[#allocation2 + $0x40] sm:$0xff] %v1254
        %1271 = vst [vmem:[#allocation2 + $0x48] sm:$0xff] %v1255
        %1272 = vst [vmem:[#allocation2 + $0x50] sm:$0xff] %v1256
        %1273 = vst [vmem:[#allocation2 + $0x58] sm:$0xff] %v1257
        %1274 = vst [vmem:[#allocation2 + $0x60] sm:$0xff] %v1258
        %1275 = vst [vmem:[#allocation2 + $0x68] sm:$0xff] %v1259
        %1276 = vst [vmem:[#allocation2 + $0x70] sm:$0xff] %v1260
        %1277 = vst [vmem:[#allocation2 + $0x78] sm:$0xff] %v1261
        %p1278 = scmp.eq.s32.totalorder %s28, 3
        // Predicated region
        $region112: #{merl_pretrain_forward.1} parent=102 // pred_check
          %p1279 = pneg %p1278
        $region113: #{merl_pretrain_forward.1} parent=102 // pred_check_branch
          %1281 = sbr.rel (%p1279) target = $region115
        $region114: #{merl_pretrain_forward.1} parent=102 // pred_region
          %v1282 = vld [vmem:[#allocation2] sm:$0xff]
          %v1283 = vld [vmem:[#allocation2 + $0x8] sm:$0xff]
          %v1284 = vld [vmem:[#allocation2 + $0x10] sm:$0xff]
          %v1285 = vld [vmem:[#allocation2 + $0x18] sm:$0xff]
          %v1286 = vld [vmem:[#allocation2 + $0x20] sm:$0xff]
          %v1287 = vld [vmem:[#allocation2 + $0x28] sm:$0xff]
          %v1288 = vld [vmem:[#allocation2 + $0x30] sm:$0xff]
          %v1289 = vld [vmem:[#allocation2 + $0x38] sm:$0xff]
          %v1290 = vld [vmem:[#allocation2 + $0x40] sm:$0xff]
          %v1291 = vld [vmem:[#allocation2 + $0x48] sm:$0xff]
          %v1292 = vld [vmem:[#allocation2 + $0x50] sm:$0xff]
          %v1293 = vld [vmem:[#allocation2 + $0x58] sm:$0xff]
          %v1294 = vld [vmem:[#allocation2 + $0x60] sm:$0xff]
          %v1295 = vld [vmem:[#allocation2 + $0x68] sm:$0xff]
          %v1296 = vld [vmem:[#allocation2 + $0x70] sm:$0xff]
          %v1297 = vld [vmem:[#allocation2 + $0x78] sm:$0xff]
          %v1298 = vld [vmem:[%s2] sm:$0x3]
          %v1300 = vlaneseq
          %v1301 = vshrl.u32 %v1300, 7
          %v1302 = vsub.s32 0, %v1301
          %v1303 = vrot.slane %v1298, %v1302
          %v1304 = vlaneseq
          %v1305 = vshrl.u32 %v1304, 7
          %v1306 = vsub.s32 1, %v1305
          %v1307 = vrot.slane %v1298, %v1306
          %v1310 = vadd.f32 %v1282, %v1303
          %v1311 = vadd.f32 %v1283, %v1307
          %v1312 = vadd.f32 %v1284, %v1303
          %v1313 = vadd.f32 %v1285, %v1307
          %v1314 = vadd.f32 %v1286, %v1303
          %v1315 = vadd.f32 %v1287, %v1307
          %v1316 = vadd.f32 %v1288, %v1303
          %v1317 = vadd.f32 %v1289, %v1307
          %v1318 = vadd.f32 %v1290, %v1303
          %v1319 = vadd.f32 %v1291, %v1307
          %v1320 = vadd.f32 %v1292, %v1303
          %v1321 = vadd.f32 %v1293, %v1307
          %v1322 = vadd.f32 %v1294, %v1303
          %v1323 = vadd.f32 %v1295, %v1307
          %v1324 = vadd.f32 %v1296, %v1303
          %v1325 = vadd.f32 %v1297, %v1307
          %v1326 = vadd.f32 %v1310, %v1312
          %v1327 = vadd.f32 %v1326, %v1314
          %v1328 = vadd.f32 %v1327, %v1316
          %v1329 = vrot.slane %v1328, 4
          %v1330 = vadd.f32 %v1328, %v1329
          %v1331 = vrot.slane %v1330, 2
          %v1332 = vadd.f32 %v1330, %v1331
          %v1333 = vrot.slane %v1332, 1
          %v1334 = vadd.f32 %v1332, %v1333
          %v1335 = vadd.f32 %v1311, %v1313
          %v1336 = vadd.f32 %v1335, %v1315
          %v1337 = vadd.f32 %v1336, %v1317
          %v1338 = vrot.slane %v1337, 4
          %v1339 = vadd.f32 %v1337, %v1338
          %v1340 = vrot.slane %v1339, 2
          %v1341 = vadd.f32 %v1339, %v1340
          %v1342 = vrot.slane %v1341, 1
          %v1343 = vadd.f32 %v1341, %v1342
          %v1344 = vadd.f32 %v1318, %v1320
          %v1345 = vadd.f32 %v1344, %v1322
          %v1346 = vadd.f32 %v1345, %v1324
          %v1347 = vrot.slane %v1346, 4
          %v1348 = vadd.f32 %v1346, %v1347
          %v1349 = vrot.slane %v1348, 2
          %v1350 = vadd.f32 %v1348, %v1349
          %v1351 = vrot.slane %v1350, 1
          %v1352 = vadd.f32 %v1350, %v1351
          %v1353 = vadd.f32 %v1319, %v1321
          %v1354 = vadd.f32 %v1353, %v1323
          %v1355 = vadd.f32 %v1354, %v1325
          %v1356 = vrot.slane %v1355, 4
          %v1357 = vadd.f32 %v1355, %v1356
          %v1358 = vrot.slane %v1357, 2
          %v1359 = vadd.f32 %v1357, %v1358
          %v1360 = vrot.slane %v1359, 1
          %v1361 = vadd.f32 %v1359, %v1360
          %v1362 = vrcp.pop 32.0
          %v1363 = vmul.f32 %v1334, %v1362
          %v1364 = vmul.f32 %v1343, %v1362
          %v1365 = vmul.f32 %v1352, %v1362
          %v1366 = vmul.f32 %v1361, %v1362
          %v1367 = vld [vmem:[%s3] sm:$0x3]
          %v1369 = vlaneseq
          %v1370 = vshrl.u32 %v1369, 7
          %v1371 = vsub.s32 0, %v1370
          %v1372 = vrot.slane %v1367, %v1371
          %v1373 = vlaneseq
          %v1374 = vshrl.u32 %v1373, 7
          %v1375 = vsub.s32 1, %v1374
          %v1376 = vrot.slane %v1367, %v1375
          %v1379 = vadd.f32 %v1363, %v1372
          %v1380 = vadd.f32 %v1364, %v1376
          %v1381 = vadd.f32 %v1365, %v1372
          %v1382 = vadd.f32 %v1366, %v1376
          %v1383 = vpack.c.bf16 %v1379, %v1379
          %v1384 = vpack.c.bf16 %v1380, %v1380
          %v1385 = vpack.c.bf16 %v1381, %v1381
          %v1386 = vpack.c.bf16 %v1382, %v1382
          %v1387 = vld [vmem:[%s5] sm:$0xff]
          %v1388 = vld [vmem:[%s5 + $0x8] sm:$0xff]
          %v1389 = vld [vmem:[%s5 + $0x10] sm:$0xff]
          %v1390 = vld [vmem:[%s5 + $0x18] sm:$0xff]
          %v1391 = vld [vmem:[%s5 + $0x20] sm:$0xff]
          %v1392 = vld [vmem:[%s5 + $0x28] sm:$0xff]
          %v1393 = vld [vmem:[%s5 + $0x30] sm:$0xff]
          %v1394 = vld [vmem:[%s5 + $0x38] sm:$0xff]
          %v1395 = vld [vmem:[%s5 + $0x40] sm:$0xff]
          %v1396 = vld [vmem:[%s5 + $0x48] sm:$0xff]
          %v1397 = vld [vmem:[%s5 + $0x50] sm:$0xff]
          %v1398 = vld [vmem:[%s5 + $0x58] sm:$0xff]
          %v1399 = vld [vmem:[%s5 + $0x60] sm:$0xff]
          %v1400 = vld [vmem:[%s5 + $0x68] sm:$0xff]
          %v1401 = vld [vmem:[%s5 + $0x70] sm:$0xff]
          %v1402 = vld [vmem:[%s5 + $0x78] sm:$0xff]
          %v1403 = vld [vmem:[%s5 + $0x80] sm:$0xff]
          %v1404 = vld [vmem:[%s5 + $0x88] sm:$0xff]
          %v1405 = vld [vmem:[%s5 + $0x90] sm:$0xff]
          %v1406 = vld [vmem:[%s5 + $0x98] sm:$0xff]
          %v1407 = vld [vmem:[%s5 + $0xa0] sm:$0xff]
          %v1408 = vld [vmem:[%s5 + $0xa8] sm:$0xff]
          %v1409 = vld [vmem:[%s5 + $0xb0] sm:$0xff]
          %v1410 = vld [vmem:[%s5 + $0xb8] sm:$0xff]
          %v1411 = vld [vmem:[%s5 + $0xc0] sm:$0xff]
          %v1412 = vld [vmem:[%s5 + $0xc8] sm:$0xff]
          %v1413 = vld [vmem:[%s5 + $0xd0] sm:$0xff]
          %v1414 = vld [vmem:[%s5 + $0xd8] sm:$0xff]
          %v1415 = vld [vmem:[%s5 + $0xe0] sm:$0xff]
          %v1416 = vld [vmem:[%s5 + $0xe8] sm:$0xff]
          %v1417 = vld [vmem:[%s5 + $0xf0] sm:$0xff]
          %v1418 = vld [vmem:[%s5 + $0xf8] sm:$0xff]
          %v1419 = vld [vmem:[%s5 + $0x100] sm:$0xff]
          %v1420 = vld [vmem:[%s5 + $0x108] sm:$0xff]
          %v1421 = vld [vmem:[%s5 + $0x110] sm:$0xff]
          %v1422 = vld [vmem:[%s5 + $0x118] sm:$0xff]
          %v1423 = vld [vmem:[%s5 + $0x120] sm:$0xff]
          %v1424 = vld [vmem:[%s5 + $0x128] sm:$0xff]
          %v1425 = vld [vmem:[%s5 + $0x130] sm:$0xff]
          %v1426 = vld [vmem:[%s5 + $0x138] sm:$0xff]
          %v1427 = vld [vmem:[%s5 + $0x140] sm:$0xff]
          %v1428 = vld [vmem:[%s5 + $0x148] sm:$0xff]
          %v1429 = vld [vmem:[%s5 + $0x150] sm:$0xff]
          %v1430 = vld [vmem:[%s5 + $0x158] sm:$0xff]
          %v1431 = vld [vmem:[%s5 + $0x160] sm:$0xff]
          %v1432 = vld [vmem:[%s5 + $0x168] sm:$0xff]
          %v1433 = vld [vmem:[%s5 + $0x170] sm:$0xff]
          %v1434 = vld [vmem:[%s5 + $0x178] sm:$0xff]
          %v1435 = vld [vmem:[%s5 + $0x180] sm:$0xff]
          %v1436 = vld [vmem:[%s5 + $0x188] sm:$0xff]
          %v1437 = vld [vmem:[%s5 + $0x190] sm:$0xff]
          %v1438 = vld [vmem:[%s5 + $0x198] sm:$0xff]
          %v1439 = vld [vmem:[%s5 + $0x1a0] sm:$0xff]
          %v1440 = vld [vmem:[%s5 + $0x1a8] sm:$0xff]
          %v1441 = vld [vmem:[%s5 + $0x1b0] sm:$0xff]
          %v1442 = vld [vmem:[%s5 + $0x1b8] sm:$0xff]
          %v1443 = vld [vmem:[%s5 + $0x1c0] sm:$0xff]
          %v1444 = vld [vmem:[%s5 + $0x1c8] sm:$0xff]
          %v1445 = vld [vmem:[%s5 + $0x1d0] sm:$0xff]
          %v1446 = vld [vmem:[%s5 + $0x1d8] sm:$0xff]
          %v1447 = vld [vmem:[%s5 + $0x1e0] sm:$0xff]
          %v1448 = vld [vmem:[%s5 + $0x1e8] sm:$0xff]
          %v1449 = vld [vmem:[%s5 + $0x1f0] sm:$0xff]
          %v1450 = vld [vmem:[%s5 + $0x1f8] sm:$0xff]
          %v1451 = vld [vmem:[%s5 + $0x200] sm:$0xff]
          %v1452 = vld [vmem:[%s5 + $0x208] sm:$0xff]
          %v1453 = vld [vmem:[%s5 + $0x210] sm:$0xff]
          %v1454 = vld [vmem:[%s5 + $0x218] sm:$0xff]
          %v1455 = vld [vmem:[%s5 + $0x220] sm:$0xff]
          %v1456 = vld [vmem:[%s5 + $0x228] sm:$0xff]
          %v1457 = vld [vmem:[%s5 + $0x230] sm:$0xff]
          %v1458 = vld [vmem:[%s5 + $0x238] sm:$0xff]
          %v1459 = vld [vmem:[%s5 + $0x240] sm:$0xff]
          %v1460 = vld [vmem:[%s5 + $0x248] sm:$0xff]
          %v1461 = vld [vmem:[%s5 + $0x250] sm:$0xff]
          %v1462 = vld [vmem:[%s5 + $0x258] sm:$0xff]
          %v1463 = vld [vmem:[%s5 + $0x260] sm:$0xff]
          %v1464 = vld [vmem:[%s5 + $0x268] sm:$0xff]
          %v1465 = vld [vmem:[%s5 + $0x270] sm:$0xff]
          %v1466 = vld [vmem:[%s5 + $0x278] sm:$0xff]
          %v1467 = vld [vmem:[%s5 + $0x280] sm:$0xff]
          %v1468 = vld [vmem:[%s5 + $0x288] sm:$0xff]
          %v1469 = vld [vmem:[%s5 + $0x290] sm:$0xff]
          %v1470 = vld [vmem:[%s5 + $0x298] sm:$0xff]
          %v1471 = vld [vmem:[%s5 + $0x2a0] sm:$0xff]
          %v1472 = vld [vmem:[%s5 + $0x2a8] sm:$0xff]
          %v1473 = vld [vmem:[%s5 + $0x2b0] sm:$0xff]
          %v1474 = vld [vmem:[%s5 + $0x2b8] sm:$0xff]
          %v1475 = vld [vmem:[%s5 + $0x2c0] sm:$0xff]
          %v1476 = vld [vmem:[%s5 + $0x2c8] sm:$0xff]
          %v1477 = vld [vmem:[%s5 + $0x2d0] sm:$0xff]
          %v1478 = vld [vmem:[%s5 + $0x2d8] sm:$0xff]
          %v1479 = vld [vmem:[%s5 + $0x2e0] sm:$0xff]
          %v1480 = vld [vmem:[%s5 + $0x2e8] sm:$0xff]
          %v1481 = vld [vmem:[%s5 + $0x2f0] sm:$0xff]
          %v1482 = vld [vmem:[%s5 + $0x2f8] sm:$0xff]
          %v1483 = vld [vmem:[%s6] sm:$0x3f]
          %v1485 = vlaneseq
          %v1486 = vshrl.u32 %v1485, 7
          %v1487 = vsub.s32 0, %v1486
          %v1488 = vrot.slane %v1483, %v1487
          %v1489 = vlaneseq
          %v1490 = vshrl.u32 %v1489, 7
          %v1491 = vsub.s32 1, %v1490
          %v1492 = vrot.slane %v1483, %v1491
          %v1493 = vlaneseq
          %v1494 = vshrl.u32 %v1493, 7
          %v1495 = vsub.s32 2, %v1494
          %v1496 = vrot.slane %v1483, %v1495
          %v1497 = vlaneseq
          %v1498 = vshrl.u32 %v1497, 7
          %v1499 = vsub.s32 3, %v1498
          %v1500 = vrot.slane %v1483, %v1499
          %v1501 = vlaneseq
          %v1502 = vshrl.u32 %v1501, 7
          %v1503 = vsub.s32 4, %v1502
          %v1504 = vrot.slane %v1483, %v1503
          %v1505 = vlaneseq
          %v1506 = vshrl.u32 %v1505, 7
          %v1507 = vsub.s32 5, %v1506
          %v1508 = vrot.slane %v1483, %v1507
          %v1519 = vunpack.c.l.b16 %v1383
          %v1520 = vunpack.c.l.b16 %v1384
          %v1521 = vunpack.c.l.b16 %v1385
          %v1522 = vunpack.c.l.b16 %v1386
          %v1523 = vrot.slane %v1521, 7
          %vm1524 = vcmask 1041409
          %v1525 = vsel %vm1524, %v1523, %v1519
          %v1526 = vrot.slane %v1522, 7
          %v1527 = vsel %vm1524, %v1526, %v1520
          %v1528 = vpack.c.b16 %v1525, %v1525
          %v1529 = vpack.c.b16 %v1527, %v1527
          %v1628 = vunpack.c.l.b16 %v1387
          %v1629 = vunpack.c.h.b16 %v1387
          %v1630 = vunpack.c.l.b16 %v1388
          %v1631 = vunpack.c.h.b16 %v1388
          %v1632 = vunpack.c.l.b16 %v1389
          %v1633 = vunpack.c.h.b16 %v1389
          %v1634 = vunpack.c.l.b16 %v1390
          %v1635 = vunpack.c.h.b16 %v1390
          %v1636 = vunpack.c.l.b16 %v1391
          %v1637 = vunpack.c.h.b16 %v1391
          %v1638 = vunpack.c.l.b16 %v1392
          %v1639 = vunpack.c.h.b16 %v1392
          %v1640 = vunpack.c.l.b16 %v1393
          %v1641 = vunpack.c.h.b16 %v1393
          %v1642 = vunpack.c.l.b16 %v1394
          %v1643 = vunpack.c.h.b16 %v1394
          %v1644 = vunpack.c.l.b16 %v1395
          %v1645 = vunpack.c.h.b16 %v1395
          %v1646 = vunpack.c.l.b16 %v1396
          %v1647 = vunpack.c.h.b16 %v1396
          %v1648 = vunpack.c.l.b16 %v1397
          %v1649 = vunpack.c.h.b16 %v1397
          %v1650 = vunpack.c.l.b16 %v1398
          %v1651 = vunpack.c.h.b16 %v1398
          %v1652 = vunpack.c.l.b16 %v1399
          %v1653 = vunpack.c.h.b16 %v1399
          %v1654 = vunpack.c.l.b16 %v1400
          %v1655 = vunpack.c.h.b16 %v1400
          %v1656 = vunpack.c.l.b16 %v1401
          %v1657 = vunpack.c.h.b16 %v1401
          %v1658 = vunpack.c.l.b16 %v1402
          %v1659 = vunpack.c.h.b16 %v1402
          %v1660 = vunpack.c.l.b16 %v1403
          %v1661 = vunpack.c.h.b16 %v1403
          %v1662 = vunpack.c.l.b16 %v1404
          %v1663 = vunpack.c.h.b16 %v1404
          %v1664 = vunpack.c.l.b16 %v1405
          %v1665 = vunpack.c.h.b16 %v1405
          %v1666 = vunpack.c.l.b16 %v1406
          %v1667 = vunpack.c.h.b16 %v1406
          %v1668 = vunpack.c.l.b16 %v1407
          %v1669 = vunpack.c.h.b16 %v1407
          %v1670 = vunpack.c.l.b16 %v1408
          %v1671 = vunpack.c.h.b16 %v1408
          %v1672 = vunpack.c.l.b16 %v1409
          %v1673 = vunpack.c.h.b16 %v1409
          %v1674 = vunpack.c.l.b16 %v1410
          %v1675 = vunpack.c.h.b16 %v1410
          %v1676 = vunpack.c.l.b16 %v1411
          %v1677 = vunpack.c.h.b16 %v1411
          %v1678 = vunpack.c.l.b16 %v1412
          %v1679 = vunpack.c.h.b16 %v1412
          %v1680 = vunpack.c.l.b16 %v1413
          %v1681 = vunpack.c.h.b16 %v1413
          %v1682 = vunpack.c.l.b16 %v1414
          %v1683 = vunpack.c.h.b16 %v1414
          %v1684 = vunpack.c.l.b16 %v1415
          %v1685 = vunpack.c.h.b16 %v1415
          %v1686 = vunpack.c.l.b16 %v1416
          %v1687 = vunpack.c.h.b16 %v1416
          %v1688 = vunpack.c.l.b16 %v1417
          %v1689 = vunpack.c.h.b16 %v1417
          %v1690 = vunpack.c.l.b16 %v1418
          %v1691 = vunpack.c.h.b16 %v1418
          %v1692 = vunpack.c.l.b16 %v1419
          %v1693 = vunpack.c.h.b16 %v1419
          %v1694 = vunpack.c.l.b16 %v1420
          %v1695 = vunpack.c.h.b16 %v1420
          %v1696 = vunpack.c.l.b16 %v1421
          %v1697 = vunpack.c.h.b16 %v1421
          %v1698 = vunpack.c.l.b16 %v1422
          %v1699 = vunpack.c.h.b16 %v1422
          %v1700 = vunpack.c.l.b16 %v1423
          %v1701 = vunpack.c.h.b16 %v1423
          %v1702 = vunpack.c.l.b16 %v1424
          %v1703 = vunpack.c.h.b16 %v1424
          %v1704 = vunpack.c.l.b16 %v1425
          %v1705 = vunpack.c.h.b16 %v1425
          %v1706 = vunpack.c.l.b16 %v1426
          %v1707 = vunpack.c.h.b16 %v1426
          %v1708 = vunpack.c.l.b16 %v1427
          %v1709 = vunpack.c.h.b16 %v1427
          %v1710 = vunpack.c.l.b16 %v1428
          %v1711 = vunpack.c.h.b16 %v1428
          %v1712 = vunpack.c.l.b16 %v1429
          %v1713 = vunpack.c.h.b16 %v1429
          %v1714 = vunpack.c.l.b16 %v1430
          %v1715 = vunpack.c.h.b16 %v1430
          %v1716 = vunpack.c.l.b16 %v1431
          %v1717 = vunpack.c.h.b16 %v1431
          %v1718 = vunpack.c.l.b16 %v1432
          %v1719 = vunpack.c.h.b16 %v1432
          %v1720 = vunpack.c.l.b16 %v1433
          %v1721 = vunpack.c.h.b16 %v1433
          %v1722 = vunpack.c.l.b16 %v1434
          %v1723 = vunpack.c.h.b16 %v1434
          %v1724 = vunpack.c.l.b16 %v1435
          %v1725 = vunpack.c.h.b16 %v1435
          %v1726 = vunpack.c.l.b16 %v1436
          %v1727 = vunpack.c.h.b16 %v1436
          %v1728 = vunpack.c.l.b16 %v1437
          %v1729 = vunpack.c.h.b16 %v1437
          %v1730 = vunpack.c.l.b16 %v1438
          %v1731 = vunpack.c.h.b16 %v1438
          %v1732 = vunpack.c.l.b16 %v1439
          %v1733 = vunpack.c.h.b16 %v1439
          %v1734 = vunpack.c.l.b16 %v1440
          %v1735 = vunpack.c.h.b16 %v1440
          %v1736 = vunpack.c.l.b16 %v1441
          %v1737 = vunpack.c.h.b16 %v1441
          %v1738 = vunpack.c.l.b16 %v1442
          %v1739 = vunpack.c.h.b16 %v1442
          %v1740 = vunpack.c.l.b16 %v1443
          %v1741 = vunpack.c.h.b16 %v1443
          %v1742 = vunpack.c.l.b16 %v1444
          %v1743 = vunpack.c.h.b16 %v1444
          %v1744 = vunpack.c.l.b16 %v1445
          %v1745 = vunpack.c.h.b16 %v1445
          %v1746 = vunpack.c.l.b16 %v1446
          %v1747 = vunpack.c.h.b16 %v1446
          %v1748 = vunpack.c.l.b16 %v1447
          %v1749 = vunpack.c.h.b16 %v1447
          %v1750 = vunpack.c.l.b16 %v1448
          %v1751 = vunpack.c.h.b16 %v1448
          %v1752 = vunpack.c.l.b16 %v1449
          %v1753 = vunpack.c.h.b16 %v1449
          %v1754 = vunpack.c.l.b16 %v1450
          %v1755 = vunpack.c.h.b16 %v1450
          %v1756 = vunpack.c.l.b16 %v1451
          %v1757 = vunpack.c.h.b16 %v1451
          %v1758 = vunpack.c.l.b16 %v1452
          %v1759 = vunpack.c.h.b16 %v1452
          %v1760 = vunpack.c.l.b16 %v1453
          %v1761 = vunpack.c.h.b16 %v1453
          %v1762 = vunpack.c.l.b16 %v1454
          %v1763 = vunpack.c.h.b16 %v1454
          %v1764 = vunpack.c.l.b16 %v1455
          %v1765 = vunpack.c.h.b16 %v1455
          %v1766 = vunpack.c.l.b16 %v1456
          %v1767 = vunpack.c.h.b16 %v1456
          %v1768 = vunpack.c.l.b16 %v1457
          %v1769 = vunpack.c.h.b16 %v1457
          %v1770 = vunpack.c.l.b16 %v1458
          %v1771 = vunpack.c.h.b16 %v1458
          %v1772 = vunpack.c.l.b16 %v1459
          %v1773 = vunpack.c.h.b16 %v1459
          %v1774 = vunpack.c.l.b16 %v1460
          %v1775 = vunpack.c.h.b16 %v1460
          %v1776 = vunpack.c.l.b16 %v1461
          %v1777 = vunpack.c.h.b16 %v1461
          %v1778 = vunpack.c.l.b16 %v1462
          %v1779 = vunpack.c.h.b16 %v1462
          %v1780 = vunpack.c.l.b16 %v1463
          %v1781 = vunpack.c.h.b16 %v1463
          %v1782 = vunpack.c.l.b16 %v1464
          %v1783 = vunpack.c.h.b16 %v1464
          %v1784 = vunpack.c.l.b16 %v1465
          %v1785 = vunpack.c.h.b16 %v1465
          %v1786 = vunpack.c.l.b16 %v1466
          %v1787 = vunpack.c.h.b16 %v1466
          %v1788 = vunpack.c.l.b16 %v1467
          %v1789 = vunpack.c.h.b16 %v1467
          %v1790 = vunpack.c.l.b16 %v1468
          %v1791 = vunpack.c.h.b16 %v1468
          %v1792 = vunpack.c.l.b16 %v1469
          %v1793 = vunpack.c.h.b16 %v1469
          %v1794 = vunpack.c.l.b16 %v1470
          %v1795 = vunpack.c.h.b16 %v1470
          %v1796 = vunpack.c.l.b16 %v1471
          %v1797 = vunpack.c.h.b16 %v1471
          %v1798 = vunpack.c.l.b16 %v1472
          %v1799 = vunpack.c.h.b16 %v1472
          %v1800 = vunpack.c.l.b16 %v1473
          %v1801 = vunpack.c.h.b16 %v1473
          %v1802 = vunpack.c.l.b16 %v1474
          %v1803 = vunpack.c.h.b16 %v1474
          %v1804 = vunpack.c.l.b16 %v1475
          %v1805 = vunpack.c.h.b16 %v1475
          %v1806 = vunpack.c.l.b16 %v1476
          %v1807 = vunpack.c.h.b16 %v1476
          %v1808 = vunpack.c.l.b16 %v1477
          %v1809 = vunpack.c.h.b16 %v1477
          %v1810 = vunpack.c.l.b16 %v1478
          %v1811 = vunpack.c.h.b16 %v1478
          %v1812 = vunpack.c.l.b16 %v1479
          %v1813 = vunpack.c.h.b16 %v1479
          %v1814 = vunpack.c.l.b16 %v1480
          %v1815 = vunpack.c.h.b16 %v1480
          %v1816 = vunpack.c.l.b16 %v1481
          %v1817 = vunpack.c.h.b16 %v1481
          %v1818 = vunpack.c.l.b16 %v1482
          %v1819 = vunpack.c.h.b16 %v1482
          %v1820 = vpack.c.b16 %v1634, %v1628
          %v1821 = vpack.c.b16 %v1635, %v1629
          %v1822 = vpack.c.b16 %v1636, %v1630
          %v1823 = vpack.c.b16 %v1637, %v1631
          %v1824 = vpack.c.b16 %v1638, %v1632
          %v1825 = vpack.c.b16 %v1639, %v1633
          %v1826 = vpack.c.b16 %v1646, %v1640
          %v1827 = vpack.c.b16 %v1647, %v1641
          %v1828 = vpack.c.b16 %v1648, %v1642
          %v1829 = vpack.c.b16 %v1649, %v1643
          %v1830 = vpack.c.b16 %v1650, %v1644
          %v1831 = vpack.c.b16 %v1651, %v1645
          %v1832 = vpack.c.b16 %v1658, %v1652
          %v1833 = vpack.c.b16 %v1659, %v1653
          %v1834 = vpack.c.b16 %v1660, %v1654
          %v1835 = vpack.c.b16 %v1661, %v1655
          %v1836 = vpack.c.b16 %v1662, %v1656
          %v1837 = vpack.c.b16 %v1663, %v1657
          %v1838 = vpack.c.b16 %v1670, %v1664
          %v1839 = vpack.c.b16 %v1671, %v1665
          %v1840 = vpack.c.b16 %v1672, %v1666
          %v1841 = vpack.c.b16 %v1673, %v1667
          %v1842 = vpack.c.b16 %v1674, %v1668
          %v1843 = vpack.c.b16 %v1675, %v1669
          %v1844 = vpack.c.b16 %v1682, %v1676
          %v1845 = vpack.c.b16 %v1683, %v1677
          %v1846 = vpack.c.b16 %v1684, %v1678
          %v1847 = vpack.c.b16 %v1685, %v1679
          %v1848 = vpack.c.b16 %v1686, %v1680
          %v1849 = vpack.c.b16 %v1687, %v1681
          %v1850 = vpack.c.b16 %v1694, %v1688
          %v1851 = vpack.c.b16 %v1695, %v1689
          %v1852 = vpack.c.b16 %v1696, %v1690
          %v1853 = vpack.c.b16 %v1697, %v1691
          %v1854 = vpack.c.b16 %v1698, %v1692
          %v1855 = vpack.c.b16 %v1699, %v1693
          %v1856 = vpack.c.b16 %v1706, %v1700
          %v1857 = vpack.c.b16 %v1707, %v1701
          %v1858 = vpack.c.b16 %v1708, %v1702
          %v1859 = vpack.c.b16 %v1709, %v1703
          %v1860 = vpack.c.b16 %v1710, %v1704
          %v1861 = vpack.c.b16 %v1711, %v1705
          %v1862 = vpack.c.b16 %v1718, %v1712
          %v1863 = vpack.c.b16 %v1719, %v1713
          %v1864 = vpack.c.b16 %v1720, %v1714
          %v1865 = vpack.c.b16 %v1721, %v1715
          %v1866 = vpack.c.b16 %v1722, %v1716
          %v1867 = vpack.c.b16 %v1723, %v1717
          %v1868 = vpack.c.b16 %v1730, %v1724
          %v1869 = vpack.c.b16 %v1731, %v1725
          %v1870 = vpack.c.b16 %v1732, %v1726
          %v1871 = vpack.c.b16 %v1733, %v1727
          %v1872 = vpack.c.b16 %v1734, %v1728
          %v1873 = vpack.c.b16 %v1735, %v1729
          %v1874 = vpack.c.b16 %v1742, %v1736
          %v1875 = vpack.c.b16 %v1743, %v1737
          %v1876 = vpack.c.b16 %v1744, %v1738
          %v1877 = vpack.c.b16 %v1745, %v1739
          %v1878 = vpack.c.b16 %v1746, %v1740
          %v1879 = vpack.c.b16 %v1747, %v1741
          %v1880 = vpack.c.b16 %v1754, %v1748
          %v1881 = vpack.c.b16 %v1755, %v1749
          %v1882 = vpack.c.b16 %v1756, %v1750
          %v1883 = vpack.c.b16 %v1757, %v1751
          %v1884 = vpack.c.b16 %v1758, %v1752
          %v1885 = vpack.c.b16 %v1759, %v1753
          %v1886 = vpack.c.b16 %v1766, %v1760
          %v1887 = vpack.c.b16 %v1767, %v1761
          %v1888 = vpack.c.b16 %v1768, %v1762
          %v1889 = vpack.c.b16 %v1769, %v1763
          %v1890 = vpack.c.b16 %v1770, %v1764
          %v1891 = vpack.c.b16 %v1771, %v1765
          %v1892 = vpack.c.b16 %v1778, %v1772
          %v1893 = vpack.c.b16 %v1779, %v1773
          %v1894 = vpack.c.b16 %v1780, %v1774
          %v1895 = vpack.c.b16 %v1781, %v1775
          %v1896 = vpack.c.b16 %v1782, %v1776
          %v1897 = vpack.c.b16 %v1783, %v1777
          %v1898 = vpack.c.b16 %v1790, %v1784
          %v1899 = vpack.c.b16 %v1791, %v1785
          %v1900 = vpack.c.b16 %v1792, %v1786
          %v1901 = vpack.c.b16 %v1793, %v1787
          %v1902 = vpack.c.b16 %v1794, %v1788
          %v1903 = vpack.c.b16 %v1795, %v1789
          %v1904 = vpack.c.b16 %v1802, %v1796
          %v1905 = vpack.c.b16 %v1803, %v1797
          %v1906 = vpack.c.b16 %v1804, %v1798
          %v1907 = vpack.c.b16 %v1805, %v1799
          %v1908 = vpack.c.b16 %v1806, %v1800
          %v1909 = vpack.c.b16 %v1807, %v1801
          %v1910 = vpack.c.b16 %v1814, %v1808
          %v1911 = vpack.c.b16 %v1815, %v1809
          %v1912 = vpack.c.b16 %v1816, %v1810
          %v1913 = vpack.c.b16 %v1817, %v1811
          %v1914 = vpack.c.b16 %v1818, %v1812
          %v1915 = vpack.c.b16 %v1819, %v1813
          %2012 = vmatprep.subr.bf16.mxu0 %v1821
          %2013 = vmatpush1.bf16.msra.mxu0 %v1820
          %2014 = vmatprep.subr.bf16.mxu0 %v1827
          %2015 = vmatpush1.bf16.msra.mxu0 %v1826
          %2016 = vmatprep.subr.bf16.mxu0 %v1833
          %2017 = vmatpush1.bf16.msra.mxu0 %v1832
          %2018 = vmatprep.subr.bf16.mxu0 %v1839
          %2019 = vmatpush1.bf16.msra.mxu0 %v1838
          %2020 = vmatprep.subr.bf16.mxu0 %v1845
          %2021 = vmatpush1.bf16.msra.mxu0 %v1844
          %2022 = vmatprep.subr.bf16.mxu0 %v1851
          %2023 = vmatpush1.bf16.msra.mxu0 %v1850
          %2024 = vmatprep.subr.bf16.mxu0 %v1857
          %2025 = vmatpush1.bf16.msra.mxu0 %v1856
          %2026 = vmatprep.subr.bf16.mxu0 %v1863
          %2027 = vmatpush1.bf16.msra.mxu0 %v1862
          %2028 = vmatprep.subr.bf16.mxu0 %v1869
          %2029 = vmatpush1.bf16.msra.mxu0 %v1868
          %2030 = vmatprep.subr.bf16.mxu0 %v1875
          %2031 = vmatpush1.bf16.msra.mxu0 %v1874
          %2032 = vmatprep.subr.bf16.mxu0 %v1881
          %2033 = vmatpush1.bf16.msra.mxu0 %v1880
          %2034 = vmatprep.subr.bf16.mxu0 %v1887
          %2035 = vmatpush1.bf16.msra.mxu0 %v1886
          %2036 = vmatprep.subr.bf16.mxu0 %v1893
          %2037 = vmatpush1.bf16.msra.mxu0 %v1892
          %2038 = vmatprep.subr.bf16.mxu0 %v1899
          %2039 = vmatpush1.bf16.msra.mxu0 %v1898
          %2040 = vmatprep.subr.bf16.mxu0 %v1905
          %2041 = vmatpush1.bf16.msra.mxu0 %v1904
          %2042 = vmatprep.subr.bf16.mxu0 %v1911
          %2043 = vmatpush1.bf16.msra.mxu0 %v1910
          %2044 = vmatprep.mubr.bf16.mxu0 %v1529
          %2045 = vmatmul.mubr.bf16.gmra.mrb[0].mxu0 %v1528
          %v2046 = vpop.f32.mrb[0].mxu0
          %v2047 = vadd.f32 %v1488, %v2046
          %v2048 = vpop.f32.mrb[0].mxu0
          %v2049 = vadd.f32 %v1492, %v2048
          %v2050 = vpop.f32.mrb[0].mxu0
          %v2051 = vpop.f32.mrb[0].mxu0
          %2052 = vdwg.mxu0
          %2053 = vmatprep.subr.bf16.mxu0 %v1823
          %2054 = vmatpush1.bf16.msra.mxu0 %v1822
          %2055 = vmatprep.subr.bf16.mxu0 %v1829
          %2056 = vmatpush1.bf16.msra.mxu0 %v1828
          %2057 = vmatprep.subr.bf16.mxu0 %v1835
          %2058 = vmatpush1.bf16.msra.mxu0 %v1834
          %2059 = vmatprep.subr.bf16.mxu0 %v1841
          %2060 = vmatpush1.bf16.msra.mxu0 %v1840
          %2061 = vmatprep.subr.bf16.mxu0 %v1847
          %2062 = vmatpush1.bf16.msra.mxu0 %v1846
          %2063 = vmatprep.subr.bf16.mxu0 %v1853
          %2064 = vmatpush1.bf16.msra.mxu0 %v1852
          %2065 = vmatprep.subr.bf16.mxu0 %v1859
          %2066 = vmatpush1.bf16.msra.mxu0 %v1858
          %2067 = vmatprep.subr.bf16.mxu0 %v1865
          %2068 = vmatpush1.bf16.msra.mxu0 %v1864
          %2069 = vmatprep.subr.bf16.mxu0 %v1871
          %2070 = vmatpush1.bf16.msra.mxu0 %v1870
          %2071 = vmatprep.subr.bf16.mxu0 %v1877
          %2072 = vmatpush1.bf16.msra.mxu0 %v1876
          %2073 = vmatprep.subr.bf16.mxu0 %v1883
          %2074 = vmatpush1.bf16.msra.mxu0 %v1882
          %2075 = vmatprep.subr.bf16.mxu0 %v1889
          %2076 = vmatpush1.bf16.msra.mxu0 %v1888
          %2077 = vmatprep.subr.bf16.mxu0 %v1895
          %2078 = vmatpush1.bf16.msra.mxu0 %v1894
          %2079 = vmatprep.subr.bf16.mxu0 %v1901
          %2080 = vmatpush1.bf16.msra.mxu0 %v1900
          %2081 = vmatprep.subr.bf16.mxu0 %v1907
          %2082 = vmatpush1.bf16.msra.mxu0 %v1906
          %2083 = vmatprep.subr.bf16.mxu0 %v1913
          %2084 = vmatpush1.bf16.msra.mxu0 %v1912
          %2085 = vmatprep.mubr.bf16.mxu0 %v1529
          %2086 = vmatmul.mubr.bf16.gmra.mrb[0].mxu0 %v1528
          %v2087 = vpop.f32.mrb[0].mxu0
          %v2088 = vadd.f32 %v1496, %v2087
          %v2089 = vpop.f32.mrb[0].mxu0
          %v2090 = vadd.f32 %v1500, %v2089
          %v2091 = vpop.f32.mrb[0].mxu0
          %v2092 = vpop.f32.mrb[0].mxu0
          %2093 = vdwg.mxu0
          %2094 = vmatprep.subr.bf16.mxu0 %v1825
          %2095 = vmatpush1.bf16.msra.mxu0 %v1824
          %2096 = vmatprep.subr.bf16.mxu0 %v1831
          %2097 = vmatpush1.bf16.msra.mxu0 %v1830
          %2098 = vmatprep.subr.bf16.mxu0 %v1837
          %2099 = vmatpush1.bf16.msra.mxu0 %v1836
          %2100 = vmatprep.subr.bf16.mxu0 %v1843
          %2101 = vmatpush1.bf16.msra.mxu0 %v1842
          %2102 = vmatprep.subr.bf16.mxu0 %v1849
          %2103 = vmatpush1.bf16.msra.mxu0 %v1848
          %2104 = vmatprep.subr.bf16.mxu0 %v1855
          %2105 = vmatpush1.bf16.msra.mxu0 %v1854
          %2106 = vmatprep.subr.bf16.mxu0 %v1861
          %2107 = vmatpush1.bf16.msra.mxu0 %v1860
          %2108 = vmatprep.subr.bf16.mxu0 %v1867
          %2109 = vmatpush1.bf16.msra.mxu0 %v1866
          %2110 = vmatprep.subr.bf16.mxu0 %v1873
          %2111 = vmatpush1.bf16.msra.mxu0 %v1872
          %2112 = vmatprep.subr.bf16.mxu0 %v1879
          %2113 = vmatpush1.bf16.msra.mxu0 %v1878
          %2114 = vmatprep.subr.bf16.mxu0 %v1885
          %2115 = vmatpush1.bf16.msra.mxu0 %v1884
          %2116 = vmatprep.subr.bf16.mxu0 %v1891
          %2117 = vmatpush1.bf16.msra.mxu0 %v1890
          %2118 = vmatprep.subr.bf16.mxu0 %v1897
          %2119 = vmatpush1.bf16.msra.mxu0 %v1896
          %2120 = vmatprep.subr.bf16.mxu0 %v1903
          %2121 = vmatpush1.bf16.msra.mxu0 %v1902
          %2122 = vmatprep.subr.bf16.mxu0 %v1909
          %2123 = vmatpush1.bf16.msra.mxu0 %v1908
          %2124 = vmatprep.subr.bf16.mxu0 %v1915
          %2125 = vmatpush1.bf16.msra.mxu0 %v1914
          %2126 = vmatprep.mubr.bf16.mxu0 %v1529
          %2127 = vmatmul.mubr.bf16.gmra.mrb[0].mxu0 %v1528
          %v2128 = vpop.f32.mrb[0].mxu0
          %v2129 = vadd.f32 %v1504, %v2128
          %v2130 = vpop.f32.mrb[0].mxu0
          %v2131 = vadd.f32 %v1508, %v2130
          %v2132 = vpop.f32.mrb[0].mxu0
          %v2133 = vpop.f32.mrb[0].mxu0
          %2134 = vdwg.mxu0
          %v2135 = vmul.f32 %v2047, 0.125
          %v2136 = vmul.f32 %v2049, 0.125
          %v2137 = vld [vmem:[%s4] sm:$0xff]
          %v2138 = vld [vmem:[%s4 + $0x8] sm:$0xff]
          %v2139 = vld [vmem:[%s4 + $0x10] sm:$0xff]
          %v2140 = vld [vmem:[%s4 + $0x18] sm:$0xff]
          %v2141 = vld [vmem:[%s4 + $0x20] sm:$0xff]
          %v2142 = vld [vmem:[%s4 + $0x28] sm:$0xff]
          %v2143 = vld [vmem:[%s4 + $0x30] sm:$0xff]
          %v2144 = vld [vmem:[%s4 + $0x38] sm:$0xff]
          %v2145 = vadd.f32 %v1310, %v2137
          %v2146 = vadd.f32 %v1311, %v2138
          %v2147 = vadd.f32 %v1312, %v2139
          %v2148 = vadd.f32 %v1313, %v2140
          %v2149 = vadd.f32 %v1314, %v2141
          %v2150 = vadd.f32 %v1315, %v2142
          %v2151 = vadd.f32 %v1316, %v2143
          %v2152 = vadd.f32 %v1317, %v2144
          %v2153 = vadd.f32 %v1318, %v2137
          %v2154 = vadd.f32 %v1319, %v2138
          %v2155 = vadd.f32 %v1320, %v2139
          %v2156 = vadd.f32 %v1321, %v2140
          %v2157 = vadd.f32 %v1322, %v2141
          %v2158 = vadd.f32 %v1323, %v2142
          %v2159 = vadd.f32 %v1324, %v2143
          %v2160 = vadd.f32 %v1325, %v2144
          %v2161 = vpack.c.bf16 %v2147, %v2145
          %v2162 = vpack.c.bf16 %v2148, %v2146
          %v2163 = vpack.c.bf16 %v2151, %v2149
          %v2164 = vpack.c.bf16 %v2152, %v2150
          %v2165 = vpack.c.bf16 %v2155, %v2153
          %v2166 = vpack.c.bf16 %v2156, %v2154
          %v2167 = vpack.c.bf16 %v2159, %v2157
          %v2168 = vpack.c.bf16 %v2160, %v2158
          %2169 = vmatprep.subr.bf16.mxu0 %v1823
          %2170 = vmatpush1.bf16.msra.mxu0 %v1822
          %2171 = vmatprep.subr.bf16.mxu0 %v1829
          %2172 = vmatpush1.bf16.msra.mxu0 %v1828
          %2173 = vmatprep.subr.bf16.mxu0 %v1835
          %2174 = vmatpush1.bf16.msra.mxu0 %v1834
          %2175 = vmatprep.subr.bf16.mxu0 %v1841
          %2176 = vmatpush1.bf16.msra.mxu0 %v1840
          %2177 = vmatprep.subr.bf16.mxu0 %v1847
          %2178 = vmatpush1.bf16.msra.mxu0 %v1846
          %2179 = vmatprep.subr.bf16.mxu0 %v1853
          %2180 = vmatpush1.bf16.msra.mxu0 %v1852
          %2181 = vmatprep.subr.bf16.mxu0 %v1859
          %2182 = vmatpush1.bf16.msra.mxu0 %v1858
          %2183 = vmatprep.subr.bf16.mxu0 %v1865
          %2184 = vmatpush1.bf16.msra.mxu0 %v1864
          %2185 = vmatprep.subr.bf16.mxu0 %v1871
          %2186 = vmatpush1.bf16.msra.mxu0 %v1870
          %2187 = vmatprep.subr.bf16.mxu0 %v1877
          %2188 = vmatpush1.bf16.msra.mxu0 %v1876
          %2189 = vmatprep.subr.bf16.mxu0 %v1883
          %2190 = vmatpush1.bf16.msra.mxu0 %v1882
          %2191 = vmatprep.subr.bf16.mxu0 %v1889
          %2192 = vmatpush1.bf16.msra.mxu0 %v1888
          %2193 = vmatprep.subr.bf16.mxu0 %v1895
          %2194 = vmatpush1.bf16.msra.mxu0 %v1894
          %2195 = vmatprep.subr.bf16.mxu0 %v1901
          %2196 = vmatpush1.bf16.msra.mxu0 %v1900
          %2197 = vmatprep.subr.bf16.mxu0 %v1907
          %2198 = vmatpush1.bf16.msra.mxu0 %v1906
          %2199 = vmatprep.subr.bf16.mxu0 %v1913
          %2200 = vmatpush1.bf16.msra.mxu0 %v1912
          %2201 = vmatprep.mubr.bf16.mxu0 %v2162
          %2202 = vmatmul.mubr.bf16.gmra.mrb[0].mxu0 %v2161
          %v2203 = vpop.f32.mrb[0].mxu0
          %v2204 = vadd.f32 %v1496, %v2203
          %v2205 = vpop.f32.mrb[0].mxu0
          %v2206 = vadd.f32 %v1500, %v2205
          %v2207 = vpop.f32.mrb[0].mxu0
          %v2208 = vadd.f32 %v1496, %v2207
          %v2209 = vpop.f32.mrb[0].mxu0
          %v2210 = vadd.f32 %v1500, %v2209
          %2211 = vmatprep.mubr.bf16.mxu0 %v2164
          %2212 = vmatmul.mubr.bf16.gmra.mrb[0].mxu0 %v2163
          %v2213 = vpop.f32.mrb[0].mxu0
          %v2214 = vadd.f32 %v1496, %v2213
          %v2215 = vpop.f32.mrb[0].mxu0
          %v2216 = vadd.f32 %v1500, %v2215
          %v2217 = vpop.f32.mrb[0].mxu0
          %v2218 = vadd.f32 %v1496, %v2217
          %v2219 = vpop.f32.mrb[0].mxu0
          %v2220 = vadd.f32 %v1500, %v2219
          %2221 = vmatprep.mubr.bf16.mxu0 %v2166
          %2222 = vmatmul.mubr.bf16.gmra.mrb[0].mxu0 %v2165
          %v2223 = vpop.f32.mrb[0].mxu0
          %v2224 = vadd.f32 %v1496, %v2223
          %v2225 = vpop.f32.mrb[0].mxu0
          %v2226 = vadd.f32 %v1500, %v2225
          %v2227 = vpop.f32.mrb[0].mxu0
          %v2228 = vadd.f32 %v1496, %v2227
          %v2229 = vpop.f32.mrb[0].mxu0
          %v2230 = vadd.f32 %v1500, %v2229
          %2231 = vmatprep.mubr.bf16.mxu0 %v2168
          %2232 = vmatmul.mubr.bf16.gmra.mrb[0].mxu0 %v2167
          %v2233 = vpop.f32.mrb[0].mxu0
          %v2234 = vadd.f32 %v1496, %v2233
          %v2235 = vpop.f32.mrb[0].mxu0
          %v2236 = vadd.f32 %v1500, %v2235
          %v2237 = vpop.f32.mrb[0].mxu0
          %v2238 = vadd.f32 %v1496, %v2237
          %v2239 = vpop.f32.mrb[0].mxu0
          %v2240 = vadd.f32 %v1500, %v2239
          %2241 = vdwg.mxu0
          %2242 = vmatprep.subr.bf16.mxu0 %v1825
          %2243 = vmatpush1.bf16.msra.mxu0 %v1824
          %2244 = vmatprep.subr.bf16.mxu0 %v1831
          %2245 = vmatpush1.bf16.msra.mxu0 %v1830
          %2246 = vmatprep.subr.bf16.mxu0 %v1837
          %2247 = vmatpush1.bf16.msra.mxu0 %v1836
          %2248 = vmatprep.subr.bf16.mxu0 %v1843
          %2249 = vmatpush1.bf16.msra.mxu0 %v1842
          %2250 = vmatprep.subr.bf16.mxu0 %v1849
          %2251 = vmatpush1.bf16.msra.mxu0 %v1848
          %2252 = vmatprep.subr.bf16.mxu0 %v1855
          %2253 = vmatpush1.bf16.msra.mxu0 %v1854
          %2254 = vmatprep.subr.bf16.mxu0 %v1861
          %2255 = vmatpush1.bf16.msra.mxu0 %v1860
          %2256 = vmatprep.subr.bf16.mxu0 %v1867
          %2257 = vmatpush1.bf16.msra.mxu0 %v1866
          %2258 = vmatprep.subr.bf16.mxu0 %v1873
          %2259 = vmatpush1.bf16.msra.mxu0 %v1872
          %2260 = vmatprep.subr.bf16.mxu0 %v1879
          %2261 = vmatpush1.bf16.msra.mxu0 %v1878
          %2262 = vmatprep.subr.bf16.mxu0 %v1885
          %2263 = vmatpush1.bf16.msra.mxu0 %v1884
          %2264 = vmatprep.subr.bf16.mxu0 %v1891
          %2265 = vmatpush1.bf16.msra.mxu0 %v1890
          %2266 = vmatprep.subr.bf16.mxu0 %v1897
          %2267 = vmatpush1.bf16.msra.mxu0 %v1896
          %2268 = vmatprep.subr.bf16.mxu0 %v1903
          %2269 = vmatpush1.bf16.msra.mxu0 %v1902
          %2270 = vmatprep.subr.bf16.mxu0 %v1909
          %2271 = vmatpush1.bf16.msra.mxu0 %v1908
          %2272 = vmatprep.subr.bf16.mxu0 %v1915
          %2273 = vmatpush1.bf16.msra.mxu0 %v1914
          %2274 = vmatprep.mubr.bf16.mxu0 %v2162
          %2275 = vmatmul.mubr.bf16.gmra.mrb[0].mxu0 %v2161
          %v2276 = vpop.f32.mrb[0].mxu0
          %v2277 = vadd.f32 %v1504, %v2276
          %v2278 = vpop.f32.mrb[0].mxu0
          %v2279 = vadd.f32 %v1508, %v2278
          %v2280 = vpop.f32.mrb[0].mxu0
          %v2281 = vadd.f32 %v1504, %v2280
          %v2282 = vpop.f32.mrb[0].mxu0
          %v2283 = vadd.f32 %v1508, %v2282
          %2284 = vmatprep.mubr.bf16.mxu0 %v2164
          %2285 = vmatmul.mubr.bf16.gmra.mrb[0].mxu0 %v2163
          %v2286 = vpop.f32.mrb[0].mxu0
          %v2287 = vadd.f32 %v1504, %v2286
          %v2288 = vpop.f32.mrb[0].mxu0
          %v2289 = vadd.f32 %v1508, %v2288
          %v2290 = vpop.f32.mrb[0].mxu0
          %v2291 = vadd.f32 %v1504, %v2290
          %v2292 = vpop.f32.mrb[0].mxu0
          %v2293 = vadd.f32 %v1508, %v2292
          %2294 = vmatprep.mubr.bf16.mxu0 %v2166
          %2295 = vmatmul.mubr.bf16.gmra.mrb[0].mxu0 %v2165
          %v2296 = vpop.f32.mrb[0].mxu0
          %v2297 = vadd.f32 %v1504, %v2296
          %v2298 = vpop.f32.mrb[0].mxu0
          %v2299 = vadd.f32 %v1508, %v2298
          %v2300 = vpop.f32.mrb[0].mxu0
          %v2301 = vadd.f32 %v1504, %v2300
          %v2302 = vpop.f32.mrb[0].mxu0
          %v2303 = vadd.f32 %v1508, %v2302
          %2304 = vmatprep.mubr.bf16.mxu0 %v2168
          %2305 = vmatmul.mubr.bf16.gmra.mrb[0].mxu0 %v2167
          %v2306 = vpop.f32.mrb[0].mxu0
          %v2307 = vadd.f32 %v1504, %v2306
          %v2308 = vpop.f32.mrb[0].mxu0
          %v2309 = vadd.f32 %v1508, %v2308
          %v2310 = vpop.f32.mrb[0].mxu0
          %v2311 = vadd.f32 %v1504, %v2310
          %v2312 = vpop.f32.mrb[0].mxu0
          %v2313 = vadd.f32 %v1508, %v2312
          %2314 = vdwg.mxu0
          %v2317 = vcombine.low %v2135, %v2136
          %v2319 = vunpack.c.l.s4 1966171168
          %v2320 = vunpack.c.0.s8 %v2319
          %v2321 = vlaneseq
          %v2322 = vshrl.u32 %v2321, 7
          %v2323 = vsub.s32 %v2320, %v2322
          %v2324 = vrot.slane %v2317, %v2323
          %v2325 = vcombine.high %v2324, %v2324
          %v2327 = vunpack.c.l.s4 1966171168
          %v2328 = vunpack.c.0.s8 %v2327
          %v2329 = vlaneseq
          %v2330 = vshrl.u32 %v2329, 7
          %v2331 = vsub.s32 %v2328, %v2330
          %v2332 = vrot.slane %v2324, %v2331
          %v2334 = vunpack.c.l.s4 1966171168
          %v2335 = vunpack.c.0.s8 %v2334
          %v2336 = vlaneseq
          %v2337 = vshrl.u32 %v2336, 7
          %v2338 = vsub.s32 %v2335, %v2337
          %v2339 = vrot.slane %v2325, %v2338
          %v2340 = vlaneseq
          %v2341 = vshrl.u32 %v2340, 7
          %v2342 = vsub.s32 0, %v2341
          %v2343 = vrot.slane %v2332, %v2342
          %v2344 = vlaneseq
          %v2345 = vshrl.u32 %v2344, 7
          %v2346 = vsub.s32 1, %v2345
          %v2347 = vrot.slane %v2332, %v2346
          %v2348 = vlaneseq
          %v2349 = vshrl.u32 %v2348, 7
          %v2350 = vsub.s32 0, %v2349
          %v2351 = vrot.slane %v2339, %v2350
          %v2352 = vlaneseq
          %v2353 = vshrl.u32 %v2352, 7
          %v2354 = vsub.s32 1, %v2353
          %v2355 = vrot.slane %v2339, %v2354
          %v2360 = vmul.f32 %v2204, %v2343
          %v2361 = vmul.f32 %v2206, %v2347
          %v2362 = vmul.f32 %v2208, %v2343
          %v2363 = vmul.f32 %v2210, %v2347
          %v2364 = vmul.f32 %v2214, %v2343
          %v2365 = vmul.f32 %v2216, %v2347
          %v2366 = vmul.f32 %v2218, %v2343
          %v2367 = vmul.f32 %v2220, %v2347
          %v2368 = vmul.f32 %v2224, %v2351
          %v2369 = vmul.f32 %v2226, %v2355
          %v2370 = vmul.f32 %v2228, %v2351
          %v2371 = vmul.f32 %v2230, %v2355
          %v2372 = vmul.f32 %v2234, %v2351
          %v2373 = vmul.f32 %v2236, %v2355
          %v2374 = vmul.f32 %v2238, %v2351
          %v2375 = vmul.f32 %v2240, %v2355
          %v2376 = vld [vmem:[%s7] sm:$0xff]
          %v2377 = vld [vmem:[%s7 + $0x8] sm:$0xff]
          %v2378 = vld [vmem:[%s7 + $0x10] sm:$0xff]
          %v2379 = vld [vmem:[%s7 + $0x18] sm:$0xff]
          %v2380 = vld [vmem:[%s7 + $0x20] sm:$0xff]
          %v2381 = vld [vmem:[%s7 + $0x28] sm:$0xff]
          %v2382 = vld [vmem:[%s7 + $0x30] sm:$0xff]
          %v2383 = vld [vmem:[%s7 + $0x38] sm:$0xff]
          %v2384 = vld [vmem:[%s7 + $0x40] sm:$0xff]
          %v2385 = vld [vmem:[%s7 + $0x48] sm:$0xff]
          %v2386 = vld [vmem:[%s7 + $0x50] sm:$0xff]
          %v2387 = vld [vmem:[%s7 + $0x58] sm:$0xff]
          %v2388 = vld [vmem:[%s7 + $0x60] sm:$0xff]
          %v2389 = vld [vmem:[%s7 + $0x68] sm:$0xff]
          %v2390 = vld [vmem:[%s7 + $0x70] sm:$0xff]
          %v2391 = vld [vmem:[%s7 + $0x78] sm:$0xff]
          %v2392 = vld [vmem:[%s7 + $0x80] sm:$0xff]
          %v2393 = vld [vmem:[%s7 + $0x88] sm:$0xff]
          %v2394 = vld [vmem:[%s7 + $0x90] sm:$0xff]
          %v2395 = vld [vmem:[%s7 + $0x98] sm:$0xff]
          %v2396 = vld [vmem:[%s7 + $0xa0] sm:$0xff]
          %v2397 = vld [vmem:[%s7 + $0xa8] sm:$0xff]
          %v2398 = vld [vmem:[%s7 + $0xb0] sm:$0xff]
          %v2399 = vld [vmem:[%s7 + $0xb8] sm:$0xff]
          %v2400 = vld [vmem:[%s7 + $0xc0] sm:$0xff]
          %v2401 = vld [vmem:[%s7 + $0xc8] sm:$0xff]
          %v2402 = vld [vmem:[%s7 + $0xd0] sm:$0xff]
          %v2403 = vld [vmem:[%s7 + $0xd8] sm:$0xff]
          %v2404 = vld [vmem:[%s7 + $0xe0] sm:$0xff]
          %v2405 = vld [vmem:[%s7 + $0xe8] sm:$0xff]
          %v2406 = vld [vmem:[%s7 + $0xf0] sm:$0xff]
          %v2407 = vld [vmem:[%s7 + $0xf8] sm:$0xff]
          %v2408 = vld [vmem:[%s7 + $0x100] sm:$0xff]
          %v2409 = vld [vmem:[%s7 + $0x108] sm:$0xff]
          %v2410 = vld [vmem:[%s7 + $0x110] sm:$0xff]
          %v2411 = vld [vmem:[%s7 + $0x118] sm:$0xff]
          %v2412 = vld [vmem:[%s7 + $0x120] sm:$0xff]
          %v2413 = vld [vmem:[%s7 + $0x128] sm:$0xff]
          %v2414 = vld [vmem:[%s7 + $0x130] sm:$0xff]
          %v2415 = vld [vmem:[%s7 + $0x138] sm:$0xff]
          %v2416 = vld [vmem:[%s7 + $0x140] sm:$0xff]
          %v2417 = vld [vmem:[%s7 + $0x148] sm:$0xff]
          %v2418 = vld [vmem:[%s7 + $0x150] sm:$0xff]
          %v2419 = vld [vmem:[%s7 + $0x158] sm:$0xff]
          %v2420 = vld [vmem:[%s7 + $0x160] sm:$0xff]
          %v2421 = vld [vmem:[%s7 + $0x168] sm:$0xff]
          %v2422 = vld [vmem:[%s7 + $0x170] sm:$0xff]
          %v2423 = vld [vmem:[%s7 + $0x178] sm:$0xff]
          %v2424 = vld [vmem:[%s7 + $0x180] sm:$0xff]
          %v2425 = vld [vmem:[%s7 + $0x188] sm:$0xff]
          %v2426 = vld [vmem:[%s7 + $0x190] sm:$0xff]
          %v2427 = vld [vmem:[%s7 + $0x198] sm:$0xff]
          %v2428 = vld [vmem:[%s7 + $0x1a0] sm:$0xff]
          %v2429 = vld [vmem:[%s7 + $0x1a8] sm:$0xff]
          %v2430 = vld [vmem:[%s7 + $0x1b0] sm:$0xff]
          %v2431 = vld [vmem:[%s7 + $0x1b8] sm:$0xff]
          %v2432 = vld [vmem:[%s7 + $0x1c0] sm:$0xff]
          %v2433 = vld [vmem:[%s7 + $0x1c8] sm:$0xff]
          %v2434 = vld [vmem:[%s7 + $0x1d0] sm:$0xff]
          %v2435 = vld [vmem:[%s7 + $0x1d8] sm:$0xff]
          %v2436 = vld [vmem:[%s7 + $0x1e0] sm:$0xff]
          %v2437 = vld [vmem:[%s7 + $0x1e8] sm:$0xff]
          %v2438 = vld [vmem:[%s7 + $0x1f0] sm:$0xff]
          %v2439 = vld [vmem:[%s7 + $0x1f8] sm:$0xff]
          %2440 = vmatprep.subr.mxu0 %v2377
          %2441 = vmatpush1.msra.mxu0 %v2376
          %2442 = vmatprep.subr.mxu0 %v2379
          %2443 = vmatpush1.msra.mxu0 %v2378
          %2444 = vmatprep.subr.mxu0 %v2381
          %2445 = vmatpush1.msra.mxu0 %v2380
          %2446 = vmatprep.subr.mxu0 %v2383
          %2447 = vmatpush1.msra.mxu0 %v2382
          %2448 = vmatprep.subr.mxu0 %v2385
          %2449 = vmatpush1.msra.mxu0 %v2384
          %2450 = vmatprep.subr.mxu0 %v2387
          %2451 = vmatpush1.msra.mxu0 %v2386
          %2452 = vmatprep.subr.mxu0 %v2389
          %2453 = vmatpush1.msra.mxu0 %v2388
          %2454 = vmatprep.subr.mxu0 %v2391
          %2455 = vmatpush1.msra.mxu0 %v2390
          %2456 = vmatprep.subr.mxu0 %v2393
          %2457 = vmatpush1.msra.mxu0 %v2392
          %2458 = vmatprep.subr.mxu0 %v2395
          %2459 = vmatpush1.msra.mxu0 %v2394
          %2460 = vmatprep.subr.mxu0 %v2397
          %2461 = vmatpush1.msra.mxu0 %v2396
          %2462 = vmatprep.subr.mxu0 %v2399
          %2463 = vmatpush1.msra.mxu0 %v2398
          %2464 = vmatprep.subr.mxu0 %v2401
          %2465 = vmatpush1.msra.mxu0 %v2400
          %2466 = vmatprep.subr.mxu0 %v2403
          %2467 = vmatpush1.msra.mxu0 %v2402
          %2468 = vmatprep.subr.mxu0 %v2405
          %2469 = vmatpush1.msra.mxu0 %v2404
          %2470 = vmatprep.subr.mxu0 %v2407
          %2471 = vmatpush1.msra.mxu0 %v2406
          %2472 = vmatprep.subr.mxu0 %v2409
          %2473 = vmatpush1.msra.mxu0 %v2408
          %2474 = vmatprep.subr.mxu0 %v2411
          %2475 = vmatpush1.msra.mxu0 %v2410
          %2476 = vmatprep.subr.mxu0 %v2413
          %2477 = vmatpush1.msra.mxu0 %v2412
          %2478 = vmatprep.subr.mxu0 %v2415
          %2479 = vmatpush1.msra.mxu0 %v2414
          %2480 = vmatprep.subr.mxu0 %v2417
          %2481 = vmatpush1.msra.mxu0 %v2416
          %2482 = vmatprep.subr.mxu0 %v2419
          %2483 = vmatpush1.msra.mxu0 %v2418
          %2484 = vmatprep.subr.mxu0 %v2421
          %2485 = vmatpush1.msra.mxu0 %v2420
          %2486 = vmatprep.subr.mxu0 %v2423
          %2487 = vmatpush1.msra.mxu0 %v2422
          %2488 = vmatprep.subr.mxu0 %v2425
          %2489 = vmatpush1.msra.mxu0 %v2424
          %2490 = vmatprep.subr.mxu0 %v2427
          %2491 = vmatpush1.msra.mxu0 %v2426
          %2492 = vmatprep.subr.mxu0 %v2429
          %2493 = vmatpush1.msra.mxu0 %v2428
          %2494 = vmatprep.subr.mxu0 %v2431
          %2495 = vmatpush1.msra.mxu0 %v2430
          %2496 = vmatprep.subr.mxu0 %v2433
          %2497 = vmatpush1.msra.mxu0 %v2432
          %2498 = vmatprep.subr.mxu0 %v2435
          %2499 = vmatpush1.msra.mxu0 %v2434
          %2500 = vmatprep.subr.mxu0 %v2437
          %2501 = vmatpush1.msra.mxu0 %v2436
          %2502 = vmatprep.subr.mxu0 %v2439
          %2503 = vmatpush1.msra.mxu0 %v2438
          %2504 = vmatprep.mubr.f32.mxu0 %v2361
          %2505 = vmatmul.mubr.f32.gmra.mrb[0].mxu0 %v2360
          %v2506 = vpop.f32.mrb[0].mxu0
          %v2507 = vadd.f32 0.0, %v2506
          %v2508 = vpop.f32.mrb[0].mxu0
          %v2509 = vadd.f32 0.0, %v2508
          %2510 = vmatprep.mubr.f32.mxu0 %v2363
          %2511 = vmatmul.mubr.f32.gmra.mrb[0].mxu0 %v2362
          %v2512 = vpop.f32.mrb[0].mxu0
          %v2513 = vadd.f32 0.0, %v2512
          %v2514 = vpop.f32.mrb[0].mxu0
          %v2515 = vadd.f32 0.0, %v2514
          %2516 = vmatprep.mubr.f32.mxu0 %v2365
          %2517 = vmatmul.mubr.f32.gmra.mrb[0].mxu0 %v2364
          %v2518 = vpop.f32.mrb[0].mxu0
          %v2519 = vadd.f32 0.0, %v2518
          %v2520 = vpop.f32.mrb[0].mxu0
          %v2521 = vadd.f32 0.0, %v2520
          %2522 = vmatprep.mubr.f32.mxu0 %v2367
          %2523 = vmatmul.mubr.f32.gmra.mrb[0].mxu0 %v2366
          %v2524 = vpop.f32.mrb[0].mxu0
          %v2525 = vadd.f32 0.0, %v2524
          %v2526 = vpop.f32.mrb[0].mxu0
          %v2527 = vadd.f32 0.0, %v2526
          %2528 = vmatprep.mubr.f32.mxu0 %v2369
          %2529 = vmatmul.mubr.f32.gmra.mrb[0].mxu0 %v2368
          %v2530 = vpop.f32.mrb[0].mxu0
          %v2531 = vadd.f32 0.0, %v2530
          %v2532 = vpop.f32.mrb[0].mxu0
          %v2533 = vadd.f32 0.0, %v2532
          %2534 = vmatprep.mubr.f32.mxu0 %v2371
          %2535 = vmatmul.mubr.f32.gmra.mrb[0].mxu0 %v2370
          %v2536 = vpop.f32.mrb[0].mxu0
          %v2537 = vadd.f32 0.0, %v2536
          %v2538 = vpop.f32.mrb[0].mxu0
          %v2539 = vadd.f32 0.0, %v2538
          %2540 = vmatprep.mubr.f32.mxu0 %v2373
          %2541 = vmatmul.mubr.f32.gmra.mrb[0].mxu0 %v2372
          %v2542 = vpop.f32.mrb[0].mxu0
          %v2543 = vadd.f32 0.0, %v2542
          %v2544 = vpop.f32.mrb[0].mxu0
          %v2545 = vadd.f32 0.0, %v2544
          %2546 = vmatprep.mubr.f32.mxu0 %v2375
          %2547 = vmatmul.mubr.f32.gmra.mrb[0].mxu0 %v2374
          %v2548 = vpop.f32.mrb[0].mxu0
          %v2549 = vadd.f32 0.0, %v2548
          %v2550 = vpop.f32.mrb[0].mxu0
          %v2551 = vadd.f32 0.0, %v2550
          %2552 = vdwg.mxu0
          %v2553 = vmul.f32 %v2088, %v2135
          %v2554 = vmul.f32 %v2090, %v2136
          %2555 = vmatprep.subr.mxu0 %v2377
          %2556 = vmatpush1.msra.mxu0 %v2376
          %2557 = vmatprep.subr.mxu0 %v2379
          %2558 = vmatpush1.msra.mxu0 %v2378
          %2559 = vmatprep.subr.mxu0 %v2381
          %2560 = vmatpush1.msra.mxu0 %v2380
          %2561 = vmatprep.subr.mxu0 %v2383
          %2562 = vmatpush1.msra.mxu0 %v2382
          %2563 = vmatprep.subr.mxu0 %v2385
          %2564 = vmatpush1.msra.mxu0 %v2384
          %2565 = vmatprep.subr.mxu0 %v2387
          %2566 = vmatpush1.msra.mxu0 %v2386
          %2567 = vmatprep.subr.mxu0 %v2389
          %2568 = vmatpush1.msra.mxu0 %v2388
          %2569 = vmatprep.subr.mxu0 %v2391
          %2570 = vmatpush1.msra.mxu0 %v2390
          %2571 = vmatprep.subr.mxu0 %v2393
          %2572 = vmatpush1.msra.mxu0 %v2392
          %2573 = vmatprep.subr.mxu0 %v2395
          %2574 = vmatpush1.msra.mxu0 %v2394
          %2575 = vmatprep.subr.mxu0 %v2397
          %2576 = vmatpush1.msra.mxu0 %v2396
          %2577 = vmatprep.subr.mxu0 %v2399
          %2578 = vmatpush1.msra.mxu0 %v2398
          %2579 = vmatprep.subr.mxu0 %v2401
          %2580 = vmatpush1.msra.mxu0 %v2400
          %2581 = vmatprep.subr.mxu0 %v2403
          %2582 = vmatpush1.msra.mxu0 %v2402
          %2583 = vmatprep.subr.mxu0 %v2405
          %2584 = vmatpush1.msra.mxu0 %v2404
          %2585 = vmatprep.subr.mxu0 %v2407
          %2586 = vmatpush1.msra.mxu0 %v2406
          %2587 = vmatprep.subr.mxu0 %v2409
          %2588 = vmatpush1.msra.mxu0 %v2408
          %2589 = vmatprep.subr.mxu0 %v2411
          %2590 = vmatpush1.msra.mxu0 %v2410
          %2591 = vmatprep.subr.mxu0 %v2413
          %2592 = vmatpush1.msra.mxu0 %v2412
          %2593 = vmatprep.subr.mxu0 %v2415
          %2594 = vmatpush1.msra.mxu0 %v2414
          %2595 = vmatprep.subr.mxu0 %v2417
          %2596 = vmatpush1.msra.mxu0 %v2416
          %2597 = vmatprep.subr.mxu0 %v2419
          %2598 = vmatpush1.msra.mxu0 %v2418
          %2599 = vmatprep.subr.mxu0 %v2421
          %2600 = vmatpush1.msra.mxu0 %v2420
          %2601 = vmatprep.subr.mxu0 %v2423
          %2602 = vmatpush1.msra.mxu0 %v2422
          %2603 = vmatprep.subr.mxu0 %v2425
          %2604 = vmatpush1.msra.mxu0 %v2424
          %2605 = vmatprep.subr.mxu0 %v2427
          %2606 = vmatpush1.msra.mxu0 %v2426
          %2607 = vmatprep.subr.mxu0 %v2429
          %2608 = vmatpush1.msra.mxu0 %v2428
          %2609 = vmatprep.subr.mxu0 %v2431
          %2610 = vmatpush1.msra.mxu0 %v2430
          %2611 = vmatprep.subr.mxu0 %v2433
          %2612 = vmatpush1.msra.mxu0 %v2432
          %2613 = vmatprep.subr.mxu0 %v2435
          %2614 = vmatpush1.msra.mxu0 %v2434
          %2615 = vmatprep.subr.mxu0 %v2437
          %2616 = vmatpush1.msra.mxu0 %v2436
          %2617 = vmatprep.subr.mxu0 %v2439
          %2618 = vmatpush1.msra.mxu0 %v2438
          %2619 = vmatprep.mubr.f32.mxu0 %v2554
          %2620 = vmatmul.mubr.f32.gmra.mrb[0].mxu0 %v2553
          %v2621 = vpop.f32.mrb[0].mxu0
          %v2622 = vadd.f32 0.0, %v2621
          %v2623 = vpop.f32.mrb[0].mxu0
          %v2624 = vadd.f32 0.0, %v2623
          %2625 = vdwg.mxu0
          %v2626 = vmax.f32 %v2507, %v2513
          %v2627 = vmax.f32 %v2626, %v2519
          %v2628 = vmax.f32 %v2627, %v2525
          %v2629 = vrot.slane %v2628, 4
          %v2630 = vmax.f32 %v2628, %v2629
          %v2631 = vrot.slane %v2630, 2
          %v2632 = vmax.f32 %v2630, %v2631
          %v2633 = vrot.slane %v2632, 1
          %v2634 = vmax.f32 %v2632, %v2633
          %v2635 = vmax.f32 %v2509, %v2515
          %v2636 = vmax.f32 %v2635, %v2521
          %v2637 = vmax.f32 %v2636, %v2527
          %v2638 = vrot.slane %v2637, 4
          %v2639 = vmax.f32 %v2637, %v2638
          %v2640 = vrot.slane %v2639, 2
          %v2641 = vmax.f32 %v2639, %v2640
          %v2642 = vrot.slane %v2641, 1
          %v2643 = vmax.f32 %v2641, %v2642
          %v2644 = vmax.f32 %v2531, %v2537
          %v2645 = vmax.f32 %v2644, %v2543
          %v2646 = vmax.f32 %v2645, %v2549
          %v2647 = vrot.slane %v2646, 4
          %v2648 = vmax.f32 %v2646, %v2647
          %v2649 = vrot.slane %v2648, 2
          %v2650 = vmax.f32 %v2648, %v2649
          %v2651 = vrot.slane %v2650, 1
          %v2652 = vmax.f32 %v2650, %v2651
          %v2653 = vmax.f32 %v2533, %v2539
          %v2654 = vmax.f32 %v2653, %v2545
          %v2655 = vmax.f32 %v2654, %v2551
          %v2656 = vrot.slane %v2655, 4
          %v2657 = vmax.f32 %v2655, %v2656
          %v2658 = vrot.slane %v2657, 2
          %v2659 = vmax.f32 %v2657, %v2658
          %v2660 = vrot.slane %v2659, 1
          %v2661 = vmax.f32 %v2659, %v2660
          %v2664 = vrot.slane %v2622, 1
          %v2665 = vrot.slane %v2624, 1
          %v2670 = vmax.f32 %v2634, %v2622
          %v2671 = vmax.f32 %v2643, %v2624
          %v2672 = vmax.f32 %v2652, %v2664
          %v2673 = vmax.f32 %v2661, %v2665
          %v2674 = vlaneseq
          %v2675 = vshrl.u32 %v2674, 7
          %v2676 = vsub.s32 0, %v2675
          %v2677 = vrot.slane %v2670, %v2676
          %v2678 = vlaneseq
          %v2679 = vshrl.u32 %v2678, 7
          %v2680 = vsub.s32 0, %v2679
          %v2681 = vrot.slane %v2671, %v2680
          %v2682 = vlaneseq
          %v2683 = vshrl.u32 %v2682, 7
          %v2684 = vsub.s32 0, %v2683
          %v2685 = vrot.slane %v2672, %v2684
          %v2686 = vlaneseq
          %v2687 = vshrl.u32 %v2686, 7
          %v2688 = vsub.s32 0, %v2687
          %v2689 = vrot.slane %v2673, %v2688
          %v2690 = vsub.f32 %v2507, %v2677
          %v2691 = vsub.f32 %v2509, %v2681
          %v2692 = vsub.f32 %v2513, %v2677
          %v2693 = vsub.f32 %v2515, %v2681
          %v2694 = vsub.f32 %v2519, %v2677
          %v2695 = vsub.f32 %v2521, %v2681
          %v2696 = vsub.f32 %v2525, %v2677
          %v2697 = vsub.f32 %v2527, %v2681
          %v2698 = vsub.f32 %v2531, %v2685
          %v2699 = vsub.f32 %v2533, %v2689
          %v2700 = vsub.f32 %v2537, %v2685
          %v2701 = vsub.f32 %v2539, %v2689
          %v2702 = vsub.f32 %v2543, %v2685
          %v2703 = vsub.f32 %v2545, %v2689
          %v2704 = vsub.f32 %v2549, %v2685
          %v2705 = vsub.f32 %v2551, %v2689
          %v2706 = vmul.f32 %v2690, 1.442695
          %v2707 = vpow.pop %v2706
          %v2708 = vmul.f32 %v2691, 1.442695
          %v2709 = vpow.pop %v2708
          %v2710 = vmul.f32 %v2692, 1.442695
          %v2711 = vpow.pop %v2710
          %v2712 = vmul.f32 %v2693, 1.442695
          %v2713 = vpow.pop %v2712
          %v2714 = vmul.f32 %v2694, 1.442695
          %v2715 = vpow.pop %v2714
          %v2716 = vmul.f32 %v2695, 1.442695
          %v2717 = vpow.pop %v2716
          %v2718 = vmul.f32 %v2696, 1.442695
          %v2719 = vpow.pop %v2718
          %v2720 = vmul.f32 %v2697, 1.442695
          %v2721 = vpow.pop %v2720
          %v2722 = vmul.f32 %v2698, 1.442695
          %v2723 = vpow.pop %v2722
          %v2724 = vmul.f32 %v2699, 1.442695
          %v2725 = vpow.pop %v2724
          %v2726 = vmul.f32 %v2700, 1.442695
          %v2727 = vpow.pop %v2726
          %v2728 = vmul.f32 %v2701, 1.442695
          %v2729 = vpow.pop %v2728
          %v2730 = vmul.f32 %v2702, 1.442695
          %v2731 = vpow.pop %v2730
          %v2732 = vmul.f32 %v2703, 1.442695
          %v2733 = vpow.pop %v2732
          %v2734 = vmul.f32 %v2704, 1.442695
          %v2735 = vpow.pop %v2734
          %v2736 = vmul.f32 %v2705, 1.442695
          %v2737 = vpow.pop %v2736
          %v2742 = vrot.slane %v2672, 7
          %v2743 = vsel %vm1524, %v2742, %v2670
          %v2744 = vrot.slane %v2673, 7
          %v2745 = vsel %vm1524, %v2744, %v2671
          %v2748 = vsub.f32 %v2622, %v2743
          %v2749 = vsub.f32 %v2624, %v2745
          %v2750 = vmul.f32 %v2748, 1.442695
          %v2751 = vpow.pop %v2750
          %v2752 = vmul.f32 %v2749, 1.442695
          %v2753 = vpow.pop %v2752
          %v2754 = vadd.f32 %v2707, %v2711
          %v2755 = vadd.f32 %v2754, %v2715
          %v2756 = vadd.f32 %v2755, %v2719
          %v2757 = vrot.slane %v2756, 4
          %v2758 = vadd.f32 %v2756, %v2757
          %v2759 = vrot.slane %v2758, 2
          %v2760 = vadd.f32 %v2758, %v2759
          %v2761 = vrot.slane %v2760, 1
          %v2762 = vadd.f32 %v2760, %v2761
          %v2763 = vadd.f32 %v2709, %v2713
          %v2764 = vadd.f32 %v2763, %v2717
          %v2765 = vadd.f32 %v2764, %v2721
          %v2766 = vrot.slane %v2765, 4
          %v2767 = vadd.f32 %v2765, %v2766
          %v2768 = vrot.slane %v2767, 2
          %v2769 = vadd.f32 %v2767, %v2768
          %v2770 = vrot.slane %v2769, 1
          %v2771 = vadd.f32 %v2769, %v2770
          %v2772 = vadd.f32 %v2723, %v2727
          %v2773 = vadd.f32 %v2772, %v2731
          %v2774 = vadd.f32 %v2773, %v2735
          %v2775 = vrot.slane %v2774, 4
          %v2776 = vadd.f32 %v2774, %v2775
          %v2777 = vrot.slane %v2776, 2
          %v2778 = vadd.f32 %v2776, %v2777
          %v2779 = vrot.slane %v2778, 1
          %v2780 = vadd.f32 %v2778, %v2779
          %v2781 = vadd.f32 %v2725, %v2729
          %v2782 = vadd.f32 %v2781, %v2733
          %v2783 = vadd.f32 %v2782, %v2737
          %v2784 = vrot.slane %v2783, 4
          %v2785 = vadd.f32 %v2783, %v2784
          %v2786 = vrot.slane %v2785, 2
          %v2787 = vadd.f32 %v2785, %v2786
          %v2788 = vrot.slane %v2787, 1
          %v2789 = vadd.f32 %v2787, %v2788
          %v2792 = vrot.slane %v2751, 1
          %v2793 = vrot.slane %v2753, 1
          %v2798 = vadd.f32 %v2762, %v2751
          %v2799 = vadd.f32 %v2771, %v2753
          %v2800 = vadd.f32 %v2780, %v2792
          %v2801 = vadd.f32 %v2789, %v2793
          %v2802 = vmul.f32 %v2707, %v2277
          %v2803 = vmul.f32 %v2709, %v2279
          %v2804 = vmul.f32 %v2711, %v2281
          %v2805 = vmul.f32 %v2713, %v2283
          %v2806 = vmul.f32 %v2715, %v2287
          %v2807 = vmul.f32 %v2717, %v2289
          %v2808 = vmul.f32 %v2719, %v2291
          %v2809 = vmul.f32 %v2721, %v2293
          %v2810 = vmul.f32 %v2723, %v2297
          %v2811 = vmul.f32 %v2725, %v2299
          %v2812 = vmul.f32 %v2727, %v2301
          %v2813 = vmul.f32 %v2729, %v2303
          %v2814 = vmul.f32 %v2731, %v2307
          %v2815 = vmul.f32 %v2733, %v2309
          %v2816 = vmul.f32 %v2735, %v2311
          %v2817 = vmul.f32 %v2737, %v2313
          %v2818 = vadd.f32 %v2802, %v2804
          %v2819 = vadd.f32 %v2818, %v2806
          %v2820 = vadd.f32 %v2819, %v2808
          %v2821 = vrot.slane %v2820, 4
          %v2822 = vadd.f32 %v2820, %v2821
          %v2823 = vrot.slane %v2822, 2
          %v2824 = vadd.f32 %v2822, %v2823
          %v2825 = vrot.slane %v2824, 1
          %v2826 = vadd.f32 %v2824, %v2825
          %v2827 = vadd.f32 %v2803, %v2805
          %v2828 = vadd.f32 %v2827, %v2807
          %v2829 = vadd.f32 %v2828, %v2809
          %v2830 = vrot.slane %v2829, 4
          %v2831 = vadd.f32 %v2829, %v2830
          %v2832 = vrot.slane %v2831, 2
          %v2833 = vadd.f32 %v2831, %v2832
          %v2834 = vrot.slane %v2833, 1
          %v2835 = vadd.f32 %v2833, %v2834
          %v2836 = vadd.f32 %v2810, %v2812
          %v2837 = vadd.f32 %v2836, %v2814
          %v2838 = vadd.f32 %v2837, %v2816
          %v2839 = vrot.slane %v2838, 4
          %v2840 = vadd.f32 %v2838, %v2839
          %v2841 = vrot.slane %v2840, 2
          %v2842 = vadd.f32 %v2840, %v2841
          %v2843 = vrot.slane %v2842, 1
          %v2844 = vadd.f32 %v2842, %v2843
          %v2845 = vadd.f32 %v2811, %v2813
          %v2846 = vadd.f32 %v2845, %v2815
          %v2847 = vadd.f32 %v2846, %v2817
          %v2848 = vrot.slane %v2847, 4
          %v2849 = vadd.f32 %v2847, %v2848
          %v2850 = vrot.slane %v2849, 2
          %v2851 = vadd.f32 %v2849, %v2850
          %v2852 = vrot.slane %v2851, 1
          %v2853 = vadd.f32 %v2851, %v2852
          %v2854 = vmul.f32 %v2751, %v2129
          %v2855 = vmul.f32 %v2753, %v2131
          %v2858 = vrot.slane %v2854, 1
          %v2859 = vrot.slane %v2855, 1
          %v2864 = vadd.f32 %v2826, %v2854
          %v2865 = vadd.f32 %v2835, %v2855
          %v2866 = vadd.f32 %v2844, %v2858
          %v2867 = vadd.f32 %v2853, %v2859
          %v2868 = vrcp.pop %v2798
          %v2869 = vmul.f32 %v2864, %v2868
          %v2870 = vrcp.pop %v2799
          %v2871 = vmul.f32 %v2865, %v2870
          %v2872 = vrcp.pop %v2800
          %v2873 = vmul.f32 %v2866, %v2872
          %v2874 = vrcp.pop %v2801
          %v2875 = vmul.f32 %v2867, %v2874
          %v2876 = vpack.c.bf16 %v2869, %v2869
          %v2877 = vpack.c.bf16 %v2871, %v2871
          %v2878 = vpack.c.bf16 %v2873, %v2873
          %v2879 = vpack.c.bf16 %v2875, %v2875
          %v2880 = vld [vmem:[%s8] sm:$0xff]
          %v2881 = vld [vmem:[%s8 + $0x8] sm:$0xff]
          %v2882 = vld [vmem:[%s8 + $0x10] sm:$0xff]
          %v2883 = vld [vmem:[%s8 + $0x18] sm:$0xff]
          %v2884 = vld [vmem:[%s8 + $0x20] sm:$0xff]
          %v2885 = vld [vmem:[%s8 + $0x28] sm:$0xff]
          %v2886 = vld [vmem:[%s8 + $0x30] sm:$0xff]
          %v2887 = vld [vmem:[%s8 + $0x38] sm:$0xff]
          %v2888 = vld [vmem:[%s8 + $0x40] sm:$0xff]
          %v2889 = vld [vmem:[%s8 + $0x48] sm:$0xff]
          %v2890 = vld [vmem:[%s8 + $0x50] sm:$0xff]
          %v2891 = vld [vmem:[%s8 + $0x58] sm:$0xff]
          %v2892 = vld [vmem:[%s8 + $0x60] sm:$0xff]
          %v2893 = vld [vmem:[%s8 + $0x68] sm:$0xff]
          %v2894 = vld [vmem:[%s8 + $0x70] sm:$0xff]
          %v2895 = vld [vmem:[%s8 + $0x78] sm:$0xff]
          %v2896 = vld [vmem:[%s8 + $0x80] sm:$0xff]
          %v2897 = vld [vmem:[%s8 + $0x88] sm:$0xff]
          %v2898 = vld [vmem:[%s8 + $0x90] sm:$0xff]
          %v2899 = vld [vmem:[%s8 + $0x98] sm:$0xff]
          %v2900 = vld [vmem:[%s8 + $0xa0] sm:$0xff]
          %v2901 = vld [vmem:[%s8 + $0xa8] sm:$0xff]
          %v2902 = vld [vmem:[%s8 + $0xb0] sm:$0xff]
          %v2903 = vld [vmem:[%s8 + $0xb8] sm:$0xff]
          %v2904 = vld [vmem:[%s8 + $0xc0] sm:$0xff]
          %v2905 = vld [vmem:[%s8 + $0xc8] sm:$0xff]
          %v2906 = vld [vmem:[%s8 + $0xd0] sm:$0xff]
          %v2907 = vld [vmem:[%s8 + $0xd8] sm:$0xff]
          %v2908 = vld [vmem:[%s8 + $0xe0] sm:$0xff]
          %v2909 = vld [vmem:[%s8 + $0xe8] sm:$0xff]
          %v2910 = vld [vmem:[%s8 + $0xf0] sm:$0xff]
          %v2911 = vld [vmem:[%s8 + $0xf8] sm:$0xff]
          %v2912 = vld [vmem:[%s9] sm:$0x3]
          %v2914 = vlaneseq
          %v2915 = vshrl.u32 %v2914, 7
          %v2916 = vsub.s32 0, %v2915
          %v2917 = vrot.slane %v2912, %v2916
          %v2918 = vlaneseq
          %v2919 = vshrl.u32 %v2918, 7
          %v2920 = vsub.s32 1, %v2919
          %v2921 = vrot.slane %v2912, %v2920
          %v2928 = vunpack.c.l.b16 %v2876
          %v2929 = vunpack.c.l.b16 %v2877
          %v2930 = vunpack.c.l.b16 %v2878
          %v2931 = vunpack.c.l.b16 %v2879
          %v2932 = vrot.slane %v2930, 7
          %v2933 = vsel %vm1524, %v2932, %v2928
          %v2934 = vrot.slane %v2931, 7
          %v2935 = vsel %vm1524, %v2934, %v2929
          %v2936 = vpack.c.b16 %v2933, %v2933
          %v2937 = vpack.c.b16 %v2935, %v2935
          %v2972 = vunpack.c.l.b16 %v2880
          %v2973 = vunpack.c.h.b16 %v2880
          %v2974 = vunpack.c.l.b16 %v2881
          %v2975 = vunpack.c.h.b16 %v2881
          %v2976 = vunpack.c.l.b16 %v2882
          %v2977 = vunpack.c.h.b16 %v2882
          %v2978 = vunpack.c.l.b16 %v2883
          %v2979 = vunpack.c.h.b16 %v2883
          %v2980 = vunpack.c.l.b16 %v2884
          %v2981 = vunpack.c.h.b16 %v2884
          %v2982 = vunpack.c.l.b16 %v2885
          %v2983 = vunpack.c.h.b16 %v2885
          %v2984 = vunpack.c.l.b16 %v2886
          %v2985 = vunpack.c.h.b16 %v2886
          %v2986 = vunpack.c.l.b16 %v2887
          %v2987 = vunpack.c.h.b16 %v2887
          %v2988 = vunpack.c.l.b16 %v2888
          %v2989 = vunpack.c.h.b16 %v2888
          %v2990 = vunpack.c.l.b16 %v2889
          %v2991 = vunpack.c.h.b16 %v2889
          %v2992 = vunpack.c.l.b16 %v2890
          %v2993 = vunpack.c.h.b16 %v2890
          %v2994 = vunpack.c.l.b16 %v2891
          %v2995 = vunpack.c.h.b16 %v2891
          %v2996 = vunpack.c.l.b16 %v2892
          %v2997 = vunpack.c.h.b16 %v2892
          %v2998 = vunpack.c.l.b16 %v2893
          %v2999 = vunpack.c.h.b16 %v2893
          %v3000 = vunpack.c.l.b16 %v2894
          %v3001 = vunpack.c.h.b16 %v2894
          %v3002 = vunpack.c.l.b16 %v2895
          %v3003 = vunpack.c.h.b16 %v2895
          %v3004 = vunpack.c.l.b16 %v2896
          %v3005 = vunpack.c.h.b16 %v2896
          %v3006 = vunpack.c.l.b16 %v2897
          %v3007 = vunpack.c.h.b16 %v2897
          %v3008 = vunpack.c.l.b16 %v2898
          %v3009 = vunpack.c.h.b16 %v2898
          %v3010 = vunpack.c.l.b16 %v2899
          %v3011 = vunpack.c.h.b16 %v2899
          %v3012 = vunpack.c.l.b16 %v2900
          %v3013 = vunpack.c.h.b16 %v2900
          %v3014 = vunpack.c.l.b16 %v2901
          %v3015 = vunpack.c.h.b16 %v2901
          %v3016 = vunpack.c.l.b16 %v2902
          %v3017 = vunpack.c.h.b16 %v2902
          %v3018 = vunpack.c.l.b16 %v2903
          %v3019 = vunpack.c.h.b16 %v2903
          %v3020 = vunpack.c.l.b16 %v2904
          %v3021 = vunpack.c.h.b16 %v2904
          %v3022 = vunpack.c.l.b16 %v2905
          %v3023 = vunpack.c.h.b16 %v2905
          %v3024 = vunpack.c.l.b16 %v2906
          %v3025 = vunpack.c.h.b16 %v2906
          %v3026 = vunpack.c.l.b16 %v2907
          %v3027 = vunpack.c.h.b16 %v2907
          %v3028 = vunpack.c.l.b16 %v2908
          %v3029 = vunpack.c.h.b16 %v2908
          %v3030 = vunpack.c.l.b16 %v2909
          %v3031 = vunpack.c.h.b16 %v2909
          %v3032 = vunpack.c.l.b16 %v2910
          %v3033 = vunpack.c.h.b16 %v2910
          %v3034 = vunpack.c.l.b16 %v2911
          %v3035 = vunpack.c.h.b16 %v2911
          %v3036 = vpack.c.b16 %v2974, %v2972
          %v3037 = vpack.c.b16 %v2975, %v2973
          %v3038 = vpack.c.b16 %v2978, %v2976
          %v3039 = vpack.c.b16 %v2979, %v2977
          %v3040 = vpack.c.b16 %v2982, %v2980
          %v3041 = vpack.c.b16 %v2983, %v2981
          %v3042 = vpack.c.b16 %v2986, %v2984
          %v3043 = vpack.c.b16 %v2987, %v2985
          %v3044 = vpack.c.b16 %v2990, %v2988
          %v3045 = vpack.c.b16 %v2991, %v2989
          %v3046 = vpack.c.b16 %v2994, %v2992
          %v3047 = vpack.c.b16 %v2995, %v2993
          %v3048 = vpack.c.b16 %v2998, %v2996
          %v3049 = vpack.c.b16 %v2999, %v2997
          %v3050 = vpack.c.b16 %v3002, %v3000
          %v3051 = vpack.c.b16 %v3003, %v3001
          %v3052 = vpack.c.b16 %v3006, %v3004
          %v3053 = vpack.c.b16 %v3007, %v3005
          %v3054 = vpack.c.b16 %v3010, %v3008
          %v3055 = vpack.c.b16 %v3011, %v3009
          %v3056 = vpack.c.b16 %v3014, %v3012
          %v3057 = vpack.c.b16 %v3015, %v3013
          %v3058 = vpack.c.b16 %v3018, %v3016
          %v3059 = vpack.c.b16 %v3019, %v3017
          %v3060 = vpack.c.b16 %v3022, %v3020
          %v3061 = vpack.c.b16 %v3023, %v3021
          %v3062 = vpack.c.b16 %v3026, %v3024
          %v3063 = vpack.c.b16 %v3027, %v3025
          %v3064 = vpack.c.b16 %v3030, %v3028
          %v3065 = vpack.c.b16 %v3031, %v3029
          %v3066 = vpack.c.b16 %v3034, %v3032
          %v3067 = vpack.c.b16 %v3035, %v3033
          %3100 = vmatprep.subr.bf16.mxu0 %v3037
          %3101 = vmatpush1.bf16.msra.mxu0 %v3036
          %3102 = vmatprep.subr.bf16.mxu0 %v3039
          %3103 = vmatpush1.bf16.msra.mxu0 %v3038
          %3104 = vmatprep.subr.bf16.mxu0 %v3041
          %3105 = vmatpush1.bf16.msra.mxu0 %v3040
          %3106 = vmatprep.subr.bf16.mxu0 %v3043
          %3107 = vmatpush1.bf16.msra.mxu0 %v3042
          %3108 = vmatprep.subr.bf16.mxu0 %v3045
          %3109 = vmatpush1.bf16.msra.mxu0 %v3044
          %3110 = vmatprep.subr.bf16.mxu0 %v3047
          %3111 = vmatpush1.bf16.msra.mxu0 %v3046
          %3112 = vmatprep.subr.bf16.mxu0 %v3049
          %3113 = vmatpush1.bf16.msra.mxu0 %v3048
          %3114 = vmatprep.subr.bf16.mxu0 %v3051
          %3115 = vmatpush1.bf16.msra.mxu0 %v3050
          %3116 = vmatprep.subr.bf16.mxu0 %v3053
          %3117 = vmatpush1.bf16.msra.mxu0 %v3052
          %3118 = vmatprep.subr.bf16.mxu0 %v3055
          %3119 = vmatpush1.bf16.msra.mxu0 %v3054
          %3120 = vmatprep.subr.bf16.mxu0 %v3057
          %3121 = vmatpush1.bf16.msra.mxu0 %v3056
          %3122 = vmatprep.subr.bf16.mxu0 %v3059
          %3123 = vmatpush1.bf16.msra.mxu0 %v3058
          %3124 = vmatprep.subr.bf16.mxu0 %v3061
          %3125 = vmatpush1.bf16.msra.mxu0 %v3060
          %3126 = vmatprep.subr.bf16.mxu0 %v3063
          %3127 = vmatpush1.bf16.msra.mxu0 %v3062
          %3128 = vmatprep.subr.bf16.mxu0 %v3065
          %3129 = vmatpush1.bf16.msra.mxu0 %v3064
          %3130 = vmatprep.subr.bf16.mxu0 %v3067
          %3131 = vmatpush1.bf16.msra.mxu0 %v3066
          %3132 = vmatprep.mubr.bf16.mxu0 %v2937
          %3133 = vmatmul.mubr.bf16.gmra.mrb[0].mxu0 %v2936
          %v3134 = vpop.f32.mrb[0].mxu0
          %v3135 = vadd.f32 %v2917, %v3134
          %v3136 = vpop.f32.mrb[0].mxu0
          %v3137 = vadd.f32 %v2921, %v3136
          %v3138 = vpop.f32.mrb[0].mxu0
          %v3139 = vpop.f32.mrb[0].mxu0
          %3140 = vdwg.mxu0
          %v3141 = vpack.c.bf16 %v1363, %v1363
          %v3142 = vpack.c.bf16 %v1364, %v1364
          %v3143 = vpack.c.bf16 %v1365, %v1365
          %v3144 = vpack.c.bf16 %v1366, %v1366
          %v3145 = vld [vmem:[%s10] sm:$0xff]
          %v3146 = vld [vmem:[%s10 + $0x8] sm:$0xff]
          %v3147 = vld [vmem:[%s10 + $0x10] sm:$0xff]
          %v3148 = vld [vmem:[%s10 + $0x18] sm:$0xff]
          %v3149 = vld [vmem:[%s10 + $0x20] sm:$0xff]
          %v3150 = vld [vmem:[%s10 + $0x28] sm:$0xff]
          %v3151 = vld [vmem:[%s10 + $0x30] sm:$0xff]
          %v3152 = vld [vmem:[%s10 + $0x38] sm:$0xff]
          %v3153 = vld [vmem:[%s10 + $0x40] sm:$0xff]
          %v3154 = vld [vmem:[%s10 + $0x48] sm:$0xff]
          %v3155 = vld [vmem:[%s10 + $0x50] sm:$0xff]
          %v3156 = vld [vmem:[%s10 + $0x58] sm:$0xff]
          %v3157 = vld [vmem:[%s10 + $0x60] sm:$0xff]
          %v3158 = vld [vmem:[%s10 + $0x68] sm:$0xff]
          %v3159 = vld [vmem:[%s10 + $0x70] sm:$0xff]
          %v3160 = vld [vmem:[%s10 + $0x78] sm:$0xff]
          %v3161 = vld [vmem:[%s10 + $0x80] sm:$0xff]
          %v3162 = vld [vmem:[%s10 + $0x88] sm:$0xff]
          %v3163 = vld [vmem:[%s10 + $0x90] sm:$0xff]
          %v3164 = vld [vmem:[%s10 + $0x98] sm:$0xff]
          %v3165 = vld [vmem:[%s10 + $0xa0] sm:$0xff]
          %v3166 = vld [vmem:[%s10 + $0xa8] sm:$0xff]
          %v3167 = vld [vmem:[%s10 + $0xb0] sm:$0xff]
          %v3168 = vld [vmem:[%s10 + $0xb8] sm:$0xff]
          %v3169 = vld [vmem:[%s10 + $0xc0] sm:$0xff]
          %v3170 = vld [vmem:[%s10 + $0xc8] sm:$0xff]
          %v3171 = vld [vmem:[%s10 + $0xd0] sm:$0xff]
          %v3172 = vld [vmem:[%s10 + $0xd8] sm:$0xff]
          %v3173 = vld [vmem:[%s10 + $0xe0] sm:$0xff]
          %v3174 = vld [vmem:[%s10 + $0xe8] sm:$0xff]
          %v3175 = vld [vmem:[%s10 + $0xf0] sm:$0xff]
          %v3176 = vld [vmem:[%s10 + $0xf8] sm:$0xff]
          %v3177 = vld [vmem:[%s10 + $0x100] sm:$0xff]
          %v3178 = vld [vmem:[%s10 + $0x108] sm:$0xff]
          %v3179 = vld [vmem:[%s10 + $0x110] sm:$0xff]
          %v3180 = vld [vmem:[%s10 + $0x118] sm:$0xff]
          %v3181 = vld [vmem:[%s10 + $0x120] sm:$0xff]
          %v3182 = vld [vmem:[%s10 + $0x128] sm:$0xff]
          %v3183 = vld [vmem:[%s10 + $0x130] sm:$0xff]
          %v3184 = vld [vmem:[%s10 + $0x138] sm:$0xff]
          %v3185 = vld [vmem:[%s10 + $0x140] sm:$0xff]
          %v3186 = vld [vmem:[%s10 + $0x148] sm:$0xff]
          %v3187 = vld [vmem:[%s10 + $0x150] sm:$0xff]
          %v3188 = vld [vmem:[%s10 + $0x158] sm:$0xff]
          %v3189 = vld [vmem:[%s10 + $0x160] sm:$0xff]
          %v3190 = vld [vmem:[%s10 + $0x168] sm:$0xff]
          %v3191 = vld [vmem:[%s10 + $0x170] sm:$0xff]
          %v3192 = vld [vmem:[%s10 + $0x178] sm:$0xff]
          %v3193 = vld [vmem:[%s10 + $0x180] sm:$0xff]
          %v3194 = vld [vmem:[%s10 + $0x188] sm:$0xff]
          %v3195 = vld [vmem:[%s10 + $0x190] sm:$0xff]
          %v3196 = vld [vmem:[%s10 + $0x198] sm:$0xff]
          %v3197 = vld [vmem:[%s10 + $0x1a0] sm:$0xff]
          %v3198 = vld [vmem:[%s10 + $0x1a8] sm:$0xff]
          %v3199 = vld [vmem:[%s10 + $0x1b0] sm:$0xff]
          %v3200 = vld [vmem:[%s10 + $0x1b8] sm:$0xff]
          %v3201 = vld [vmem:[%s10 + $0x1c0] sm:$0xff]
          %v3202 = vld [vmem:[%s10 + $0x1c8] sm:$0xff]
          %v3203 = vld [vmem:[%s10 + $0x1d0] sm:$0xff]
          %v3204 = vld [vmem:[%s10 + $0x1d8] sm:$0xff]
          %v3205 = vld [vmem:[%s10 + $0x1e0] sm:$0xff]
          %v3206 = vld [vmem:[%s10 + $0x1e8] sm:$0xff]
          %v3207 = vld [vmem:[%s10 + $0x1f0] sm:$0xff]
          %v3208 = vld [vmem:[%s10 + $0x1f8] sm:$0xff]
          %v3213 = vunpack.c.l.b16 %v3141
          %v3214 = vunpack.c.l.b16 %v3142
          %v3215 = vunpack.c.l.b16 %v3143
          %v3216 = vunpack.c.l.b16 %v3144
          %v3217 = vsel %vm1524, %v3215, %v3213
          %v3218 = vsel %vm1524, %v3216, %v3214
          %v3219 = vpack.c.b16 %v3217, %v3217
          %v3220 = vpack.c.b16 %v3218, %v3218
          %v3287 = vunpack.c.l.b16 %v3145
          %v3288 = vunpack.c.h.b16 %v3145
          %v3289 = vunpack.c.l.b16 %v3146
          %v3290 = vunpack.c.h.b16 %v3146
          %v3291 = vunpack.c.l.b16 %v3147
          %v3292 = vunpack.c.h.b16 %v3147
          %v3293 = vunpack.c.l.b16 %v3148
          %v3294 = vunpack.c.h.b16 %v3148
          %v3295 = vunpack.c.l.b16 %v3149
          %v3296 = vunpack.c.h.b16 %v3149
          %v3297 = vunpack.c.l.b16 %v3150
          %v3298 = vunpack.c.h.b16 %v3150
          %v3299 = vunpack.c.l.b16 %v3151
          %v3300 = vunpack.c.h.b16 %v3151
          %v3301 = vunpack.c.l.b16 %v3152
          %v3302 = vunpack.c.h.b16 %v3152
          %v3303 = vunpack.c.l.b16 %v3153
          %v3304 = vunpack.c.h.b16 %v3153
          %v3305 = vunpack.c.l.b16 %v3154
          %v3306 = vunpack.c.h.b16 %v3154
          %v3307 = vunpack.c.l.b16 %v3155
          %v3308 = vunpack.c.h.b16 %v3155
          %v3309 = vunpack.c.l.b16 %v3156
          %v3310 = vunpack.c.h.b16 %v3156
          %v3311 = vunpack.c.l.b16 %v3157
          %v3312 = vunpack.c.h.b16 %v3157
          %v3313 = vunpack.c.l.b16 %v3158
          %v3314 = vunpack.c.h.b16 %v3158
          %v3315 = vunpack.c.l.b16 %v3159
          %v3316 = vunpack.c.h.b16 %v3159
          %v3317 = vunpack.c.l.b16 %v3160
          %v3318 = vunpack.c.h.b16 %v3160
          %v3319 = vunpack.c.l.b16 %v3161
          %v3320 = vunpack.c.h.b16 %v3161
          %v3321 = vunpack.c.l.b16 %v3162
          %v3322 = vunpack.c.h.b16 %v3162
          %v3323 = vunpack.c.l.b16 %v3163
          %v3324 = vunpack.c.h.b16 %v3163
          %v3325 = vunpack.c.l.b16 %v3164
          %v3326 = vunpack.c.h.b16 %v3164
          %v3327 = vunpack.c.l.b16 %v3165
          %v3328 = vunpack.c.h.b16 %v3165
          %v3329 = vunpack.c.l.b16 %v3166
          %v3330 = vunpack.c.h.b16 %v3166
          %v3331 = vunpack.c.l.b16 %v3167
          %v3332 = vunpack.c.h.b16 %v3167
          %v3333 = vunpack.c.l.b16 %v3168
          %v3334 = vunpack.c.h.b16 %v3168
          %v3335 = vunpack.c.l.b16 %v3169
          %v3336 = vunpack.c.h.b16 %v3169
          %v3337 = vunpack.c.l.b16 %v3170
          %v3338 = vunpack.c.h.b16 %v3170
          %v3339 = vunpack.c.l.b16 %v3171
          %v3340 = vunpack.c.h.b16 %v3171
          %v3341 = vunpack.c.l.b16 %v3172
          %v3342 = vunpack.c.h.b16 %v3172
          %v3343 = vunpack.c.l.b16 %v3173
          %v3344 = vunpack.c.h.b16 %v3173
          %v3345 = vunpack.c.l.b16 %v3174
          %v3346 = vunpack.c.h.b16 %v3174
          %v3347 = vunpack.c.l.b16 %v3175
          %v3348 = vunpack.c.h.b16 %v3175
          %v3349 = vunpack.c.l.b16 %v3176
          %v3350 = vunpack.c.h.b16 %v3176
          %v3351 = vunpack.c.l.b16 %v3177
          %v3352 = vunpack.c.h.b16 %v3177
          %v3353 = vunpack.c.l.b16 %v3178
          %v3354 = vunpack.c.h.b16 %v3178
          %v3355 = vunpack.c.l.b16 %v3179
          %v3356 = vunpack.c.h.b16 %v3179
          %v3357 = vunpack.c.l.b16 %v3180
          %v3358 = vunpack.c.h.b16 %v3180
          %v3359 = vunpack.c.l.b16 %v3181
          %v3360 = vunpack.c.h.b16 %v3181
          %v3361 = vunpack.c.l.b16 %v3182
          %v3362 = vunpack.c.h.b16 %v3182
          %v3363 = vunpack.c.l.b16 %v3183
          %v3364 = vunpack.c.h.b16 %v3183
          %v3365 = vunpack.c.l.b16 %v3184
          %v3366 = vunpack.c.h.b16 %v3184
          %v3367 = vunpack.c.l.b16 %v3185
          %v3368 = vunpack.c.h.b16 %v3185
          %v3369 = vunpack.c.l.b16 %v3186
          %v3370 = vunpack.c.h.b16 %v3186
          %v3371 = vunpack.c.l.b16 %v3187
          %v3372 = vunpack.c.h.b16 %v3187
          %v3373 = vunpack.c.l.b16 %v3188
          %v3374 = vunpack.c.h.b16 %v3188
          %v3375 = vunpack.c.l.b16 %v3189
          %v3376 = vunpack.c.h.b16 %v3189
          %v3377 = vunpack.c.l.b16 %v3190
          %v3378 = vunpack.c.h.b16 %v3190
          %v3379 = vunpack.c.l.b16 %v3191
          %v3380 = vunpack.c.h.b16 %v3191
          %v3381 = vunpack.c.l.b16 %v3192
          %v3382 = vunpack.c.h.b16 %v3192
          %v3383 = vunpack.c.l.b16 %v3193
          %v3384 = vunpack.c.h.b16 %v3193
          %v3385 = vunpack.c.l.b16 %v3194
          %v3386 = vunpack.c.h.b16 %v3194
          %v3387 = vunpack.c.l.b16 %v3195
          %v3388 = vunpack.c.h.b16 %v3195
          %v3389 = vunpack.c.l.b16 %v3196
          %v3390 = vunpack.c.h.b16 %v3196
          %v3391 = vunpack.c.l.b16 %v3197
          %v3392 = vunpack.c.h.b16 %v3197
          %v3393 = vunpack.c.l.b16 %v3198
          %v3394 = vunpack.c.h.b16 %v3198
          %v3395 = vunpack.c.l.b16 %v3199
          %v3396 = vunpack.c.h.b16 %v3199
          %v3397 = vunpack.c.l.b16 %v3200
          %v3398 = vunpack.c.h.b16 %v3200
          %v3399 = vunpack.c.l.b16 %v3201
          %v3400 = vunpack.c.h.b16 %v3201
          %v3401 = vunpack.c.l.b16 %v3202
          %v3402 = vunpack.c.h.b16 %v3202
          %v3403 = vunpack.c.l.b16 %v3203
          %v3404 = vunpack.c.h.b16 %v3203
          %v3405 = vunpack.c.l.b16 %v3204
          %v3406 = vunpack.c.h.b16 %v3204
          %v3407 = vunpack.c.l.b16 %v3205
          %v3408 = vunpack.c.h.b16 %v3205
          %v3409 = vunpack.c.l.b16 %v3206
          %v3410 = vunpack.c.h.b16 %v3206
          %v3411 = vunpack.c.l.b16 %v3207
          %v3412 = vunpack.c.h.b16 %v3207
          %v3413 = vunpack.c.l.b16 %v3208
          %v3414 = vunpack.c.h.b16 %v3208
          %v3415 = vpack.c.b16 %v3291, %v3287
          %v3416 = vpack.c.b16 %v3292, %v3288
          %v3417 = vpack.c.b16 %v3293, %v3289
          %v3418 = vpack.c.b16 %v3294, %v3290
          %v3419 = vpack.c.b16 %v3299, %v3295
          %v3420 = vpack.c.b16 %v3300, %v3296
          %v3421 = vpack.c.b16 %v3301, %v3297
          %v3422 = vpack.c.b16 %v3302, %v3298
          %v3423 = vpack.c.b16 %v3307, %v3303
          %v3424 = vpack.c.b16 %v3308, %v3304
          %v3425 = vpack.c.b16 %v3309, %v3305
          %v3426 = vpack.c.b16 %v3310, %v3306
          %v3427 = vpack.c.b16 %v3315, %v3311
          %v3428 = vpack.c.b16 %v3316, %v3312
          %v3429 = vpack.c.b16 %v3317, %v3313
          %v3430 = vpack.c.b16 %v3318, %v3314
          %v3431 = vpack.c.b16 %v3323, %v3319
          %v3432 = vpack.c.b16 %v3324, %v3320
          %v3433 = vpack.c.b16 %v3325, %v3321
          %v3434 = vpack.c.b16 %v3326, %v3322
          %v3435 = vpack.c.b16 %v3331, %v3327
          %v3436 = vpack.c.b16 %v3332, %v3328
          %v3437 = vpack.c.b16 %v3333, %v3329
          %v3438 = vpack.c.b16 %v3334, %v3330
          %v3439 = vpack.c.b16 %v3339, %v3335
          %v3440 = vpack.c.b16 %v3340, %v3336
          %v3441 = vpack.c.b16 %v3341, %v3337
          %v3442 = vpack.c.b16 %v3342, %v3338
          %v3443 = vpack.c.b16 %v3347, %v3343
          %v3444 = vpack.c.b16 %v3348, %v3344
          %v3445 = vpack.c.b16 %v3349, %v3345
          %v3446 = vpack.c.b16 %v3350, %v3346
          %v3447 = vpack.c.b16 %v3355, %v3351
          %v3448 = vpack.c.b16 %v3356, %v3352
          %v3449 = vpack.c.b16 %v3357, %v3353
          %v3450 = vpack.c.b16 %v3358, %v3354
          %v3451 = vpack.c.b16 %v3363, %v3359
          %v3452 = vpack.c.b16 %v3364, %v3360
          %v3453 = vpack.c.b16 %v3365, %v3361
          %v3454 = vpack.c.b16 %v3366, %v3362
          %v3455 = vpack.c.b16 %v3371, %v3367
          %v3456 = vpack.c.b16 %v3372, %v3368
          %v3457 = vpack.c.b16 %v3373, %v3369
          %v3458 = vpack.c.b16 %v3374, %v3370
          %v3459 = vpack.c.b16 %v3379, %v3375
          %v3460 = vpack.c.b16 %v3380, %v3376
          %v3461 = vpack.c.b16 %v3381, %v3377
          %v3462 = vpack.c.b16 %v3382, %v3378
          %v3463 = vpack.c.b16 %v3387, %v3383
          %v3464 = vpack.c.b16 %v3388, %v3384
          %v3465 = vpack.c.b16 %v3389, %v3385
          %v3466 = vpack.c.b16 %v3390, %v3386
          %v3467 = vpack.c.b16 %v3395, %v3391
          %v3468 = vpack.c.b16 %v3396, %v3392
          %v3469 = vpack.c.b16 %v3397, %v3393
          %v3470 = vpack.c.b16 %v3398, %v3394
          %v3471 = vpack.c.b16 %v3403, %v3399
          %v3472 = vpack.c.b16 %v3404, %v3400
          %v3473 = vpack.c.b16 %v3405, %v3401
          %v3474 = vpack.c.b16 %v3406, %v3402
          %v3475 = vpack.c.b16 %v3411, %v3407
          %v3476 = vpack.c.b16 %v3412, %v3408
          %v3477 = vpack.c.b16 %v3413, %v3409
          %v3478 = vpack.c.b16 %v3414, %v3410
          %3543 = vmatprep.subr.bf16.mxu0 %v3416
          %3544 = vmatpush1.bf16.msra.mxu0 %v3415
          %3545 = vmatprep.subr.bf16.mxu0 %v3420
          %3546 = vmatpush1.bf16.msra.mxu0 %v3419
          %3547 = vmatprep.subr.bf16.mxu0 %v3424
          %3548 = vmatpush1.bf16.msra.mxu0 %v3423
          %3549 = vmatprep.subr.bf16.mxu0 %v3428
          %3550 = vmatpush1.bf16.msra.mxu0 %v3427
          %3551 = vmatprep.subr.bf16.mxu0 %v3432
          %3552 = vmatpush1.bf16.msra.mxu0 %v3431
          %3553 = vmatprep.subr.bf16.mxu0 %v3436
          %3554 = vmatpush1.bf16.msra.mxu0 %v3435
          %3555 = vmatprep.subr.bf16.mxu0 %v3440
          %3556 = vmatpush1.bf16.msra.mxu0 %v3439
          %3557 = vmatprep.subr.bf16.mxu0 %v3444
          %3558 = vmatpush1.bf16.msra.mxu0 %v3443
          %3559 = vmatprep.subr.bf16.mxu0 %v3448
          %3560 = vmatpush1.bf16.msra.mxu0 %v3447
          %3561 = vmatprep.subr.bf16.mxu0 %v3452
          %3562 = vmatpush1.bf16.msra.mxu0 %v3451
          %3563 = vmatprep.subr.bf16.mxu0 %v3456
          %3564 = vmatpush1.bf16.msra.mxu0 %v3455
          %3565 = vmatprep.subr.bf16.mxu0 %v3460
          %3566 = vmatpush1.bf16.msra.mxu0 %v3459
          %3567 = vmatprep.subr.bf16.mxu0 %v3464
          %3568 = vmatpush1.bf16.msra.mxu0 %v3463
          %3569 = vmatprep.subr.bf16.mxu0 %v3468
          %3570 = vmatpush1.bf16.msra.mxu0 %v3467
          %3571 = vmatprep.subr.bf16.mxu0 %v3472
          %3572 = vmatpush1.bf16.msra.mxu0 %v3471
          %3573 = vmatprep.subr.bf16.mxu0 %v3476
          %3574 = vmatpush1.bf16.msra.mxu0 %v3475
          %3575 = vmatprep.mubr.bf16.mxu0 %v3220
          %3576 = vmatmul.mubr.bf16.gmra.mrb[0].mxu0 %v3219
          %v3577 = vpop.f32.mrb[0].mxu0
          %v3578 = vadd.f32 0.0, %v3577
          %v3579 = vpop.f32.mrb[0].mxu0
          %v3580 = vadd.f32 0.0, %v3579
          %v3581 = vpop.f32.mrb[0].mxu0
          %v3582 = vpop.f32.mrb[0].mxu0
          %3583 = vdwg.mxu0
          %3584 = vmatprep.subr.bf16.mxu0 %v3418
          %3585 = vmatpush1.bf16.msra.mxu0 %v3417
          %3586 = vmatprep.subr.bf16.mxu0 %v3422
          %3587 = vmatpush1.bf16.msra.mxu0 %v3421
          %3588 = vmatprep.subr.bf16.mxu0 %v3426
          %3589 = vmatpush1.bf16.msra.mxu0 %v3425
          %3590 = vmatprep.subr.bf16.mxu0 %v3430
          %3591 = vmatpush1.bf16.msra.mxu0 %v3429
          %3592 = vmatprep.subr.bf16.mxu0 %v3434
          %3593 = vmatpush1.bf16.msra.mxu0 %v3433
          %3594 = vmatprep.subr.bf16.mxu0 %v3438
          %3595 = vmatpush1.bf16.msra.mxu0 %v3437
          %3596 = vmatprep.subr.bf16.mxu0 %v3442
          %3597 = vmatpush1.bf16.msra.mxu0 %v3441
          %3598 = vmatprep.subr.bf16.mxu0 %v3446
          %3599 = vmatpush1.bf16.msra.mxu0 %v3445
          %3600 = vmatprep.subr.bf16.mxu0 %v3450
          %3601 = vmatpush1.bf16.msra.mxu0 %v3449
          %3602 = vmatprep.subr.bf16.mxu0 %v3454
          %3603 = vmatpush1.bf16.msra.mxu0 %v3453
          %3604 = vmatprep.subr.bf16.mxu0 %v3458
          %3605 = vmatpush1.bf16.msra.mxu0 %v3457
          %3606 = vmatprep.subr.bf16.mxu0 %v3462
          %3607 = vmatpush1.bf16.msra.mxu0 %v3461
          %3608 = vmatprep.subr.bf16.mxu0 %v3466
          %3609 = vmatpush1.bf16.msra.mxu0 %v3465
          %3610 = vmatprep.subr.bf16.mxu0 %v3470
          %3611 = vmatpush1.bf16.msra.mxu0 %v3469
          %3612 = vmatprep.subr.bf16.mxu0 %v3474
          %3613 = vmatpush1.bf16.msra.mxu0 %v3473
          %3614 = vmatprep.subr.bf16.mxu0 %v3478
          %3615 = vmatpush1.bf16.msra.mxu0 %v3477
          %3616 = vmatprep.mubr.bf16.mxu0 %v3220
          %3617 = vmatmul.mubr.bf16.gmra.mrb[0].mxu0 %v3219
          %v3618 = vpop.f32.mrb[0].mxu0
          %v3619 = vadd.f32 0.0, %v3618
          %v3620 = vpop.f32.mrb[0].mxu0
          %v3621 = vadd.f32 0.0, %v3620
          %v3622 = vpop.f32.mrb[0].mxu0
          %v3623 = vpop.f32.mrb[0].mxu0
          %3624 = vdwg.mxu0
          %v3625 = vld [vmem:[%s11] sm:$0x3f]
          %v3626 = vld [vmem:[%s12] sm:$0xff]
          %v3627 = vld [vmem:[%s12 + $0x8] sm:$0xff]
          %v3628 = vld [vmem:[%s12 + $0x10] sm:$0xff]
          %v3629 = vld [vmem:[%s12 + $0x18] sm:$0xff]
          %v3630 = vld [vmem:[%s12 + $0x20] sm:$0xff]
          %v3631 = vld [vmem:[%s12 + $0x28] sm:$0xff]
          %v3632 = vld [vmem:[%s12 + $0x30] sm:$0xff]
          %v3633 = vld [vmem:[%s12 + $0x38] sm:$0xff]
          %v3634 = vld [vmem:[%s12 + $0x40] sm:$0xff]
          %v3635 = vld [vmem:[%s12 + $0x48] sm:$0xff]
          %v3636 = vld [vmem:[%s12 + $0x50] sm:$0xff]
          %v3637 = vld [vmem:[%s12 + $0x58] sm:$0xff]
          %v3638 = vld [vmem:[%s12 + $0x60] sm:$0xff]
          %v3639 = vld [vmem:[%s12 + $0x68] sm:$0xff]
          %v3640 = vld [vmem:[%s12 + $0x70] sm:$0xff]
          %v3641 = vld [vmem:[%s12 + $0x78] sm:$0xff]
          %v3642 = vld [vmem:[%s12 + $0x80] sm:$0xff]
          %v3643 = vld [vmem:[%s12 + $0x88] sm:$0xff]
          %v3644 = vld [vmem:[%s12 + $0x90] sm:$0xff]
          %v3645 = vld [vmem:[%s12 + $0x98] sm:$0xff]
          %v3646 = vld [vmem:[%s12 + $0xa0] sm:$0xff]
          %v3647 = vld [vmem:[%s12 + $0xa8] sm:$0xff]
          %v3648 = vld [vmem:[%s12 + $0xb0] sm:$0xff]
          %v3649 = vld [vmem:[%s12 + $0xb8] sm:$0xff]
          %v3650 = vld [vmem:[%s12 + $0xc0] sm:$0xff]
          %v3651 = vld [vmem:[%s12 + $0xc8] sm:$0xff]
          %v3652 = vld [vmem:[%s12 + $0xd0] sm:$0xff]
          %v3653 = vld [vmem:[%s12 + $0xd8] sm:$0xff]
          %v3654 = vld [vmem:[%s12 + $0xe0] sm:$0xff]
          %v3655 = vld [vmem:[%s12 + $0xe8] sm:$0xff]
          %v3656 = vld [vmem:[%s12 + $0xf0] sm:$0xff]
          %v3657 = vld [vmem:[%s12 + $0xf8] sm:$0xff]
          %v3658 = vld [vmem:[%s12 + $0x100] sm:$0xff]
          %v3659 = vld [vmem:[%s12 + $0x108] sm:$0xff]
          %v3660 = vld [vmem:[%s12 + $0x110] sm:$0xff]
          %v3661 = vld [vmem:[%s12 + $0x118] sm:$0xff]
          %v3662 = vld [vmem:[%s12 + $0x120] sm:$0xff]
          %v3663 = vld [vmem:[%s12 + $0x128] sm:$0xff]
          %v3664 = vld [vmem:[%s12 + $0x130] sm:$0xff]
          %v3665 = vld [vmem:[%s12 + $0x138] sm:$0xff]
          %v3666 = vld [vmem:[%s12 + $0x140] sm:$0xff]
          %v3667 = vld [vmem:[%s12 + $0x148] sm:$0xff]
          %v3668 = vld [vmem:[%s12 + $0x150] sm:$0xff]
          %v3669 = vld [vmem:[%s12 + $0x158] sm:$0xff]
          %v3670 = vld [vmem:[%s12 + $0x160] sm:$0xff]
          %v3671 = vld [vmem:[%s12 + $0x168] sm:$0xff]
          %v3672 = vld [vmem:[%s12 + $0x170] sm:$0xff]
          %v3673 = vld [vmem:[%s12 + $0x178] sm:$0xff]
          %v3674 = vld [vmem:[%s12 + $0x180] sm:$0xff]
          %v3675 = vld [vmem:[%s12 + $0x188] sm:$0xff]
          %v3676 = vld [vmem:[%s12 + $0x190] sm:$0xff]
          %v3677 = vld [vmem:[%s12 + $0x198] sm:$0xff]
          %v3678 = vld [vmem:[%s12 + $0x1a0] sm:$0xff]
          %v3679 = vld [vmem:[%s12 + $0x1a8] sm:$0xff]
          %v3680 = vld [vmem:[%s12 + $0x1b0] sm:$0xff]
          %v3681 = vld [vmem:[%s12 + $0x1b8] sm:$0xff]
          %v3682 = vld [vmem:[%s12 + $0x1c0] sm:$0xff]
          %v3683 = vld [vmem:[%s12 + $0x1c8] sm:$0xff]
          %v3684 = vld [vmem:[%s12 + $0x1d0] sm:$0xff]
          %v3685 = vld [vmem:[%s12 + $0x1d8] sm:$0xff]
          %v3686 = vld [vmem:[%s12 + $0x1e0] sm:$0xff]
          %v3687 = vld [vmem:[%s12 + $0x1e8] sm:$0xff]
          %v3688 = vld [vmem:[%s12 + $0x1f0] sm:$0xff]
          %v3689 = vld [vmem:[%s12 + $0x1f8] sm:$0xff]
          %v3690 = vld [vmem:[%s12 + $0x200] sm:$0xff]
          %v3691 = vld [vmem:[%s12 + $0x208] sm:$0xff]
          %v3692 = vld [vmem:[%s12 + $0x210] sm:$0xff]
          %v3693 = vld [vmem:[%s12 + $0x218] sm:$0xff]
          %v3694 = vld [vmem:[%s12 + $0x220] sm:$0xff]
          %v3695 = vld [vmem:[%s12 + $0x228] sm:$0xff]
          %v3696 = vld [vmem:[%s12 + $0x230] sm:$0xff]
          %v3697 = vld [vmem:[%s12 + $0x238] sm:$0xff]
          %v3698 = vld [vmem:[%s12 + $0x240] sm:$0xff]
          %v3699 = vld [vmem:[%s12 + $0x248] sm:$0xff]
          %v3700 = vld [vmem:[%s12 + $0x250] sm:$0xff]
          %v3701 = vld [vmem:[%s12 + $0x258] sm:$0xff]
          %v3702 = vld [vmem:[%s12 + $0x260] sm:$0xff]
          %v3703 = vld [vmem:[%s12 + $0x268] sm:$0xff]
          %v3704 = vld [vmem:[%s12 + $0x270] sm:$0xff]
          %v3705 = vld [vmem:[%s12 + $0x278] sm:$0xff]
          %v3706 = vld [vmem:[%s12 + $0x280] sm:$0xff]
          %v3707 = vld [vmem:[%s12 + $0x288] sm:$0xff]
          %v3708 = vld [vmem:[%s12 + $0x290] sm:$0xff]
          %v3709 = vld [vmem:[%s12 + $0x298] sm:$0xff]
          %v3710 = vld [vmem:[%s12 + $0x2a0] sm:$0xff]
          %v3711 = vld [vmem:[%s12 + $0x2a8] sm:$0xff]
          %v3712 = vld [vmem:[%s12 + $0x2b0] sm:$0xff]
          %v3713 = vld [vmem:[%s12 + $0x2b8] sm:$0xff]
          %v3714 = vld [vmem:[%s12 + $0x2c0] sm:$0xff]
          %v3715 = vld [vmem:[%s12 + $0x2c8] sm:$0xff]
          %v3716 = vld [vmem:[%s12 + $0x2d0] sm:$0xff]
          %v3717 = vld [vmem:[%s12 + $0x2d8] sm:$0xff]
          %v3718 = vld [vmem:[%s12 + $0x2e0] sm:$0xff]
          %v3719 = vld [vmem:[%s12 + $0x2e8] sm:$0xff]
          %v3720 = vld [vmem:[%s12 + $0x2f0] sm:$0xff]
          %v3721 = vld [vmem:[%s12 + $0x2f8] sm:$0xff]
          %v3722 = vld [vmem:[%s13] sm:$0x3]
          %v3724 = vlaneseq
          %v3725 = vshrl.u32 %v3724, 7
          %v3726 = vsub.s32 0, %v3725
          %v3727 = vrot.slane %v3722, %v3726
          %v3728 = vlaneseq
          %v3729 = vshrl.u32 %v3728, 7
          %v3730 = vsub.s32 1, %v3729
          %v3731 = vrot.slane %v3722, %v3730
          %v3735 = vcombine.high %v3625, %v3625
          %v3737 = vunpack.c.l.s4 1966171168
          %v3738 = vunpack.c.0.s8 %v3737
          %v3739 = vlaneseq
          %v3740 = vshrl.u32 %v3739, 7
          %v3741 = vsub.s32 %v3738, %v3740
          %v3742 = vrot.slane %v3625, %v3741
          %v3744 = vunpack.c.l.s4 1966171168
          %v3745 = vunpack.c.0.s8 %v3744
          %v3746 = vlaneseq
          %v3747 = vshrl.u32 %v3746, 7
          %v3748 = vsub.s32 %v3745, %v3747
          %v3749 = vrot.slane %v3735, %v3748
          %v3750 = vcombine.high %v3742, %v3742
          %v3751 = vcombine.high %v3749, %v3749
          %v3753 = vunpack.c.l.s4 1966171168
          %v3754 = vunpack.c.0.s8 %v3753
          %v3755 = vlaneseq
          %v3756 = vshrl.u32 %v3755, 7
          %v3757 = vsub.s32 %v3754, %v3756
          %v3758 = vrot.slane %v3742, %v3757
          %v3760 = vunpack.c.l.s4 1966171168
          %v3761 = vunpack.c.0.s8 %v3760
          %v3762 = vlaneseq
          %v3763 = vshrl.u32 %v3762, 7
          %v3764 = vsub.s32 %v3761, %v3763
          %v3765 = vrot.slane %v3749, %v3764
          %v3767 = vunpack.c.l.s4 1966171168
          %v3768 = vunpack.c.0.s8 %v3767
          %v3769 = vlaneseq
          %v3770 = vshrl.u32 %v3769, 7
          %v3771 = vsub.s32 %v3768, %v3770
          %v3772 = vrot.slane %v3750, %v3771
          %v3774 = vunpack.c.l.s4 1966171168
          %v3775 = vunpack.c.0.s8 %v3774
          %v3776 = vlaneseq
          %v3777 = vshrl.u32 %v3776, 7
          %v3778 = vsub.s32 %v3775, %v3777
          %v3779 = vrot.slane %v3751, %v3778
          %v3780 = vcombine.high %v3758, %v3758
          %v3781 = vcombine.high %v3772, %v3772
          %v3884 = vunpack.c.l.b16 %v3626
          %v3885 = vunpack.c.h.b16 %v3626
          %v3886 = vunpack.c.l.b16 %v3627
          %v3887 = vunpack.c.h.b16 %v3627
          %v3888 = vunpack.c.l.b16 %v3628
          %v3889 = vunpack.c.h.b16 %v3628
          %v3890 = vunpack.c.l.b16 %v3629
          %v3891 = vunpack.c.h.b16 %v3629
          %v3892 = vunpack.c.l.b16 %v3630
          %v3893 = vunpack.c.h.b16 %v3630
          %v3894 = vunpack.c.l.b16 %v3631
          %v3895 = vunpack.c.h.b16 %v3631
          %v3896 = vunpack.c.l.b16 %v3632
          %v3897 = vunpack.c.h.b16 %v3632
          %v3898 = vunpack.c.l.b16 %v3633
          %v3899 = vunpack.c.h.b16 %v3633
          %v3900 = vunpack.c.l.b16 %v3634
          %v3901 = vunpack.c.h.b16 %v3634
          %v3902 = vunpack.c.l.b16 %v3635
          %v3903 = vunpack.c.h.b16 %v3635
          %v3904 = vunpack.c.l.b16 %v3636
          %v3905 = vunpack.c.h.b16 %v3636
          %v3906 = vunpack.c.l.b16 %v3637
          %v3907 = vunpack.c.h.b16 %v3637
          %v3908 = vunpack.c.l.b16 %v3638
          %v3909 = vunpack.c.h.b16 %v3638
          %v3910 = vunpack.c.l.b16 %v3639
          %v3911 = vunpack.c.h.b16 %v3639
          %v3912 = vunpack.c.l.b16 %v3640
          %v3913 = vunpack.c.h.b16 %v3640
          %v3914 = vunpack.c.l.b16 %v3641
          %v3915 = vunpack.c.h.b16 %v3641
          %v3916 = vunpack.c.l.b16 %v3642
          %v3917 = vunpack.c.h.b16 %v3642
          %v3918 = vunpack.c.l.b16 %v3643
          %v3919 = vunpack.c.h.b16 %v3643
          %v3920 = vunpack.c.l.b16 %v3644
          %v3921 = vunpack.c.h.b16 %v3644
          %v3922 = vunpack.c.l.b16 %v3645
          %v3923 = vunpack.c.h.b16 %v3645
          %v3924 = vunpack.c.l.b16 %v3646
          %v3925 = vunpack.c.h.b16 %v3646
          %v3926 = vunpack.c.l.b16 %v3647
          %v3927 = vunpack.c.h.b16 %v3647
          %v3928 = vunpack.c.l.b16 %v3648
          %v3929 = vunpack.c.h.b16 %v3648
          %v3930 = vunpack.c.l.b16 %v3649
          %v3931 = vunpack.c.h.b16 %v3649
          %v3932 = vunpack.c.l.b16 %v3650
          %v3933 = vunpack.c.h.b16 %v3650
          %v3934 = vunpack.c.l.b16 %v3651
          %v3935 = vunpack.c.h.b16 %v3651
          %v3936 = vunpack.c.l.b16 %v3652
          %v3937 = vunpack.c.h.b16 %v3652
          %v3938 = vunpack.c.l.b16 %v3653
          %v3939 = vunpack.c.h.b16 %v3653
          %v3940 = vunpack.c.l.b16 %v3654
          %v3941 = vunpack.c.h.b16 %v3654
          %v3942 = vunpack.c.l.b16 %v3655
          %v3943 = vunpack.c.h.b16 %v3655
          %v3944 = vunpack.c.l.b16 %v3656
          %v3945 = vunpack.c.h.b16 %v3656
          %v3946 = vunpack.c.l.b16 %v3657
          %v3947 = vunpack.c.h.b16 %v3657
          %v3948 = vunpack.c.l.b16 %v3658
          %v3949 = vunpack.c.h.b16 %v3658
          %v3950 = vunpack.c.l.b16 %v3659
          %v3951 = vunpack.c.h.b16 %v3659
          %v3952 = vunpack.c.l.b16 %v3660
          %v3953 = vunpack.c.h.b16 %v3660
          %v3954 = vunpack.c.l.b16 %v3661
          %v3955 = vunpack.c.h.b16 %v3661
          %v3956 = vunpack.c.l.b16 %v3662
          %v3957 = vunpack.c.h.b16 %v3662
          %v3958 = vunpack.c.l.b16 %v3663
          %v3959 = vunpack.c.h.b16 %v3663
          %v3960 = vunpack.c.l.b16 %v3664
          %v3961 = vunpack.c.h.b16 %v3664
          %v3962 = vunpack.c.l.b16 %v3665
          %v3963 = vunpack.c.h.b16 %v3665
          %v3964 = vunpack.c.l.b16 %v3666
          %v3965 = vunpack.c.h.b16 %v3666
          %v3966 = vunpack.c.l.b16 %v3667
          %v3967 = vunpack.c.h.b16 %v3667
          %v3968 = vunpack.c.l.b16 %v3668
          %v3969 = vunpack.c.h.b16 %v3668
          %v3970 = vunpack.c.l.b16 %v3669
          %v3971 = vunpack.c.h.b16 %v3669
          %v3972 = vunpack.c.l.b16 %v3670
          %v3973 = vunpack.c.h.b16 %v3670
          %v3974 = vunpack.c.l.b16 %v3671
          %v3975 = vunpack.c.h.b16 %v3671
          %v3976 = vunpack.c.l.b16 %v3672
          %v3977 = vunpack.c.h.b16 %v3672
          %v3978 = vunpack.c.l.b16 %v3673
          %v3979 = vunpack.c.h.b16 %v3673
          %v3980 = vunpack.c.l.b16 %v3674
          %v3981 = vunpack.c.h.b16 %v3674
          %v3982 = vunpack.c.l.b16 %v3675
          %v3983 = vunpack.c.h.b16 %v3675
          %v3984 = vunpack.c.l.b16 %v3676
          %v3985 = vunpack.c.h.b16 %v3676
          %v3986 = vunpack.c.l.b16 %v3677
          %v3987 = vunpack.c.h.b16 %v3677
          %v3988 = vunpack.c.l.b16 %v3678
          %v3989 = vunpack.c.h.b16 %v3678
          %v3990 = vunpack.c.l.b16 %v3679
          %v3991 = vunpack.c.h.b16 %v3679
          %v3992 = vunpack.c.l.b16 %v3680
          %v3993 = vunpack.c.h.b16 %v3680
          %v3994 = vunpack.c.l.b16 %v3681
          %v3995 = vunpack.c.h.b16 %v3681
          %v3996 = vunpack.c.l.b16 %v3682
          %v3997 = vunpack.c.h.b16 %v3682
          %v3998 = vunpack.c.l.b16 %v3683
          %v3999 = vunpack.c.h.b16 %v3683
          %v4000 = vunpack.c.l.b16 %v3684
          %v4001 = vunpack.c.h.b16 %v3684
          %v4002 = vunpack.c.l.b16 %v3685
          %v4003 = vunpack.c.h.b16 %v3685
          %v4004 = vunpack.c.l.b16 %v3686
          %v4005 = vunpack.c.h.b16 %v3686
          %v4006 = vunpack.c.l.b16 %v3687
          %v4007 = vunpack.c.h.b16 %v3687
          %v4008 = vunpack.c.l.b16 %v3688
          %v4009 = vunpack.c.h.b16 %v3688
          %v4010 = vunpack.c.l.b16 %v3689
          %v4011 = vunpack.c.h.b16 %v3689
          %v4012 = vunpack.c.l.b16 %v3690
          %v4013 = vunpack.c.h.b16 %v3690
          %v4014 = vunpack.c.l.b16 %v3691
          %v4015 = vunpack.c.h.b16 %v3691
          %v4016 = vunpack.c.l.b16 %v3692
          %v4017 = vunpack.c.h.b16 %v3692
          %v4018 = vunpack.c.l.b16 %v3693
          %v4019 = vunpack.c.h.b16 %v3693
          %v4020 = vunpack.c.l.b16 %v3694
          %v4021 = vunpack.c.h.b16 %v3694
          %v4022 = vunpack.c.l.b16 %v3695
          %v4023 = vunpack.c.h.b16 %v3695
          %v4024 = vunpack.c.l.b16 %v3696
          %v4025 = vunpack.c.h.b16 %v3696
          %v4026 = vunpack.c.l.b16 %v3697
          %v4027 = vunpack.c.h.b16 %v3697
          %v4028 = vunpack.c.l.b16 %v3698
          %v4029 = vunpack.c.h.b16 %v3698
          %v4030 = vunpack.c.l.b16 %v3699
          %v4031 = vunpack.c.h.b16 %v3699
          %v4032 = vunpack.c.l.b16 %v3700
          %v4033 = vunpack.c.h.b16 %v3700
          %v4034 = vunpack.c.l.b16 %v3701
          %v4035 = vunpack.c.h.b16 %v3701
          %v4036 = vunpack.c.l.b16 %v3702
          %v4037 = vunpack.c.h.b16 %v3702
          %v4038 = vunpack.c.l.b16 %v3703
          %v4039 = vunpack.c.h.b16 %v3703
          %v4040 = vunpack.c.l.b16 %v3704
          %v4041 = vunpack.c.h.b16 %v3704
          %v4042 = vunpack.c.l.b16 %v3705
          %v4043 = vunpack.c.h.b16 %v3705
          %v4044 = vunpack.c.l.b16 %v3706
          %v4045 = vunpack.c.h.b16 %v3706
          %v4046 = vunpack.c.l.b16 %v3707
          %v4047 = vunpack.c.h.b16 %v3707
          %v4048 = vunpack.c.l.b16 %v3708
          %v4049 = vunpack.c.h.b16 %v3708
          %v4050 = vunpack.c.l.b16 %v3709
          %v4051 = vunpack.c.h.b16 %v3709
          %v4052 = vunpack.c.l.b16 %v3710
          %v4053 = vunpack.c.h.b16 %v3710
          %v4054 = vunpack.c.l.b16 %v3711
          %v4055 = vunpack.c.h.b16 %v3711
          %v4056 = vunpack.c.l.b16 %v3712
          %v4057 = vunpack.c.h.b16 %v3712
          %v4058 = vunpack.c.l.b16 %v3713
          %v4059 = vunpack.c.h.b16 %v3713
          %v4060 = vunpack.c.l.b16 %v3714
          %v4061 = vunpack.c.h.b16 %v3714
          %v4062 = vunpack.c.l.b16 %v3715
          %v4063 = vunpack.c.h.b16 %v3715
          %v4064 = vunpack.c.l.b16 %v3716
          %v4065 = vunpack.c.h.b16 %v3716
          %v4066 = vunpack.c.l.b16 %v3717
          %v4067 = vunpack.c.h.b16 %v3717
          %v4068 = vunpack.c.l.b16 %v3718
          %v4069 = vunpack.c.h.b16 %v3718
          %v4070 = vunpack.c.l.b16 %v3719
          %v4071 = vunpack.c.h.b16 %v3719
          %v4072 = vunpack.c.l.b16 %v3720
          %v4073 = vunpack.c.h.b16 %v3720
          %v4074 = vunpack.c.l.b16 %v3721
          %v4075 = vunpack.c.h.b16 %v3721
          %v4076 = vpack.c.b16 %v3886, %v3884
          %v4077 = vpack.c.b16 %v3887, %v3885
          %v4078 = vpack.c.b16 %v3890, %v3888
          %v4079 = vpack.c.b16 %v3891, %v3889
          %v4080 = vpack.c.b16 %v3894, %v3892
          %v4081 = vpack.c.b16 %v3895, %v3893
          %v4082 = vpack.c.b16 %v3898, %v3896
          %v4083 = vpack.c.b16 %v3899, %v3897
          %v4084 = vpack.c.b16 %v3902, %v3900
          %v4085 = vpack.c.b16 %v3903, %v3901
          %v4086 = vpack.c.b16 %v3906, %v3904
          %v4087 = vpack.c.b16 %v3907, %v3905
          %v4088 = vpack.c.b16 %v3910, %v3908
          %v4089 = vpack.c.b16 %v3911, %v3909
          %v4090 = vpack.c.b16 %v3914, %v3912
          %v4091 = vpack.c.b16 %v3915, %v3913
          %v4092 = vpack.c.b16 %v3918, %v3916
          %v4093 = vpack.c.b16 %v3919, %v3917
          %v4094 = vpack.c.b16 %v3922, %v3920
          %v4095 = vpack.c.b16 %v3923, %v3921
          %v4096 = vpack.c.b16 %v3926, %v3924
          %v4097 = vpack.c.b16 %v3927, %v3925
          %v4098 = vpack.c.b16 %v3930, %v3928
          %v4099 = vpack.c.b16 %v3931, %v3929
          %v4100 = vpack.c.b16 %v3934, %v3932
          %v4101 = vpack.c.b16 %v3935, %v3933
          %v4102 = vpack.c.b16 %v3938, %v3936
          %v4103 = vpack.c.b16 %v3939, %v3937
          %v4104 = vpack.c.b16 %v3942, %v3940
          %v4105 = vpack.c.b16 %v3943, %v3941
          %v4106 = vpack.c.b16 %v3946, %v3944
          %v4107 = vpack.c.b16 %v3947, %v3945
          %v4108 = vpack.c.b16 %v3950, %v3948
          %v4109 = vpack.c.b16 %v3951, %v3949
          %v4110 = vpack.c.b16 %v3954, %v3952
          %v4111 = vpack.c.b16 %v3955, %v3953
          %v4112 = vpack.c.b16 %v3958, %v3956
          %v4113 = vpack.c.b16 %v3959, %v3957
          %v4114 = vpack.c.b16 %v3962, %v3960
          %v4115 = vpack.c.b16 %v3963, %v3961
          %v4116 = vpack.c.b16 %v3966, %v3964
          %v4117 = vpack.c.b16 %v3967, %v3965
          %v4118 = vpack.c.b16 %v3970, %v3968
          %v4119 = vpack.c.b16 %v3971, %v3969
          %v4120 = vpack.c.b16 %v3974, %v3972
          %v4121 = vpack.c.b16 %v3975, %v3973
          %v4122 = vpack.c.b16 %v3978, %v3976
          %v4123 = vpack.c.b16 %v3979, %v3977
          %v4124 = vpack.c.b16 %v3982, %v3980
          %v4125 = vpack.c.b16 %v3983, %v3981
          %v4126 = vpack.c.b16 %v3986, %v3984
          %v4127 = vpack.c.b16 %v3987, %v3985
          %v4128 = vpack.c.b16 %v3990, %v3988
          %v4129 = vpack.c.b16 %v3991, %v3989
          %v4130 = vpack.c.b16 %v3994, %v3992
          %v4131 = vpack.c.b16 %v3995, %v3993
          %v4132 = vpack.c.b16 %v3998, %v3996
          %v4133 = vpack.c.b16 %v3999, %v3997
          %v4134 = vpack.c.b16 %v4002, %v4000
          %v4135 = vpack.c.b16 %v4003, %v4001
          %v4136 = vpack.c.b16 %v4006, %v4004
          %v4137 = vpack.c.b16 %v4007, %v4005
          %v4138 = vpack.c.b16 %v4010, %v4008
          %v4139 = vpack.c.b16 %v4011, %v4009
          %v4140 = vpack.c.b16 %v4014, %v4012
          %v4141 = vpack.c.b16 %v4015, %v4013
          %v4142 = vpack.c.b16 %v4018, %v4016
          %v4143 = vpack.c.b16 %v4019, %v4017
          %v4144 = vpack.c.b16 %v4022, %v4020
          %v4145 = vpack.c.b16 %v4023, %v4021
          %v4146 = vpack.c.b16 %v4026, %v4024
          %v4147 = vpack.c.b16 %v4027, %v4025
          %v4148 = vpack.c.b16 %v4030, %v4028
          %v4149 = vpack.c.b16 %v4031, %v4029
          %v4150 = vpack.c.b16 %v4034, %v4032
          %v4151 = vpack.c.b16 %v4035, %v4033
          %v4152 = vpack.c.b16 %v4038, %v4036
          %v4153 = vpack.c.b16 %v4039, %v4037
          %v4154 = vpack.c.b16 %v4042, %v4040
          %v4155 = vpack.c.b16 %v4043, %v4041
          %v4156 = vpack.c.b16 %v4046, %v4044
          %v4157 = vpack.c.b16 %v4047, %v4045
          %v4158 = vpack.c.b16 %v4050, %v4048
          %v4159 = vpack.c.b16 %v4051, %v4049
          %v4160 = vpack.c.b16 %v4054, %v4052
          %v4161 = vpack.c.b16 %v4055, %v4053
          %v4162 = vpack.c.b16 %v4058, %v4056
          %v4163 = vpack.c.b16 %v4059, %v4057
          %v4164 = vpack.c.b16 %v4062, %v4060
          %v4165 = vpack.c.b16 %v4063, %v4061
          %v4166 = vpack.c.b16 %v4066, %v4064
          %v4167 = vpack.c.b16 %v4067, %v4065
          %v4168 = vpack.c.b16 %v4070, %v4068
          %v4169 = vpack.c.b16 %v4071, %v4069
          %v4170 = vpack.c.b16 %v4074, %v4072
          %v4171 = vpack.c.b16 %v4075, %v4073
          %4268 = vmatprep.subr.bf16.mxu0 %v4077
          %4269 = vmatpush1.bf16.msra.mxu0 %v4076
          %4270 = vmatprep.subr.bf16.mxu0 %v4079
          %4271 = vmatpush1.bf16.msra.mxu0 %v4078
          %4272 = vmatprep.subr.bf16.mxu0 %v4081
          %4273 = vmatpush1.bf16.msra.mxu0 %v4080
          %4274 = vmatprep.subr.bf16.mxu0 %v4083
          %4275 = vmatpush1.bf16.msra.mxu0 %v4082
          %4276 = vmatprep.subr.bf16.mxu0 %v4085
          %4277 = vmatpush1.bf16.msra.mxu0 %v4084
          %4278 = vmatprep.subr.bf16.mxu0 %v4087
          %4279 = vmatpush1.bf16.msra.mxu0 %v4086
          %4280 = vmatprep.subr.bf16.mxu0 %v4089
          %4281 = vmatpush1.bf16.msra.mxu0 %v4088
          %4282 = vmatprep.subr.bf16.mxu0 %v4091
          %4283 = vmatpush1.bf16.msra.mxu0 %v4090
          %4284 = vmatprep.subr.bf16.mxu0 %v4093
          %4285 = vmatpush1.bf16.msra.mxu0 %v4092
          %4286 = vmatprep.subr.bf16.mxu0 %v4095
          %4287 = vmatpush1.bf16.msra.mxu0 %v4094
          %4288 = vmatprep.subr.bf16.mxu0 %v4097
          %4289 = vmatpush1.bf16.msra.mxu0 %v4096
          %4290 = vmatprep.subr.bf16.mxu0 %v4099
          %4291 = vmatpush1.bf16.msra.mxu0 %v4098
          %4292 = vmatprep.subr.bf16.mxu0 %v4101
          %4293 = vmatpush1.bf16.msra.mxu0 %v4100
          %4294 = vmatprep.subr.bf16.mxu0 %v4103
          %4295 = vmatpush1.bf16.msra.mxu0 %v4102
          %4296 = vmatprep.subr.bf16.mxu0 %v4105
          %4297 = vmatpush1.bf16.msra.mxu0 %v4104
          %4298 = vmatprep.subr.bf16.mxu0 %v4107
          %4299 = vmatpush1.bf16.msra.mxu0 %v4106
          %4300 = vmatprep.mubr.bf16.mxu0 %v3772
          %4301 = vmatmul.mubr.bf16.gmra.mrb[0].mxu0 %v3758
          %v4302 = vpop.f32.mrb[0].mxu0
          %v4303 = vadd.f32 %v3727, %v4302
          %v4304 = vpop.f32.mrb[0].mxu0
          %v4305 = vadd.f32 %v3731, %v4304
          %v4306 = vpop.f32.mrb[0].mxu0
          %v4307 = vpop.f32.mrb[0].mxu0
          %4308 = vdwg.mxu0
          %4309 = vmatprep.subr.bf16.mxu0 %v4109
          %4310 = vmatpush1.bf16.msra.mxu0 %v4108
          %4311 = vmatprep.subr.bf16.mxu0 %v4111
          %4312 = vmatpush1.bf16.msra.mxu0 %v4110
          %4313 = vmatprep.subr.bf16.mxu0 %v4113
          %4314 = vmatpush1.bf16.msra.mxu0 %v4112
          %4315 = vmatprep.subr.bf16.mxu0 %v4115
          %4316 = vmatpush1.bf16.msra.mxu0 %v4114
          %4317 = vmatprep.subr.bf16.mxu0 %v4117
          %4318 = vmatpush1.bf16.msra.mxu0 %v4116
          %4319 = vmatprep.subr.bf16.mxu0 %v4119
          %4320 = vmatpush1.bf16.msra.mxu0 %v4118
          %4321 = vmatprep.subr.bf16.mxu0 %v4121
          %4322 = vmatpush1.bf16.msra.mxu0 %v4120
          %4323 = vmatprep.subr.bf16.mxu0 %v4123
          %4324 = vmatpush1.bf16.msra.mxu0 %v4122
          %4325 = vmatprep.subr.bf16.mxu0 %v4125
          %4326 = vmatpush1.bf16.msra.mxu0 %v4124
          %4327 = vmatprep.subr.bf16.mxu0 %v4127
          %4328 = vmatpush1.bf16.msra.mxu0 %v4126
          %4329 = vmatprep.subr.bf16.mxu0 %v4129
          %4330 = vmatpush1.bf16.msra.mxu0 %v4128
          %4331 = vmatprep.subr.bf16.mxu0 %v4131
          %4332 = vmatpush1.bf16.msra.mxu0 %v4130
          %4333 = vmatprep.subr.bf16.mxu0 %v4133
          %4334 = vmatpush1.bf16.msra.mxu0 %v4132
          %4335 = vmatprep.subr.bf16.mxu0 %v4135
          %4336 = vmatpush1.bf16.msra.mxu0 %v4134
          %4337 = vmatprep.subr.bf16.mxu0 %v4137
          %4338 = vmatpush1.bf16.msra.mxu0 %v4136
          %4339 = vmatprep.subr.bf16.mxu0 %v4139
          %4340 = vmatpush1.bf16.msra.mxu0 %v4138
          %4341 = vmatprep.mubr.bf16.mxu0 %v3781
          %4342 = vmatmul.mubr.bf16.gmra.mrb[0].mxu0 %v3780
          %v4343 = vpop.f32.mrb[0].mxu0
          %v4344 = vadd.f32 %v4303, %v4343
          %v4345 = vpop.f32.mrb[0].mxu0
          %v4346 = vadd.f32 %v4305, %v4345
          %v4347 = vpop.f32.mrb[0].mxu0
          %v4348 = vpop.f32.mrb[0].mxu0
          %4349 = vdwg.mxu0
          %4350 = vmatprep.subr.bf16.mxu0 %v4141
          %4351 = vmatpush1.bf16.msra.mxu0 %v4140
          %4352 = vmatprep.subr.bf16.mxu0 %v4143
          %4353 = vmatpush1.bf16.msra.mxu0 %v4142
          %4354 = vmatprep.subr.bf16.mxu0 %v4145
          %4355 = vmatpush1.bf16.msra.mxu0 %v4144
          %4356 = vmatprep.subr.bf16.mxu0 %v4147
          %4357 = vmatpush1.bf16.msra.mxu0 %v4146
          %4358 = vmatprep.subr.bf16.mxu0 %v4149
          %4359 = vmatpush1.bf16.msra.mxu0 %v4148
          %4360 = vmatprep.subr.bf16.mxu0 %v4151
          %4361 = vmatpush1.bf16.msra.mxu0 %v4150
          %4362 = vmatprep.subr.bf16.mxu0 %v4153
          %4363 = vmatpush1.bf16.msra.mxu0 %v4152
          %4364 = vmatprep.subr.bf16.mxu0 %v4155
          %4365 = vmatpush1.bf16.msra.mxu0 %v4154
          %4366 = vmatprep.subr.bf16.mxu0 %v4157
          %4367 = vmatpush1.bf16.msra.mxu0 %v4156
          %4368 = vmatprep.subr.bf16.mxu0 %v4159
          %4369 = vmatpush1.bf16.msra.mxu0 %v4158
          %4370 = vmatprep.subr.bf16.mxu0 %v4161
          %4371 = vmatpush1.bf16.msra.mxu0 %v4160
          %4372 = vmatprep.subr.bf16.mxu0 %v4163
          %4373 = vmatpush1.bf16.msra.mxu0 %v4162
          %4374 = vmatprep.subr.bf16.mxu0 %v4165
          %4375 = vmatpush1.bf16.msra.mxu0 %v4164
          %4376 = vmatprep.subr.bf16.mxu0 %v4167
          %4377 = vmatpush1.bf16.msra.mxu0 %v4166
          %4378 = vmatprep.subr.bf16.mxu0 %v4169
          %4379 = vmatpush1.bf16.msra.mxu0 %v4168
          %4380 = vmatprep.subr.bf16.mxu0 %v4171
          %4381 = vmatpush1.bf16.msra.mxu0 %v4170
          %4382 = vmatprep.mubr.bf16.mxu0 %v3779
          %4383 = vmatmul.mubr.bf16.gmra.mrb[0].mxu0 %v3765
          %v4384 = vpop.f32.mrb[0].mxu0
          %v4385 = vadd.f32 %v4344, %v4384
          %v4386 = vpop.f32.mrb[0].mxu0
          %v4387 = vadd.f32 %v4346, %v4386
          %v4388 = vpop.f32.mrb[0].mxu0
          %v4389 = vpop.f32.mrb[0].mxu0
          %4390 = vdwg.mxu0
          %v4391 = vmul.f32 %v4385, 0.5
          %v4392 = vmul.f32 %v4387, 0.5
          %v4393 = vmul.f32 %v4385, 0.70710677
          %v4394 = vmul.f32 %v4387, 0.70710677
          %vm4395 = vcmp.ge.f32.partialorder %v4393, 0.0
          %vm4396 = vcmp.ge.f32.partialorder %v4394, 0.0
          %v4397 = vsel %vm4395, 1.0, -1.0
          %v4398 = vsel %vm4396, 1.0, -1.0
          %v4399 = vand.u32 2147483647, %v4393
          %v4400 = vand.u32 2147483647, %v4394
          %v4401 = vmul.f32 %v4399, 0.3275911
          %v4402 = vmul.f32 %v4400, 0.3275911
          %v4403 = vadd.f32 %v4401, 1.0
          %v4404 = vadd.f32 %v4402, 1.0
          %v4405 = vrcp.pop %v4403
          %v4406 = vmul.f32 1.0, %v4405
          %v4407 = vrcp.pop %v4404
          %v4408 = vmul.f32 1.0, %v4407
          %v4409 = vmul.f32 %v4406, 1.0614054
          %v4410 = vmul.f32 %v4408, 1.0614054
          %v4411 = vadd.f32 %v4409, -1.4531521
          %v4412 = vadd.f32 %v4410, -1.4531521
          %v4413 = vmul.f32 %v4411, %v4406
          %v4414 = vmul.f32 %v4412, %v4408
          %v4415 = vadd.f32 %v4413, 1.4214138
          %v4416 = vadd.f32 %v4414, 1.4214138
          %v4417 = vmul.f32 %v4415, %v4406
          %v4418 = vmul.f32 %v4416, %v4408
          %v4419 = vadd.f32 %v4417, -0.28449672
          %v4420 = vadd.f32 %v4418, -0.28449672
          %v4421 = vmul.f32 %v4419, %v4406
          %v4422 = vmul.f32 %v4420, %v4408
          %v4423 = vadd.f32 %v4421, 0.2548296
          %v4424 = vadd.f32 %v4422, 0.2548296
          %v4425 = vmul.f32 %v4423, %v4406
          %v4426 = vmul.f32 %v4424, %v4408
          %v4427 = vsub.f32 0.0, %v4399
          %v4428 = vsub.f32 0.0, %v4400
          %v4429 = vmul.f32 %v4427, %v4399
          %v4430 = vmul.f32 %v4428, %v4400
          %v4431 = vmul.f32 %v4429, 1.442695
          %v4432 = vpow.pop %v4431
          %v4433 = vmul.f32 %v4430, 1.442695
          %v4434 = vpow.pop %v4433
          %v4435 = vmul.f32 %v4425, %v4432
          %v4436 = vmul.f32 %v4426, %v4434
          %v4437 = vsub.f32 1.0, %v4435
          %v4438 = vsub.f32 1.0, %v4436
          %v4439 = vmul.f32 %v4397, %v4437
          %v4440 = vmul.f32 %v4398, %v4438
          %v4441 = vadd.f32 %v4439, 1.0
          %v4442 = vadd.f32 %v4440, 1.0
          %v4443 = vmul.f32 %v4391, %v4441
          %v4444 = vmul.f32 %v4392, %v4442
          %v4445 = vpack.c.bf16 %v4443, %v4443
          %v4446 = vpack.c.bf16 %v4444, %v4444
          %v4447 = vld [vmem:[%s14] sm:$0xff]
          %v4448 = vld [vmem:[%s14 + $0x8] sm:$0xff]
          %v4449 = vld [vmem:[%s14 + $0x10] sm:$0xff]
          %v4450 = vld [vmem:[%s14 + $0x18] sm:$0xff]
          %v4451 = vld [vmem:[%s14 + $0x20] sm:$0xff]
          %v4452 = vld [vmem:[%s14 + $0x28] sm:$0xff]
          %v4453 = vld [vmem:[%s14 + $0x30] sm:$0xff]
          %v4454 = vld [vmem:[%s14 + $0x38] sm:$0xff]
          %v4455 = vld [vmem:[%s14 + $0x40] sm:$0xff]
          %v4456 = vld [vmem:[%s14 + $0x48] sm:$0xff]
          %v4457 = vld [vmem:[%s14 + $0x50] sm:$0xff]
          %v4458 = vld [vmem:[%s14 + $0x58] sm:$0xff]
          %v4459 = vld [vmem:[%s14 + $0x60] sm:$0xff]
          %v4460 = vld [vmem:[%s14 + $0x68] sm:$0xff]
          %v4461 = vld [vmem:[%s14 + $0x70] sm:$0xff]
          %v4462 = vld [vmem:[%s14 + $0x78] sm:$0xff]
          %v4463 = vld [vmem:[%s14 + $0x80] sm:$0xff]
          %v4464 = vld [vmem:[%s14 + $0x88] sm:$0xff]
          %v4465 = vld [vmem:[%s14 + $0x90] sm:$0xff]
          %v4466 = vld [vmem:[%s14 + $0x98] sm:$0xff]
          %v4467 = vld [vmem:[%s14 + $0xa0] sm:$0xff]
          %v4468 = vld [vmem:[%s14 + $0xa8] sm:$0xff]
          %v4469 = vld [vmem:[%s14 + $0xb0] sm:$0xff]
          %v4470 = vld [vmem:[%s14 + $0xb8] sm:$0xff]
          %v4471 = vld [vmem:[%s14 + $0xc0] sm:$0xff]
          %v4472 = vld [vmem:[%s14 + $0xc8] sm:$0xff]
          %v4473 = vld [vmem:[%s14 + $0xd0] sm:$0xff]
          %v4474 = vld [vmem:[%s14 + $0xd8] sm:$0xff]
          %v4475 = vld [vmem:[%s14 + $0xe0] sm:$0xff]
          %v4476 = vld [vmem:[%s14 + $0xe8] sm:$0xff]
          %v4477 = vld [vmem:[%s14 + $0xf0] sm:$0xff]
          %v4478 = vld [vmem:[%s14 + $0xf8] sm:$0xff]
          %v4479 = vld [vmem:[%s15] sm:$0x3]
          %v4481 = vlaneseq
          %v4482 = vshrl.u32 %v4481, 7
          %v4483 = vsub.s32 0, %v4482
          %v4484 = vrot.slane %v4479, %v4483
          %v4485 = vlaneseq
          %v4486 = vshrl.u32 %v4485, 7
          %v4487 = vsub.s32 1, %v4486
          %v4488 = vrot.slane %v4479, %v4487
          %v4523 = vunpack.c.l.b16 %v4447
          %v4524 = vunpack.c.h.b16 %v4447
          %v4525 = vunpack.c.l.b16 %v4448
          %v4526 = vunpack.c.h.b16 %v4448
          %v4527 = vunpack.c.l.b16 %v4449
          %v4528 = vunpack.c.h.b16 %v4449
          %v4529 = vunpack.c.l.b16 %v4450
          %v4530 = vunpack.c.h.b16 %v4450
          %v4531 = vunpack.c.l.b16 %v4451
          %v4532 = vunpack.c.h.b16 %v4451
          %v4533 = vunpack.c.l.b16 %v4452
          %v4534 = vunpack.c.h.b16 %v4452
          %v4535 = vunpack.c.l.b16 %v4453
          %v4536 = vunpack.c.h.b16 %v4453
          %v4537 = vunpack.c.l.b16 %v4454
          %v4538 = vunpack.c.h.b16 %v4454
          %v4539 = vunpack.c.l.b16 %v4455
          %v4540 = vunpack.c.h.b16 %v4455
          %v4541 = vunpack.c.l.b16 %v4456
          %v4542 = vunpack.c.h.b16 %v4456
          %v4543 = vunpack.c.l.b16 %v4457
          %v4544 = vunpack.c.h.b16 %v4457
          %v4545 = vunpack.c.l.b16 %v4458
          %v4546 = vunpack.c.h.b16 %v4458
          %v4547 = vunpack.c.l.b16 %v4459
          %v4548 = vunpack.c.h.b16 %v4459
          %v4549 = vunpack.c.l.b16 %v4460
          %v4550 = vunpack.c.h.b16 %v4460
          %v4551 = vunpack.c.l.b16 %v4461
          %v4552 = vunpack.c.h.b16 %v4461
          %v4553 = vunpack.c.l.b16 %v4462
          %v4554 = vunpack.c.h.b16 %v4462
          %v4555 = vunpack.c.l.b16 %v4463
          %v4556 = vunpack.c.h.b16 %v4463
          %v4557 = vunpack.c.l.b16 %v4464
          %v4558 = vunpack.c.h.b16 %v4464
          %v4559 = vunpack.c.l.b16 %v4465
          %v4560 = vunpack.c.h.b16 %v4465
          %v4561 = vunpack.c.l.b16 %v4466
          %v4562 = vunpack.c.h.b16 %v4466
          %v4563 = vunpack.c.l.b16 %v4467
          %v4564 = vunpack.c.h.b16 %v4467
          %v4565 = vunpack.c.l.b16 %v4468
          %v4566 = vunpack.c.h.b16 %v4468
          %v4567 = vunpack.c.l.b16 %v4469
          %v4568 = vunpack.c.h.b16 %v4469
          %v4569 = vunpack.c.l.b16 %v4470
          %v4570 = vunpack.c.h.b16 %v4470
          %v4571 = vunpack.c.l.b16 %v4471
          %v4572 = vunpack.c.h.b16 %v4471
          %v4573 = vunpack.c.l.b16 %v4472
          %v4574 = vunpack.c.h.b16 %v4472
          %v4575 = vunpack.c.l.b16 %v4473
          %v4576 = vunpack.c.h.b16 %v4473
          %v4577 = vunpack.c.l.b16 %v4474
          %v4578 = vunpack.c.h.b16 %v4474
          %v4579 = vunpack.c.l.b16 %v4475
          %v4580 = vunpack.c.h.b16 %v4475
          %v4581 = vunpack.c.l.b16 %v4476
          %v4582 = vunpack.c.h.b16 %v4476
          %v4583 = vunpack.c.l.b16 %v4477
          %v4584 = vunpack.c.h.b16 %v4477
          %v4585 = vunpack.c.l.b16 %v4478
          %v4586 = vunpack.c.h.b16 %v4478
          %v4587 = vpack.c.b16 %v4525, %v4523
          %v4588 = vpack.c.b16 %v4526, %v4524
          %v4589 = vpack.c.b16 %v4529, %v4527
          %v4590 = vpack.c.b16 %v4530, %v4528
          %v4591 = vpack.c.b16 %v4533, %v4531
          %v4592 = vpack.c.b16 %v4534, %v4532
          %v4593 = vpack.c.b16 %v4537, %v4535
          %v4594 = vpack.c.b16 %v4538, %v4536
          %v4595 = vpack.c.b16 %v4541, %v4539
          %v4596 = vpack.c.b16 %v4542, %v4540
          %v4597 = vpack.c.b16 %v4545, %v4543
          %v4598 = vpack.c.b16 %v4546, %v4544
          %v4599 = vpack.c.b16 %v4549, %v4547
          %v4600 = vpack.c.b16 %v4550, %v4548
          %v4601 = vpack.c.b16 %v4553, %v4551
          %v4602 = vpack.c.b16 %v4554, %v4552
          %v4603 = vpack.c.b16 %v4557, %v4555
          %v4604 = vpack.c.b16 %v4558, %v4556
          %v4605 = vpack.c.b16 %v4561, %v4559
          %v4606 = vpack.c.b16 %v4562, %v4560
          %v4607 = vpack.c.b16 %v4565, %v4563
          %v4608 = vpack.c.b16 %v4566, %v4564
          %v4609 = vpack.c.b16 %v4569, %v4567
          %v4610 = vpack.c.b16 %v4570, %v4568
          %v4611 = vpack.c.b16 %v4573, %v4571
          %v4612 = vpack.c.b16 %v4574, %v4572
          %v4613 = vpack.c.b16 %v4577, %v4575
          %v4614 = vpack.c.b16 %v4578, %v4576
          %v4615 = vpack.c.b16 %v4581, %v4579
          %v4616 = vpack.c.b16 %v4582, %v4580
          %v4617 = vpack.c.b16 %v4585, %v4583
          %v4618 = vpack.c.b16 %v4586, %v4584
          %4651 = vmatprep.subr.bf16.mxu0 %v4588
          %4652 = vmatpush1.bf16.msra.mxu0 %v4587
          %4653 = vmatprep.subr.bf16.mxu0 %v4590
          %4654 = vmatpush1.bf16.msra.mxu0 %v4589
          %4655 = vmatprep.subr.bf16.mxu0 %v4592
          %4656 = vmatpush1.bf16.msra.mxu0 %v4591
          %4657 = vmatprep.subr.bf16.mxu0 %v4594
          %4658 = vmatpush1.bf16.msra.mxu0 %v4593
          %4659 = vmatprep.subr.bf16.mxu0 %v4596
          %4660 = vmatpush1.bf16.msra.mxu0 %v4595
          %4661 = vmatprep.subr.bf16.mxu0 %v4598
          %4662 = vmatpush1.bf16.msra.mxu0 %v4597
          %4663 = vmatprep.subr.bf16.mxu0 %v4600
          %4664 = vmatpush1.bf16.msra.mxu0 %v4599
          %4665 = vmatprep.subr.bf16.mxu0 %v4602
          %4666 = vmatpush1.bf16.msra.mxu0 %v4601
          %4667 = vmatprep.subr.bf16.mxu0 %v4604
          %4668 = vmatpush1.bf16.msra.mxu0 %v4603
          %4669 = vmatprep.subr.bf16.mxu0 %v4606
          %4670 = vmatpush1.bf16.msra.mxu0 %v4605
          %4671 = vmatprep.subr.bf16.mxu0 %v4608
          %4672 = vmatpush1.bf16.msra.mxu0 %v4607
          %4673 = vmatprep.subr.bf16.mxu0 %v4610
          %4674 = vmatpush1.bf16.msra.mxu0 %v4609
          %4675 = vmatprep.subr.bf16.mxu0 %v4612
          %4676 = vmatpush1.bf16.msra.mxu0 %v4611
          %4677 = vmatprep.subr.bf16.mxu0 %v4614
          %4678 = vmatpush1.bf16.msra.mxu0 %v4613
          %4679 = vmatprep.subr.bf16.mxu0 %v4616
          %4680 = vmatpush1.bf16.msra.mxu0 %v4615
          %4681 = vmatprep.subr.bf16.mxu0 %v4618
          %4682 = vmatpush1.bf16.msra.mxu0 %v4617
          %4683 = vmatprep.mubr.bf16.mxu0 %v4446
          %4684 = vmatmul.mubr.bf16.gmra.mrb[0].mxu0 %v4445
          %v4685 = vpop.f32.mrb[0].mxu0
          %v4686 = vadd.f32 %v4484, %v4685
          %v4687 = vpop.f32.mrb[0].mxu0
          %v4688 = vadd.f32 %v4488, %v4687
          %v4689 = vpop.f32.mrb[0].mxu0
          %v4690 = vpop.f32.mrb[0].mxu0
          %4691 = vdwg.mxu0
          %v4692 = vmul.f32 %v3135, %v3135
          %v4693 = vmul.f32 %v3137, %v3137
          %vm4694 = vcmask 1041408
          %v4695 = vsel %vm4694, %v4692, 0.0
          %v4696 = vsel %vm4694, %v4693, 0.0
          %v4697 = vadd.f32 %v4695, %v4696
          %4698 = vadd.xlane.f32.xlu0 %v4697
          %v4699 = vpop.xlane.xlu0 %4698
          %v4700 = vrsqrt.pop %v4699
          %v4701 = vmul.f32 %v4699, %v4700
          %vm4702 = vcmp.eq.f32.partialorder %v4699, inf
          %v4703 = vsel %vm4702, %v4699, %v4701
          %vm4704 = vcmp.eq.f32.partialorder %v4699, 0.0
          %v4705 = vand.u32 %v4699, 2147483648
          %v4706 = vsel %vm4704, %v4705, %v4703
          %v4707 = vmax.f32 %v4706, 1e-12
          %v4708 = vrcp.pop %v4707
          %v4709 = vmul.f32 %v3135, %v4708
          %v4710 = vmul.f32 %v3137, %v4708
          %v4711 = vmul.f32 %v4686, %v4686
          %v4712 = vmul.f32 %v4688, %v4688
          %v4713 = vsel %vm4694, %v4711, 0.0
          %v4714 = vsel %vm4694, %v4712, 0.0
          %v4715 = vadd.f32 %v4713, %v4714
          %4716 = vadd.xlane.f32.xlu0 %v4715
          %v4717 = vpop.xlane.xlu0 %4716
          %v4718 = vrsqrt.pop %v4717
          %v4719 = vmul.f32 %v4717, %v4718
          %vm4720 = vcmp.eq.f32.partialorder %v4717, inf
          %v4721 = vsel %vm4720, %v4717, %v4719
          %vm4722 = vcmp.eq.f32.partialorder %v4717, 0.0
          %v4723 = vand.u32 %v4717, 2147483648
          %v4724 = vsel %vm4722, %v4723, %v4721
          %v4725 = vmax.f32 %v4724, 1e-12
          %v4726 = vrcp.pop %v4725
          %v4727 = vmul.f32 %v4686, %v4726
          %v4728 = vmul.f32 %v4688, %v4726
          %4729 = vmatprep.subr.mxu0 %v4728
          %4730 = vmatpush1.xpose.msra.mxu0 %v4727
          %4731 = vmatprep.subr.mxu0 0.0
          %4732 = vmatpush1.xpose.msra.mxu0 0.0
          %4733 = vmatprep.subr.mxu0 0.0
          %4734 = vmatpush1.xpose.msra.mxu0 0.0
          %4735 = vmatprep.subr.mxu0 0.0
          %4736 = vmatpush1.xpose.msra.mxu0 0.0
          %4737 = vmatprep.subr.mxu0 0.0
          %4738 = vmatpush1.xpose.msra.mxu0 0.0
          %4739 = vmatprep.subr.mxu0 0.0
          %4740 = vmatpush1.xpose.msra.mxu0 0.0
          %4741 = vmatprep.subr.mxu0 0.0
          %4742 = vmatpush1.xpose.msra.mxu0 0.0
          %4743 = vmatprep.subr.mxu0 0.0
          %4744 = vmatpush1.xpose.msra.mxu0 0.0
          %4745 = vmatprep.subr.mxu0 0.0
          %4746 = vmatpush1.xpose.msra.mxu0 0.0
          %4747 = vmatprep.subr.mxu0 0.0
          %4748 = vmatpush1.xpose.msra.mxu0 0.0
          %4749 = vmatprep.subr.mxu0 0.0
          %4750 = vmatpush1.xpose.msra.mxu0 0.0
          %4751 = vmatprep.subr.mxu0 0.0
          %4752 = vmatpush1.xpose.msra.mxu0 0.0
          %4753 = vmatprep.subr.mxu0 0.0
          %4754 = vmatpush1.xpose.msra.mxu0 0.0
          %4755 = vmatprep.subr.mxu0 0.0
          %4756 = vmatpush1.xpose.msra.mxu0 0.0
          %4757 = vmatprep.subr.mxu0 0.0
          %4758 = vmatpush1.xpose.msra.mxu0 0.0
          %4759 = vmatprep.subr.mxu0 0.0
          %4760 = vmatpush1.xpose.msra.mxu0 0.0
          %4761 = vmatprep.subr.mxu0 0.0
          %4762 = vmatpush1.xpose.msra.mxu0 0.0
          %4763 = vmatprep.subr.mxu0 0.0
          %4764 = vmatpush1.xpose.msra.mxu0 0.0
          %4765 = vmatprep.subr.mxu0 0.0
          %4766 = vmatpush1.xpose.msra.mxu0 0.0
          %4767 = vmatprep.subr.mxu0 0.0
          %4768 = vmatpush1.xpose.msra.mxu0 0.0
          %4769 = vmatprep.subr.mxu0 0.0
          %4770 = vmatpush1.xpose.msra.mxu0 0.0
          %4771 = vmatprep.subr.mxu0 0.0
          %4772 = vmatpush1.xpose.msra.mxu0 0.0
          %4773 = vmatprep.subr.mxu0 0.0
          %4774 = vmatpush1.xpose.msra.mxu0 0.0
          %4775 = vmatprep.subr.mxu0 0.0
          %4776 = vmatpush1.xpose.msra.mxu0 0.0
          %4777 = vmatprep.subr.mxu0 0.0
          %4778 = vmatpush1.xpose.msra.mxu0 0.0
          %4779 = vmatprep.subr.mxu0 0.0
          %4780 = vmatpush1.xpose.msra.mxu0 0.0
          %4781 = vmatprep.subr.mxu0 0.0
          %4782 = vmatpush1.xpose.msra.mxu0 0.0
          %4783 = vmatprep.subr.mxu0 0.0
          %4784 = vmatpush1.xpose.msra.mxu0 0.0
          %4785 = vmatprep.subr.mxu0 0.0
          %4786 = vmatpush1.xpose.msra.mxu0 0.0
          %4787 = vmatprep.subr.mxu0 0.0
          %4788 = vmatpush1.xpose.msra.mxu0 0.0
          %4789 = vmatprep.subr.mxu0 0.0
          %4790 = vmatpush1.xpose.msra.mxu0 0.0
          %4791 = vmatprep.subr.mxu0 0.0
          %4792 = vmatpush1.xpose.msra.mxu0 0.0
          %4793 = vmatprep.mubr.f32.mxu0 %v4710
          %4794 = vmatmul.mubr.f32.gmra.mrb[0].mxu0 %v4709
          %v4795 = vpop.f32.mrb[0].mxu0
          %v4796 = vadd.f32 0.0, %v4795
          %v4797 = vpop.f32.mrb[0].mxu0
          %4798 = vdwg.mxu0
          %v4799 = vmul.f32 %v4796, 14.285714
          %4800 = vmatprep.subr.mxu0 %v4710
          %4801 = vmatpush1.xpose.msra.mxu0 %v4709
          %4802 = vmatprep.subr.mxu0 0.0
          %4803 = vmatpush1.xpose.msra.mxu0 0.0
          %4804 = vmatprep.subr.mxu0 0.0
          %4805 = vmatpush1.xpose.msra.mxu0 0.0
          %4806 = vmatprep.subr.mxu0 0.0
          %4807 = vmatpush1.xpose.msra.mxu0 0.0
          %4808 = vmatprep.subr.mxu0 0.0
          %4809 = vmatpush1.xpose.msra.mxu0 0.0
          %4810 = vmatprep.subr.mxu0 0.0
          %4811 = vmatpush1.xpose.msra.mxu0 0.0
          %4812 = vmatprep.subr.mxu0 0.0
          %4813 = vmatpush1.xpose.msra.mxu0 0.0
          %4814 = vmatprep.subr.mxu0 0.0
          %4815 = vmatpush1.xpose.msra.mxu0 0.0
          %4816 = vmatprep.subr.mxu0 0.0
          %4817 = vmatpush1.xpose.msra.mxu0 0.0
          %4818 = vmatprep.subr.mxu0 0.0
          %4819 = vmatpush1.xpose.msra.mxu0 0.0
          %4820 = vmatprep.subr.mxu0 0.0
          %4821 = vmatpush1.xpose.msra.mxu0 0.0
          %4822 = vmatprep.subr.mxu0 0.0
          %4823 = vmatpush1.xpose.msra.mxu0 0.0
          %4824 = vmatprep.subr.mxu0 0.0
          %4825 = vmatpush1.xpose.msra.mxu0 0.0
          %4826 = vmatprep.subr.mxu0 0.0
          %4827 = vmatpush1.xpose.msra.mxu0 0.0
          %4828 = vmatprep.subr.mxu0 0.0
          %4829 = vmatpush1.xpose.msra.mxu0 0.0
          %4830 = vmatprep.subr.mxu0 0.0
          %4831 = vmatpush1.xpose.msra.mxu0 0.0
          %4832 = vmatprep.subr.mxu0 0.0
          %4833 = vmatpush1.xpose.msra.mxu0 0.0
          %4834 = vmatprep.subr.mxu0 0.0
          %4835 = vmatpush1.xpose.msra.mxu0 0.0
          %4836 = vmatprep.subr.mxu0 0.0
          %4837 = vmatpush1.xpose.msra.mxu0 0.0
          %4838 = vmatprep.subr.mxu0 0.0
          %4839 = vmatpush1.xpose.msra.mxu0 0.0
          %4840 = vmatprep.subr.mxu0 0.0
          %4841 = vmatpush1.xpose.msra.mxu0 0.0
          %4842 = vmatprep.subr.mxu0 0.0
          %4843 = vmatpush1.xpose.msra.mxu0 0.0
          %4844 = vmatprep.subr.mxu0 0.0
          %4845 = vmatpush1.xpose.msra.mxu0 0.0
          %4846 = vmatprep.subr.mxu0 0.0
          %4847 = vmatpush1.xpose.msra.mxu0 0.0
          %4848 = vmatprep.subr.mxu0 0.0
          %4849 = vmatpush1.xpose.msra.mxu0 0.0
          %4850 = vmatprep.subr.mxu0 0.0
          %4851 = vmatpush1.xpose.msra.mxu0 0.0
          %4852 = vmatprep.subr.mxu0 0.0
          %4853 = vmatpush1.xpose.msra.mxu0 0.0
          %4854 = vmatprep.subr.mxu0 0.0
          %4855 = vmatpush1.xpose.msra.mxu0 0.0
          %4856 = vmatprep.subr.mxu0 0.0
          %4857 = vmatpush1.xpose.msra.mxu0 0.0
          %4858 = vmatprep.subr.mxu0 0.0
          %4859 = vmatpush1.xpose.msra.mxu0 0.0
          %4860 = vmatprep.subr.mxu0 0.0
          %4861 = vmatpush1.xpose.msra.mxu0 0.0
          %4862 = vmatprep.subr.mxu0 0.0
          %4863 = vmatpush1.xpose.msra.mxu0 0.0
          %4864 = vmatprep.mubr.f32.mxu0 %v4728
          %4865 = vmatmul.mubr.f32.gmra.mrb[0].mxu0 %v4727
          %v4866 = vpop.f32.mrb[0].mxu0
          %v4867 = vadd.f32 0.0, %v4866
          %v4868 = vpop.f32.mrb[0].mxu0
          %4869 = vdwg.mxu0
          %v4870 = vmul.f32 %v4867, 14.285714
          %v4871 = vlaneseq
          %v4872 = vshrl.u32 %v4871, 7
          %v4873 = vlaneseq
          %v4874 = vand.u32 %v4873, 127
          %vm4875 = vcmp.eq.s32.totalorder %v4872, %v4874
          %v4876 = vsel %vm4875, %v4799, 0.0
          %vm4877 = vcmask 9216
          %v4878 = vsel %vm4877, %v4876, 0.0
          %4879 = vadd.xlane.f32.xlu0 %v4878
          %v4880 = vpop.xlane.xlu0 %4879
          %v4881 = vrot.slane %v4880, 4
          %v4882 = vadd.f32 %v4880, %v4881
          %v4883 = vrot.slane %v4882, 2
          %v4884 = vadd.f32 %v4882, %v4883
          %v4885 = vrot.slane %v4884, 1
          %v4886 = vadd.f32 %v4884, %v4885
          %s4887 = vtos %v4886
          %v4888 = vsel %vm4877, %v4799, -inf
          %4889 = vmax.xlane.f32.xlu0 %v4888
          %v4890 = vpop.xlane.xlu0 %4889
          %v4891 = vsub.f32 %v4799, %v4890
          %v4892 = vmul.f32 %v4891, 1.442695
          %v4893 = vpow.pop %v4892
          %v4894 = vsel %vm4877, %v4893, 0.0
          %4895 = vadd.xlane.f32.xlu0 %v4894
          %v4896 = vpop.xlane.xlu0 %4895
          %v4897 = vlog2.pop %v4896
          %v4898 = vmul.f32 %v4897, 0.6931472
          %v4899 = vadd.f32 %v4898, %v4890
          %vm4900 = vcmask 1024
          %v4901 = vsel %vm4900, %v4899, 0.0
          %4902 = vadd.xlane.f32.xlu0 %v4901
          %v4903 = vpop.xlane.xlu0 %4902
          %v4904 = vrot.slane %v4903, 4
          %v4905 = vadd.f32 %v4903, %v4904
          %v4906 = vrot.slane %v4905, 2
          %v4907 = vadd.f32 %v4905, %v4906
          %v4908 = vrot.slane %v4907, 1
          %v4909 = vadd.f32 %v4907, %v4908
          %s4910 = vtos %v4909
          %s4911 = ssub.f32 %s4910, %s4887
          %v4912 = vrcp.pop 2.0
          %s4913 = vtos %v4912
          %s4914 = smul.f32 %s4911, %s4913
          %v4915 = vsel %vm4877, %v4870, -inf
          %4916 = vmax.xlane.f32.xlu0 %v4915
          %v4917 = vpop.xlane.xlu0 %4916
          %v4918 = vsub.f32 %v4870, %v4917
          %v4919 = vmul.f32 %v4918, 1.442695
          %v4920 = vpow.pop %v4919
          %v4921 = vsel %vm4877, %v4920, 0.0
          %4922 = vadd.xlane.f32.xlu0 %v4921
          %v4923 = vpop.xlane.xlu0 %4922
          %v4924 = vlog2.pop %v4923
          %v4925 = vmul.f32 %v4924, 0.6931472
          %v4926 = vadd.f32 %v4925, %v4917
          %v4927 = vsel %vm4900, %v4926, 0.0
          %4928 = vadd.xlane.f32.xlu0 %v4927
          %v4929 = vpop.xlane.xlu0 %4928
          %v4930 = vrot.slane %v4929, 4
          %v4931 = vadd.f32 %v4929, %v4930
          %v4932 = vrot.slane %v4931, 2
          %v4933 = vadd.f32 %v4931, %v4932
          %v4934 = vrot.slane %v4933, 1
          %v4935 = vadd.f32 %v4933, %v4934
          %s4936 = vtos %v4935
          %s4937 = ssub.f32 %s4936, %s4887
          %v4938 = vrcp.pop 2.0
          %s4939 = vtos %v4938
          %s4940 = smul.f32 %s4937, %s4939
          %s4941 = sadd.f32 %s4914, %s4940
          %v4942 = vmul.f32 %v3578, %v3578
          %v4943 = vmul.f32 %v3580, %v3580
          %v4944 = vsel %vm4694, %v4942, 0.0
          %v4945 = vsel %vm4694, %v4943, 0.0
          %v4946 = vadd.f32 %v4944, %v4945
          %4947 = vadd.xlane.f32.xlu0 %v4946
          %v4948 = vpop.xlane.xlu0 %4947
          %v4949 = vrsqrt.pop %v4948
          %v4950 = vmul.f32 %v4948, %v4949
          %vm4951 = vcmp.eq.f32.partialorder %v4948, inf
          %v4952 = vsel %vm4951, %v4948, %v4950
          %vm4953 = vcmp.eq.f32.partialorder %v4948, 0.0
          %v4954 = vand.u32 %v4948, 2147483648
          %v4955 = vsel %vm4953, %v4954, %v4952
          %v4956 = vmax.f32 %v4955, 1e-12
          %v4957 = vrcp.pop %v4956
          %v4958 = vmul.f32 %v3578, %v4957
          %v4959 = vmul.f32 %v3580, %v4957
          %v4960 = vmul.f32 %v3619, %v3619
          %v4961 = vmul.f32 %v3621, %v3621
          %v4962 = vsel %vm4694, %v4960, 0.0
          %v4963 = vsel %vm4694, %v4961, 0.0
          %v4964 = vadd.f32 %v4962, %v4963
          %4965 = vadd.xlane.f32.xlu0 %v4964
          %v4966 = vpop.xlane.xlu0 %4965
          %v4967 = vrsqrt.pop %v4966
          %v4968 = vmul.f32 %v4966, %v4967
          %vm4969 = vcmp.eq.f32.partialorder %v4966, inf
          %v4970 = vsel %vm4969, %v4966, %v4968
          %vm4971 = vcmp.eq.f32.partialorder %v4966, 0.0
          %v4972 = vand.u32 %v4966, 2147483648
          %v4973 = vsel %vm4971, %v4972, %v4970
          %v4974 = vmax.f32 %v4973, 1e-12
          %v4975 = vrcp.pop %v4974
          %v4976 = vmul.f32 %v3619, %v4975
          %v4977 = vmul.f32 %v3621, %v4975
          %4978 = vmatprep.subr.mxu0 %v4977
          %4979 = vmatpush1.xpose.msra.mxu0 %v4976
          %4980 = vmatprep.subr.mxu0 0.0
          %4981 = vmatpush1.xpose.msra.mxu0 0.0
          %4982 = vmatprep.subr.mxu0 0.0
          %4983 = vmatpush1.xpose.msra.mxu0 0.0
          %4984 = vmatprep.subr.mxu0 0.0
          %4985 = vmatpush1.xpose.msra.mxu0 0.0
          %4986 = vmatprep.subr.mxu0 0.0
          %4987 = vmatpush1.xpose.msra.mxu0 0.0
          %4988 = vmatprep.subr.mxu0 0.0
          %4989 = vmatpush1.xpose.msra.mxu0 0.0
          %4990 = vmatprep.subr.mxu0 0.0
          %4991 = vmatpush1.xpose.msra.mxu0 0.0
          %4992 = vmatprep.subr.mxu0 0.0
          %4993 = vmatpush1.xpose.msra.mxu0 0.0
          %4994 = vmatprep.subr.mxu0 0.0
          %4995 = vmatpush1.xpose.msra.mxu0 0.0
          %4996 = vmatprep.subr.mxu0 0.0
          %4997 = vmatpush1.xpose.msra.mxu0 0.0
          %4998 = vmatprep.subr.mxu0 0.0
          %4999 = vmatpush1.xpose.msra.mxu0 0.0
          %5000 = vmatprep.subr.mxu0 0.0
          %5001 = vmatpush1.xpose.msra.mxu0 0.0
          %5002 = vmatprep.subr.mxu0 0.0
          %5003 = vmatpush1.xpose.msra.mxu0 0.0
          %5004 = vmatprep.subr.mxu0 0.0
          %5005 = vmatpush1.xpose.msra.mxu0 0.0
          %5006 = vmatprep.subr.mxu0 0.0
          %5007 = vmatpush1.xpose.msra.mxu0 0.0
          %5008 = vmatprep.subr.mxu0 0.0
          %5009 = vmatpush1.xpose.msra.mxu0 0.0
          %5010 = vmatprep.subr.mxu0 0.0
          %5011 = vmatpush1.xpose.msra.mxu0 0.0
          %5012 = vmatprep.subr.mxu0 0.0
          %5013 = vmatpush1.xpose.msra.mxu0 0.0
          %5014 = vmatprep.subr.mxu0 0.0
          %5015 = vmatpush1.xpose.msra.mxu0 0.0
          %5016 = vmatprep.subr.mxu0 0.0
          %5017 = vmatpush1.xpose.msra.mxu0 0.0
          %5018 = vmatprep.subr.mxu0 0.0
          %5019 = vmatpush1.xpose.msra.mxu0 0.0
          %5020 = vmatprep.subr.mxu0 0.0
          %5021 = vmatpush1.xpose.msra.mxu0 0.0
          %5022 = vmatprep.subr.mxu0 0.0
          %5023 = vmatpush1.xpose.msra.mxu0 0.0
          %5024 = vmatprep.subr.mxu0 0.0
          %5025 = vmatpush1.xpose.msra.mxu0 0.0
          %5026 = vmatprep.subr.mxu0 0.0
          %5027 = vmatpush1.xpose.msra.mxu0 0.0
          %5028 = vmatprep.subr.mxu0 0.0
          %5029 = vmatpush1.xpose.msra.mxu0 0.0
          %5030 = vmatprep.subr.mxu0 0.0
          %5031 = vmatpush1.xpose.msra.mxu0 0.0
          %5032 = vmatprep.subr.mxu0 0.0
          %5033 = vmatpush1.xpose.msra.mxu0 0.0
          %5034 = vmatprep.subr.mxu0 0.0
          %5035 = vmatpush1.xpose.msra.mxu0 0.0
          %5036 = vmatprep.subr.mxu0 0.0
          %5037 = vmatpush1.xpose.msra.mxu0 0.0
          %5038 = vmatprep.subr.mxu0 0.0
          %5039 = vmatpush1.xpose.msra.mxu0 0.0
          %5040 = vmatprep.subr.mxu0 0.0
          %5041 = vmatpush1.xpose.msra.mxu0 0.0
          %5042 = vmatprep.mubr.f32.mxu0 %v4959
          %5043 = vmatmul.mubr.f32.gmra.mrb[0].mxu0 %v4958
          %v5044 = vpop.f32.mrb[0].mxu0
          %v5045 = vadd.f32 0.0, %v5044
          %v5046 = vpop.f32.mrb[0].mxu0
          %5047 = vdwg.mxu0
          %v5048 = vmul.f32 %v5045, 14.285714
          %5049 = vmatprep.subr.mxu0 %v4959
          %5050 = vmatpush1.xpose.msra.mxu0 %v4958
          %5051 = vmatprep.subr.mxu0 0.0
          %5052 = vmatpush1.xpose.msra.mxu0 0.0
          %5053 = vmatprep.subr.mxu0 0.0
          %5054 = vmatpush1.xpose.msra.mxu0 0.0
          %5055 = vmatprep.subr.mxu0 0.0
          %5056 = vmatpush1.xpose.msra.mxu0 0.0
          %5057 = vmatprep.subr.mxu0 0.0
          %5058 = vmatpush1.xpose.msra.mxu0 0.0
          %5059 = vmatprep.subr.mxu0 0.0
          %5060 = vmatpush1.xpose.msra.mxu0 0.0
          %5061 = vmatprep.subr.mxu0 0.0
          %5062 = vmatpush1.xpose.msra.mxu0 0.0
          %5063 = vmatprep.subr.mxu0 0.0
          %5064 = vmatpush1.xpose.msra.mxu0 0.0
          %5065 = vmatprep.subr.mxu0 0.0
          %5066 = vmatpush1.xpose.msra.mxu0 0.0
          %5067 = vmatprep.subr.mxu0 0.0
          %5068 = vmatpush1.xpose.msra.mxu0 0.0
          %5069 = vmatprep.subr.mxu0 0.0
          %5070 = vmatpush1.xpose.msra.mxu0 0.0
          %5071 = vmatprep.subr.mxu0 0.0
          %5072 = vmatpush1.xpose.msra.mxu0 0.0
          %5073 = vmatprep.subr.mxu0 0.0
          %5074 = vmatpush1.xpose.msra.mxu0 0.0
          %5075 = vmatprep.subr.mxu0 0.0
          %5076 = vmatpush1.xpose.msra.mxu0 0.0
          %5077 = vmatprep.subr.mxu0 0.0
          %5078 = vmatpush1.xpose.msra.mxu0 0.0
          %5079 = vmatprep.subr.mxu0 0.0
          %5080 = vmatpush1.xpose.msra.mxu0 0.0
          %5081 = vmatprep.subr.mxu0 0.0
          %5082 = vmatpush1.xpose.msra.mxu0 0.0
          %5083 = vmatprep.subr.mxu0 0.0
          %5084 = vmatpush1.xpose.msra.mxu0 0.0
          %5085 = vmatprep.subr.mxu0 0.0
          %5086 = vmatpush1.xpose.msra.mxu0 0.0
          %5087 = vmatprep.subr.mxu0 0.0
          %5088 = vmatpush1.xpose.msra.mxu0 0.0
          %5089 = vmatprep.subr.mxu0 0.0
          %5090 = vmatpush1.xpose.msra.mxu0 0.0
          %5091 = vmatprep.subr.mxu0 0.0
          %5092 = vmatpush1.xpose.msra.mxu0 0.0
          %5093 = vmatprep.subr.mxu0 0.0
          %5094 = vmatpush1.xpose.msra.mxu0 0.0
          %5095 = vmatprep.subr.mxu0 0.0
          %5096 = vmatpush1.xpose.msra.mxu0 0.0
          %5097 = vmatprep.subr.mxu0 0.0
          %5098 = vmatpush1.xpose.msra.mxu0 0.0
          %5099 = vmatprep.subr.mxu0 0.0
          %5100 = vmatpush1.xpose.msra.mxu0 0.0
          %5101 = vmatprep.subr.mxu0 0.0
          %5102 = vmatpush1.xpose.msra.mxu0 0.0
          %5103 = vmatprep.subr.mxu0 0.0
          %5104 = vmatpush1.xpose.msra.mxu0 0.0
          %5105 = vmatprep.subr.mxu0 0.0
          %5106 = vmatpush1.xpose.msra.mxu0 0.0
          %5107 = vmatprep.subr.mxu0 0.0
          %5108 = vmatpush1.xpose.msra.mxu0 0.0
          %5109 = vmatprep.subr.mxu0 0.0
          %5110 = vmatpush1.xpose.msra.mxu0 0.0
          %5111 = vmatprep.subr.mxu0 0.0
          %5112 = vmatpush1.xpose.msra.mxu0 0.0
          %5113 = vmatprep.mubr.f32.mxu0 %v4977
          %5114 = vmatmul.mubr.f32.gmra.mrb[0].mxu0 %v4976
          %v5115 = vpop.f32.mrb[0].mxu0
          %v5116 = vadd.f32 0.0, %v5115
          %v5117 = vpop.f32.mrb[0].mxu0
          %5118 = vdwg.mxu0
          %v5119 = vmul.f32 %v5116, 14.285714
          %v5120 = vsel %vm4875, %v5048, 0.0
          %v5121 = vsel %vm4877, %v5120, 0.0
          %5122 = vadd.xlane.f32.xlu0 %v5121
          %v5123 = vpop.xlane.xlu0 %5122
          %v5124 = vrot.slane %v5123, 4
          %v5125 = vadd.f32 %v5123, %v5124
          %v5126 = vrot.slane %v5125, 2
          %v5127 = vadd.f32 %v5125, %v5126
          %v5128 = vrot.slane %v5127, 1
          %v5129 = vadd.f32 %v5127, %v5128
          %s5130 = vtos %v5129
          %v5131 = vsel %vm4877, %v5048, -inf
          %5132 = vmax.xlane.f32.xlu0 %v5131
          %v5133 = vpop.xlane.xlu0 %5132
          %v5134 = vsub.f32 %v5048, %v5133
          %v5135 = vmul.f32 %v5134, 1.442695
          %v5136 = vpow.pop %v5135
          %v5137 = vsel %vm4877, %v5136, 0.0
          %5138 = vadd.xlane.f32.xlu0 %v5137
          %v5139 = vpop.xlane.xlu0 %5138
          %v5140 = vlog2.pop %v5139
          %v5141 = vmul.f32 %v5140, 0.6931472
          %v5142 = vadd.f32 %v5141, %v5133
          %v5143 = vsel %vm4900, %v5142, 0.0
          %5144 = vadd.xlane.f32.xlu0 %v5143
          %v5145 = vpop.xlane.xlu0 %5144
          %v5146 = vrot.slane %v5145, 4
          %v5147 = vadd.f32 %v5145, %v5146
          %v5148 = vrot.slane %v5147, 2
          %v5149 = vadd.f32 %v5147, %v5148
          %v5150 = vrot.slane %v5149, 1
          %v5151 = vadd.f32 %v5149, %v5150
          %s5152 = vtos %v5151
          %s5153 = ssub.f32 %s5152, %s5130
          %v5154 = vrcp.pop 2.0
          %s5155 = vtos %v5154
          %s5156 = smul.f32 %s5153, %s5155
          %v5157 = vsel %vm4877, %v5119, -inf
          %5158 = vmax.xlane.f32.xlu0 %v5157
          %v5159 = vpop.xlane.xlu0 %5158
          %v5160 = vsub.f32 %v5119, %v5159
          %v5161 = vmul.f32 %v5160, 1.442695
          %v5162 = vpow.pop %v5161
          %v5163 = vsel %vm4877, %v5162, 0.0
          %5164 = vadd.xlane.f32.xlu0 %v5163
          %v5165 = vpop.xlane.xlu0 %5164
          %v5166 = vlog2.pop %v5165
          %v5167 = vmul.f32 %v5166, 0.6931472
          %v5168 = vadd.f32 %v5167, %v5159
          %v5169 = vsel %vm4900, %v5168, 0.0
          %5170 = vadd.xlane.f32.xlu0 %v5169
          %v5171 = vpop.xlane.xlu0 %5170
          %v5172 = vrot.slane %v5171, 4
          %v5173 = vadd.f32 %v5171, %v5172
          %v5174 = vrot.slane %v5173, 2
          %v5175 = vadd.f32 %v5173, %v5174
          %v5176 = vrot.slane %v5175, 1
          %v5177 = vadd.f32 %v5175, %v5176
          %s5178 = vtos %v5177
          %s5179 = ssub.f32 %s5178, %s5130
          %v5180 = vrcp.pop 2.0
          %s5181 = vtos %v5180
          %s5182 = smul.f32 %s5179, %s5181
          %s5183 = sadd.f32 %s5156, %s5182
          %s5184 = sadd.f32 %s4941, %s5183
          %s5185 = scalar_lea.smem [#allocation4], 0
          %5186 = sst [smem:[%s5185]] %s5184
        $region115: #{merl_pretrain_forward.1} parent=102 // pred_fallthru
          _
        // Predicated region
        $region116: #{merl_pretrain_forward.1} parent=102 // pred_check
          %p5187 = pneg %p387
        $region117: #{merl_pretrain_forward.1} parent=102 // pred_check_branch
          %5189 = sbr.rel (%p5187) target = $region119
        $region118: #{merl_pretrain_forward.1} parent=102 // pred_region
          %s5191 = ssub.s32 16, 16
          %5192 = vsyncadd [#allocation5], %s5191
          %5195 = dma.smem_to_hbm [#allocation4], 16, %s16, [#allocation5]
        $region119: #{merl_pretrain_forward.1} parent=102 // pred_fallthru
          _
        // Predicated region
        $region120: #{merl_pretrain_forward.1} parent=102 // pred_check
          %p5196 = pneg %p387
        $region121: #{merl_pretrain_forward.1} parent=102 // pred_check_branch
          %5198 = sbr.rel (%p5196) target = $region123
        $region122: #{merl_pretrain_forward.1} parent=102 // pred_region
          %5199 = dma.done [#allocation5], 16
        $region123: #{merl_pretrain_forward.1} parent=102 // pred_fallthru
          _
        %5200 = sfence
      $region103: #{merl_pretrain_forward.1} parent=5 // pred_fallthru
        _
      %p5201 = scmp.le.s32.totalorder 2, %s23
      // Predicated region
      $region124: #{merl_pretrain_forward.1} parent=5 // pred_check
        %p5202 = pneg %p5201
      $region125: #{merl_pretrain_forward.1} parent=5 // pred_check_branch
        %5204 = sbr.rel (%p5202) target = $region127
      $region126: #{merl_pretrain_forward.1} parent=5 // pred_region
        %s5205 = ssub.s32 %s23, 2
      $region127: #{merl_pretrain_forward.1} parent=5 // pred_fallthru
        _
    $region6: #{merl_pretrain_forward.1} parent=1 // loop_footer
      %s27 = sadd.s32 1, %s23
    $region7: #{merl_pretrain_forward.1} parent=1 // loop_footer_branch
      %22 = sbr.rel target = $region3
    $region8: #{merl_pretrain_forward.1} parent=1 // loop_exit
      _
    %5206 = vsyncpa [#allocation5], 1
    %s5207 = scalar_lea.sflag [#allocation5], 1
    %5208 = vsyncpa %s5207, 1

</llo_original>
